<compile_context>
chip_gen: v7x
topology: tpu7x:2x2x1
jax: 0.10.0
libtpu: 0.0.40
codegen_flags: <defaults>
</compile_context>

<pallas_src>
import functools

import jax
import jax.numpy as jnp
from jax.experimental import pallas as pl
from jax.experimental.pallas import tpu as pltpu


# ------------------------------ config helpers -------------------------------

@functools.lru_cache(maxsize=None)
def _vmem_limit_bytes():
    # v5e/v6e have 128 MiB physical VMEM, v7x only 64 MiB per TC: budget ~75%
    # of whatever this chip actually has (~96 MiB on v5e/v6e, ~48 MiB on v7x).
    cap = 64 * 1024 * 1024
    try:
        cap = int(getattr(pltpu.get_tpu_info(), "vmem_capacity_bytes", cap))
    except Exception:
        pass
    return min(int(cap * 3 // 4), 100 * 1024 * 1024)


def _compiler_params(n_axes=1):
    return pltpu.CompilerParams(
        dimension_semantics=("parallel",) * n_axes,
        vmem_limit_bytes=_vmem_limit_bytes(),
    )


def _row_tile(M, target=512):
    """Row-block size: 512-row blocks reach ~85% of HBM roofline; multiple of 8."""
    if M >= target:
        return target
    return max(8, ((M + 7) // 8) * 8)


def _pad_rows(x2d, tm):
    M = x2d.shape[0]
    Mp = ((M + tm - 1) // tm) * tm
    if Mp != M:
        x2d = jnp.pad(x2d, ((0, Mp - M), (0, 0)))
    return x2d, M


def _w_spec(shape):
    # Constant-index (resident) weight/bias block.
    return pl.BlockSpec(shape, lambda n: (0,) * len(shape))


# --------------------------- in-kernel building blocks ------------------------

def _layernorm(z, gamma, beta):
    # f32 statistics, eps = 1e-5 (matches nn.LayerNorm default).
    mean = jnp.mean(z, axis=-1, keepdims=True)
    var = jnp.mean((z - mean) ** 2, axis=-1, keepdims=True)
    inv = jax.lax.rsqrt(var + 1e-5)
    return (z - mean) * inv * gamma + beta


def _mha(q, k, v, mask_i8, heads, scale):
    """Batched-over-heads attention.

    q: (Lq, D) f32, k/v: (Lk, D) f32, mask_i8: (Lq, Lk) int8 (0 = masked).
    Returns (Lq, D) f32.
    """
    Lq, D = q.shape
    dh = D // heads
    # Fold the softmax scale into Q (O(Lq*D) VALU) before the bf16 cast.
    qh = jnp.swapaxes((q * scale).reshape(Lq, heads, dh), 0, 1).astype(jnp.bfloat16)
    kh = jnp.swapaxes(k.reshape(-1, heads, dh), 0, 1).astype(jnp.bfloat16)
    vh = jnp.swapaxes(v.reshape(-1, heads, dh), 0, 1).astype(jnp.bfloat16)

    # Single batched contraction over heads (full MXU / lane utilization).
    e = jnp.einsum('hqd,hkd->hqk', qh, kh,
                   preferred_element_type=jnp.float32)           # (H, Lq, Lk) f32
    maskf = mask_i8.astype(jnp.float32)                          # (Lq, Lk)
    e = jnp.where(maskf[None, :, :] == 0.0, -1e20, e)

    m = jnp.max(e, axis=-1, keepdims=True)
    p = jnp.exp(e - m)                                           # f32 softmax
    l = jnp.sum(p, axis=-1, keepdims=True)

    o = jnp.einsum('hqk,hkd->hqd', p.astype(jnp.bfloat16), vh,
                   preferred_element_type=jnp.float32)           # (H, Lq, dh)
    # Normalize AFTER the PV matmul: O(Lq*dh) multiplies instead of O(Lq*Lk).
    o = o * pl.reciprocal(l, approx=True)
    return jnp.swapaxes(o, 0, 1).reshape(Lq, D)                  # (Lq, D) lane-dense


# ----------------------------- Pallas kernels --------------------------------

def _self_attn_sublayer_kernel(x_ref, mask_ref, wq_ref, bq_ref, wk_ref, bk_ref,
                               wv_ref, bv_ref, wo_ref, bo_ref, g_ref, b_ref,
                               o_ref, *, heads, scale):
    # Fused: Q/K/V projections + MHA + output projection + residual + LayerNorm.
    # One batch element per grid step; weights are resident (constant index).
    x = x_ref[0]                                         # (Lq, D) f32
    xb = x.astype(jnp.bfloat16)
    q = jnp.dot(xb, wq_ref[...], preferred_element_type=jnp.float32) + bq_ref[...]
    k = jnp.dot(xb, wk_ref[...], preferred_element_type=jnp.float32) + bk_ref[...]
    v = jnp.dot(xb, wv_ref[...], preferred_element_type=jnp.float32) + bv_ref[...]
    attn = _mha(q, k, v, mask_ref[0], heads, scale)      # (Lq, D) f32
    y = jnp.dot(attn.astype(jnp.bfloat16), wo_ref[...],
                preferred_element_type=jnp.float32) + bo_ref[...]
    z = y + x                                            # residual in f32
    o_ref[0] = _layernorm(z, g_ref[...], b_ref[...]).astype(o_ref.dtype)


def _cross_attn_sublayer_kernel(q_in_ref, k_in_ref, v_in_ref, mask_ref,
                                wq_ref, bq_ref, wk_ref, bk_ref, wv_ref, bv_ref,
                                wo_ref, bo_ref, g_ref, b_ref, o_ref,
                                *, heads, scale):
    # Fused TransformerBlock attention half: Q proj (from LN output), K/V proj
    # (from encoder key/value), MHA, output projection, residual + LayerNorm.
    qin = q_in_ref[0]                                    # (Lq, D) bf16
    kin = k_in_ref[0].astype(jnp.bfloat16)               # (Ls, D)
    vin = v_in_ref[0].astype(jnp.bfloat16)               # (Ls, D)
    q = jnp.dot(qin, wq_ref[...], preferred_element_type=jnp.float32) + bq_ref[...]
    k = jnp.dot(kin, wk_ref[...], preferred_element_type=jnp.float32) + bk_ref[...]
    v = jnp.dot(vin, wv_ref[...], preferred_element_type=jnp.float32) + bv_ref[...]
    attn = _mha(q, k, v, mask_ref[0], heads, scale)      # (Lq, D) f32
    y = jnp.dot(attn.astype(jnp.bfloat16), wo_ref[...],
                preferred_element_type=jnp.float32) + bo_ref[...]
    z = y + qin.astype(jnp.float32)                      # residual in f32
    o_ref[0] = _layernorm(z, g_ref[...], b_ref[...]).astype(o_ref.dtype)


def _mlp_res_ln_kernel(x_ref, w1_ref, b1_ref, w2_ref, b2_ref, g_ref, b_ref, o_ref):
    # out = LayerNorm(relu(x@W1+b1)@W2 + b2 + x) * gamma + beta
    # Row-gridded; the Dhid-wide intermediate h never leaves VMEM/vregs.
    x = x_ref[...]                                       # (tm, D) bf16
    h = jnp.dot(x, w1_ref[...], preferred_element_type=jnp.float32) + b1_ref[...]
    h = jnp.maximum(h, 0.0)
    y = jnp.dot(h.astype(jnp.bfloat16), w2_ref[...],
                preferred_element_type=jnp.float32) + b2_ref[...]
    z = y + x.astype(jnp.float32)
    o_ref[...] = _layernorm(z, g_ref[...], b_ref[...]).astype(o_ref.dtype)


# ------------------------------ kernel wrappers -------------------------------

def self_attn_sublayer(x, mask_i8, p, gamma, beta, heads, scale):
    N, Lq, D = x.shape
    return pl.pallas_call(
        functools.partial(_self_attn_sublayer_kernel, heads=heads, scale=scale),
        out_shape=jax.ShapeDtypeStruct((N, Lq, D), jnp.bfloat16),
        grid=(N,),
        in_specs=[
            pl.BlockSpec((1, Lq, D), lambda n: (n, 0, 0)),     # x (f32)
            pl.BlockSpec((1, Lq, Lq), lambda n: (n, 0, 0)),    # mask (int8)
            _w_spec((D, D)), _w_spec((1, D)),                  # wq, bq
            _w_spec((D, D)), _w_spec((1, D)),                  # wk, bk
            _w_spec((D, D)), _w_spec((1, D)),                  # wv, bv
            _w_spec((D, D)), _w_spec((1, D)),                  # wo, bo
            _w_spec((1, D)), _w_spec((1, D)),                  # gamma, beta
        ],
        out_specs=pl.BlockSpec((1, Lq, D), lambda n: (n, 0, 0)),
        compiler_params=_compiler_params(1),
    )(x, mask_i8,
      p['wq'], p['bq'], p['wk'], p['bk'], p['wv'], p['bv'], p['wo'], p['bo'],
      gamma, beta)


def cross_attn_sublayer(query, enc_key, enc_value, mask_i8, p, gamma, beta,
                        heads, scale):
    N, Lq, D = query.shape
    Ls = enc_key.shape[1]
    return pl.pallas_call(
        functools.partial(_cross_attn_sublayer_kernel, heads=heads, scale=scale),
        out_shape=jax.ShapeDtypeStruct((N, Lq, D), jnp.bfloat16),
        grid=(N,),
        in_specs=[
            pl.BlockSpec((1, Lq, D), lambda n: (n, 0, 0)),     # query (bf16)
            pl.BlockSpec((1, Ls, D), lambda n: (n, 0, 0)),     # enc key (f32)
            pl.BlockSpec((1, Ls, D), lambda n: (n, 0, 0)),     # enc value (f32)
            pl.BlockSpec((1, Lq, Ls), lambda n: (n, 0, 0)),    # mask (int8)
            _w_spec((D, D)), _w_spec((1, D)),                  # wq, bq
            _w_spec((D, D)), _w_spec((1, D)),                  # wk, bk
            _w_spec((D, D)), _w_spec((1, D)),                  # wv, bv
            _w_spec((D, D)), _w_spec((1, D)),                  # wo, bo
            _w_spec((1, D)), _w_spec((1, D)),                  # gamma, beta
        ],
        out_specs=pl.BlockSpec((1, Lq, D), lambda n: (n, 0, 0)),
        compiler_params=_compiler_params(1),
    )(query, enc_key, enc_value, mask_i8,
      p['wq'], p['bq'], p['wk'], p['bk'], p['wv'], p['bv'], p['wo'], p['bo'],
      gamma, beta)


def mlp_res_ln(x2d, w1, b1, w2, b2, gamma, beta):
    M, D = x2d.shape
    Dhid = w1.shape[1]
    tm = _row_tile(M)
    xp, M0 = _pad_rows(x2d, tm)
    Mp = xp.shape[0]
    out = pl.pallas_call(
        _mlp_res_ln_kernel,
        out_shape=jax.ShapeDtypeStruct((Mp, D), jnp.float32),
        grid=(Mp // tm,),
        in_specs=[
            pl.BlockSpec((tm, D), lambda i: (i, 0)),           # x (bf16)
            _w_spec((D, Dhid)), _w_spec((1, Dhid)),            # w1, b1
            _w_spec((Dhid, D)), _w_spec((1, D)),               # w2, b2
            _w_spec((1, D)), _w_spec((1, D)),                  # gamma, beta
        ],
        out_specs=pl.BlockSpec((tm, D), lambda i: (i, 0)),
        compiler_params=_compiler_params(1),
    )(xp, w1, b1, w2, b2, gamma, beta)
    return out[:M0]


# ------------------------- module-level composition --------------------------

def prepare_params(params):
    """One-time (outside jit) prep: weights -> bf16, biases / LN params -> (1, D)."""
    def prep_attn(p):
        return {k: (v.astype(jnp.bfloat16) if k.startswith('w')
                    else v.reshape(1, -1).astype(jnp.float32))
                for k, v in p.items()}

    def prep_ln(gb):
        g, b = gb
        return (g.reshape(1, -1).astype(jnp.float32),
                b.reshape(1, -1).astype(jnp.float32))

    return dict(
        self_attn=prep_attn(params['self_attn']),
        tb_attn=prep_attn(params['tb_attn']),
        norm=prep_ln(params['norm']),
        n1=prep_ln(params['n1']),
        n2=prep_ln(params['n2']),
        w1=params['w1'].astype(jnp.bfloat16), b1=params['b1'].reshape(1, -1),
        w2=params['w2'].astype(jnp.bfloat16), b2=params['b2'].reshape(1, -1),
    )


def pallas_decoder_block(x, key_, value, trg_mask, src_mask, kp, d_model, heads):
    N, Lq, D = x.shape
    scale = 1.0 / (float(d_model) ** 0.5)   # PyTorch ref: softmax(E / sqrt(d_model))

    # Masks -> int8 (N, Lq, Lk): 4x less kernel DMA than a dense f32 additive
    # bias; converted to -1e20 inside the attention kernels.
    trg_m = (trg_mask[:, 0] != 0).astype(jnp.int8)
    src_m = (src_mask[:, 0] != 0).astype(jnp.int8)

    # (1) DecoderBlock masked self-attention sublayer (fully fused).
    g0, b0 = kp['norm']
    query = self_attn_sublayer(x, trg_m, kp['self_attn'], g0, b0, heads, scale)

    # (2) TransformerBlock cross-attention sublayer (fully fused; Q/K/V
    #     projections included, so no standalone linear() kernels remain).
    g1, b1 = kp['n1']
    out1 = cross_attn_sublayer(query, key_, value, src_m, kp['tb_attn'],
                               g1, b1, heads, scale)               # (N, Lq, D) bf16

    # (3) fused MLP (Linear -> ReLU -> Linear) + residual + LayerNorm.
    g2, b2 = kp['n2']
    out2 = mlp_res_ln(out1.reshape(N * Lq, D), kp['w1'], kp['b1'],
                      kp['w2'], kp['b2'], g2, b2)                  # (N*Lq, D) f32
    return out2.reshape(N, Lq, D)


# ------------------------- pure-JAX reference (check) ------------------------

def _ref_ln(x, g, b):
    m = x.mean(-1, keepdims=True)
    v = ((x - m) ** 2).mean(-1, keepdims=True)
    return (x - m) / jnp.sqrt(v + 1e-5) * g + b


def _ref_mhsa(value, key_, query, mask, p, d_model, heads):
    N, Lq, _ = query.shape
    Dh = d_model // heads
    v = (value @ p['wv'] + p['bv']).reshape(N, -1, heads, Dh)
    k = (key_ @ p['wk'] + p['bk']).reshape(N, -1, heads, Dh)
    q = (query @ p['wq'] + p['bq']).reshape(N, Lq, heads, Dh)
    energy = jnp.einsum('nqhd,nkhd->nhqk', q, k)
    energy = jnp.where(mask == 0, -1e20, energy)
    att = jax.nn.softmax(energy / (d_model ** 0.5), axis=3)
    out = jnp.einsum('nhql,nlhd->nqhd', att, v).reshape(N, Lq, d_model)
    return out @ p['wo'] + p['bo']


def ref_decoder_block(x, key_, value, trg_mask, src_mask, params, d_model, heads):
    attn = _ref_mhsa(x, x, x, trg_mask, params['self_attn'], d_model, heads)
    g, b = params['norm']
    query = _ref_ln(x + attn, g, b)
    x2 = _ref_mhsa(value, key_, query, src_mask, params['tb_attn'], d_model, heads)
    g1, b1 = params['n1']
    out1 = _ref_ln(x2 + query, g1, b1)
    y = jnp.maximum(out1 @ params['w1'] + params['b1'], 0.0) @ params['w2'] + params['b2']
    g2, b2 = params['n2']
    return _ref_ln(y + out1, g2, b2)


# --------------------------------- params ------------------------------------

def init_params(key, d_model, heads, expansion):
    keys = iter(jax.random.split(key, 64))

    def lin(din, dout):
        w = jax.random.normal(next(keys), (din, dout), jnp.float32) * 0.05
        b = jax.random.normal(next(keys), (dout,), jnp.float32) * 0.05
        return w, b

    def attn_params():
        wq, bq = lin(d_model, d_model)
        wk, bk = lin(d_model, d_model)
        wv, bv = lin(d_model, d_model)
        wo, bo = lin(d_model, d_model)
        return dict(wq=wq, bq=bq, wk=wk, bk=bk, wv=wv, bv=bv, wo=wo, bo=bo)

    def ln_params():
        return (jnp.ones((d_model,), jnp.float32), jnp.zeros((d_model,), jnp.float32))

    w1, b1 = lin(d_model, d_model * expansion)
    w2, b2 = lin(d_model * expansion, d_model)
    return dict(self_attn=attn_params(), norm=ln_params(),
                tb_attn=attn_params(), n1=ln_params(),
                w1=w1, b1=b1, w2=w2, b2=b2, n2=ln_params())


# ----------------------------------- main -------------------------------------

if __name__ == "__main__":
    d_model, heads, expansion = 32, 4, 2
    N, trg_len, src_len = 2, 8, 8

    root = jax.random.PRNGKey(0)
    k_par, k_x, k_key, k_val = jax.random.split(root, 4)

    params = init_params(k_par, d_model, heads, expansion)
    # Weight bf16 casts / bias reshapes happen ONCE, outside the jitted forward.
    kparams = prepare_params(params)

    x = jax.random.normal(k_x, (N, trg_len, d_model), jnp.float32)
    enc_key = jax.random.normal(k_key, (N, src_len, d_model), jnp.float32)
    enc_val = jax.random.normal(k_val, (N, src_len, d_model), jnp.float32)

    trg_mask = jnp.broadcast_to(
        jnp.tril(jnp.ones((trg_len, trg_len), jnp.float32))[None, None],
        (N, 1, trg_len, trg_len))
    src_mask = jnp.ones((N, 1, trg_len, src_len), jnp.float32)

    fwd = jax.jit(functools.partial(pallas_decoder_block,
                                    d_model=d_model, heads=heads))
    out = fwd(x, enc_key, enc_val, trg_mask, src_mask, kparams)
    out = jax.block_until_ready(out)

    ref = ref_decoder_block(x, enc_key, enc_val, trg_mask, src_mask,
                            params, d_model, heads)

    assert out.shape == (N, trg_len, d_model)
    assert bool(jnp.all(jnp.isfinite(out)))
    assert bool(jnp.allclose(out, ref, atol=5e-2, rtol=5e-2)), \
        float(jnp.max(jnp.abs(out - ref)))

    print("KERNEL_OK")
</pallas_src>

<mosaic_0001>
module attributes {stable_mosaic.version = 11 : i64} {
  func.func @_cross_attn_sublayer_kernel(%arg0: i32, %arg1: memref<1x8x32xbf16, #tpu.memory_space<vmem>>, %arg2: memref<1x8x32xf32, #tpu.memory_space<vmem>>, %arg3: memref<1x8x32xf32, #tpu.memory_space<vmem>>, %arg4: memref<1x8x8xi8, #tpu.memory_space<vmem>>, %arg5: memref<32x32xbf16, #tpu.memory_space<vmem>>, %arg6: memref<1x32xf32, #tpu.memory_space<vmem>>, %arg7: memref<32x32xbf16, #tpu.memory_space<vmem>>, %arg8: memref<1x32xf32, #tpu.memory_space<vmem>>, %arg9: memref<32x32xbf16, #tpu.memory_space<vmem>>, %arg10: memref<1x32xf32, #tpu.memory_space<vmem>>, %arg11: memref<32x32xbf16, #tpu.memory_space<vmem>>, %arg12: memref<1x32xf32, #tpu.memory_space<vmem>>, %arg13: memref<1x32xf32, #tpu.memory_space<vmem>>, %arg14: memref<1x32xf32, #tpu.memory_space<vmem>>, %arg15: memref<1x8x32xbf16, #tpu.memory_space<vmem>>) attributes {dimension_semantics = [#tpu.dimension_semantics<parallel>], iteration_bounds = array<i64: 2>, scalar_prefetch = 0 : i64, scratch_operands = 0 : i64, tpu.core_type = #tpu.core_type<tc>, window_params = [{transform_indices = @transform_0, window_bounds = array<i64: 1, 8, 32>}, {transform_indices = @transform_1, window_bounds = array<i64: 1, 8, 32>}, {transform_indices = @transform_2, window_bounds = array<i64: 1, 8, 32>}, {transform_indices = @transform_3, window_bounds = array<i64: 1, 8, 8>}, {pipeline_mode = #tpu.pipeline_mode<synchronous>, transform_indices = @transform_4, window_bounds = array<i64: 32, 32>}, {pipeline_mode = #tpu.pipeline_mode<synchronous>, transform_indices = @transform_5, window_bounds = array<i64: 1, 32>}, {pipeline_mode = #tpu.pipeline_mode<synchronous>, transform_indices = @transform_6, window_bounds = array<i64: 32, 32>}, {pipeline_mode = #tpu.pipeline_mode<synchronous>, transform_indices = @transform_7, window_bounds = array<i64: 1, 32>}, {pipeline_mode = #tpu.pipeline_mode<synchronous>, transform_indices = @transform_8, window_bounds = array<i64: 32, 32>}, {pipeline_mode = #tpu.pipeline_mode<synchronous>, transform_indices = @transform_9, window_bounds = array<i64: 1, 32>}, {pipeline_mode = #tpu.pipeline_mode<synchronous>, transform_indices = @transform_10, window_bounds = array<i64: 32, 32>}, {pipeline_mode = #tpu.pipeline_mode<synchronous>, transform_indices = @transform_11, window_bounds = array<i64: 1, 32>}, {pipeline_mode = #tpu.pipeline_mode<synchronous>, transform_indices = @transform_12, window_bounds = array<i64: 1, 32>}, {pipeline_mode = #tpu.pipeline_mode<synchronous>, transform_indices = @transform_13, window_bounds = array<i64: 1, 32>}, {transform_indices = @transform_14, window_bounds = array<i64: 1, 8, 32>}]} {
    %c0 = arith.constant 0 : index
    %c0_0 = arith.constant 0 : index
    %c0_1 = arith.constant 0 : index
    %0 = vector.load %arg1[%c0, %c0_0, %c0_1] : memref<1x8x32xbf16, #tpu.memory_space<vmem>>, vector<1x8x32xbf16>
    %1 = vector.shape_cast %0 : vector<1x8x32xbf16> to vector<8x32xbf16>
    %c0_2 = arith.constant 0 : index
    %c0_3 = arith.constant 0 : index
    %c0_4 = arith.constant 0 : index
    %2 = vector.load %arg2[%c0_2, %c0_3, %c0_4] : memref<1x8x32xf32, #tpu.memory_space<vmem>>, vector<1x8x32xf32>
    %3 = vector.shape_cast %2 : vector<1x8x32xf32> to vector<8x32xf32>
    %4 = arith.truncf %3 : vector<8x32xf32> to vector<8x32xbf16>
    %c0_5 = arith.constant 0 : index
    %c0_6 = arith.constant 0 : index
    %c0_7 = arith.constant 0 : index
    %5 = vector.load %arg3[%c0_5, %c0_6, %c0_7] : memref<1x8x32xf32, #tpu.memory_space<vmem>>, vector<1x8x32xf32>
    %6 = vector.shape_cast %5 : vector<1x8x32xf32> to vector<8x32xf32>
    %7 = arith.truncf %6 : vector<8x32xf32> to vector<8x32xbf16>
    %c0_8 = arith.constant 0 : index
    %c0_9 = arith.constant 0 : index
    %8 = vector.load %arg5[%c0_8, %c0_9] : memref<32x32xbf16, #tpu.memory_space<vmem>>, vector<32x32xbf16>
    %cst = arith.constant dense<0.000000e+00> : vector<8x32xf32>
    %9 = tpu.matmul %1, %8, %cst {dimension_numbers = #tpu.dot_dimension_numbers<[1], [0], [0], [1], [0, 0, 1, 1], [], []>} : vector<8x32xbf16>, vector<32x32xbf16>, vector<8x32xf32> -> vector<8x32xf32>
    %c0_10 = arith.constant 0 : index
    %c0_11 = arith.constant 0 : index
    %10 = vector.load %arg6[%c0_10, %c0_11] : memref<1x32xf32, #tpu.memory_space<vmem>>, vector<1x32xf32>
    %11 = vector.broadcast %10 : vector<1x32xf32> to vector<8x32xf32>
    %12 = arith.addf %9, %11 : vector<8x32xf32>
    %c0_12 = arith.constant 0 : index
    %c0_13 = arith.constant 0 : index
    %13 = vector.load %arg7[%c0_12, %c0_13] : memref<32x32xbf16, #tpu.memory_space<vmem>>, vector<32x32xbf16>
    %cst_14 = arith.constant dense<0.000000e+00> : vector<8x32xf32>
    %14 = tpu.matmul %4, %13, %cst_14 {dimension_numbers = #tpu.dot_dimension_numbers<[1], [0], [0], [1], [0, 0, 1, 1], [], []>} : vector<8x32xbf16>, vector<32x32xbf16>, vector<8x32xf32> -> vector<8x32xf32>
    %c0_15 = arith.constant 0 : index
    %c0_16 = arith.constant 0 : index
    %15 = vector.load %arg8[%c0_15, %c0_16] : memref<1x32xf32, #tpu.memory_space<vmem>>, vector<1x32xf32>
    %16 = vector.broadcast %15 : vector<1x32xf32> to vector<8x32xf32>
    %17 = arith.addf %14, %16 : vector<8x32xf32>
    %c0_17 = arith.constant 0 : index
    %c0_18 = arith.constant 0 : index
    %18 = vector.load %arg9[%c0_17, %c0_18] : memref<32x32xbf16, #tpu.memory_space<vmem>>, vector<32x32xbf16>
    %cst_19 = arith.constant dense<0.000000e+00> : vector<8x32xf32>
    %19 = tpu.matmul %7, %18, %cst_19 {dimension_numbers = #tpu.dot_dimension_numbers<[1], [0], [0], [1], [0, 0, 1, 1], [], []>} : vector<8x32xbf16>, vector<32x32xbf16>, vector<8x32xf32> -> vector<8x32xf32>
    %c0_20 = arith.constant 0 : index
    %c0_21 = arith.constant 0 : index
    %20 = vector.load %arg10[%c0_20, %c0_21] : memref<1x32xf32, #tpu.memory_space<vmem>>, vector<1x32xf32>
    %21 = vector.broadcast %20 : vector<1x32xf32> to vector<8x32xf32>
    %22 = arith.addf %19, %21 : vector<8x32xf32>
    %c0_22 = arith.constant 0 : index
    %c0_23 = arith.constant 0 : index
    %c0_24 = arith.constant 0 : index
    %23 = vector.load %arg4[%c0_22, %c0_23, %c0_24] : memref<1x8x8xi8, #tpu.memory_space<vmem>>, vector<1x8x8xi8>
    %24 = vector.shape_cast %23 : vector<1x8x8xi8> to vector<8x8xi8>
    %cst_25 = arith.constant 0.176776692 : f32
    %25 = vector.broadcast %cst_25 : f32 to vector<8x32xf32>
    %26 = arith.mulf %12, %25 : vector<8x32xf32>
    %27 = vector.shape_cast %26 : vector<8x32xf32> to vector<8x4x8xf32>
    %28 = tpu.transpose %27, [1, 0, 2] : vector<8x4x8xf32> -> vector<4x8x8xf32>
    %29 = arith.truncf %28 : vector<4x8x8xf32> to vector<4x8x8xbf16>
    %30 = vector.shape_cast %17 : vector<8x32xf32> to vector<8x4x8xf32>
    %31 = tpu.transpose %30, [1, 0, 2] : vector<8x4x8xf32> -> vector<4x8x8xf32>
    %32 = arith.truncf %31 : vector<4x8x8xf32> to vector<4x8x8xbf16>
    %33 = vector.shape_cast %22 : vector<8x32xf32> to vector<8x4x8xf32>
    %34 = tpu.transpose %33, [1, 0, 2] : vector<8x4x8xf32> -> vector<4x8x8xf32>
    %35 = arith.truncf %34 : vector<4x8x8xf32> to vector<4x8x8xbf16>
    "tpu.trace_start"() <{level = 10 : i32, message = "hqd,hkd->hqk"}> : () -> ()
    %cst_26 = arith.constant dense<0.000000e+00> : vector<4x8x8xf32>
    %36 = tpu.matmul %29, %32, %cst_26 {dimension_numbers = #tpu.dot_dimension_numbers<[2], [2], [1], [1], [0, 0, 0, 1, 1, 1], [0], [0]>} : vector<4x8x8xbf16>, vector<4x8x8xbf16>, vector<4x8x8xf32> -> vector<4x8x8xf32>
    "tpu.trace_stop"() : () -> ()
    %37 = arith.sitofp %24 : vector<8x8xi8> to vector<8x8xf32>
    %38 = vector.shape_cast %37 : vector<8x8xf32> to vector<1x8x8xf32>
    %cst_27 = arith.constant 0.000000e+00 : f32
    %39 = vector.broadcast %cst_27 : f32 to vector<1x8x8xf32>
    %40 = arith.cmpf oeq, %38, %39 : vector<1x8x8xf32>
    %cst_28 = arith.constant -1.000000e+20 : f32
    %41 = vector.shape_cast %40 : vector<1x8x8xi1> to vector<1x8x8xi1>
    %42 = vector.broadcast %41 : vector<1x8x8xi1> to vector<4x8x8xi1>
    %43 = vector.broadcast %cst_28 : f32 to vector<4x8x8xf32>
    %44 = arith.select %42, %43, %36 : vector<4x8x8xi1>, vector<4x8x8xf32>
    %cst_29 = arith.constant dense<0xFF800000> : vector<4x8xf32>
    %45 = vector.multi_reduction <maximumf>, %44, %cst_29 [2] : vector<4x8x8xf32> to vector<4x8xf32>
    %46 = vector.shape_cast %45 : vector<4x8xf32> to vector<4x8x1xf32>
    %47 = vector.broadcast %46 : vector<4x8x1xf32> to vector<4x8x8xf32>
    %48 = arith.subf %44, %47 : vector<4x8x8xf32>
    %49 = math.exp %48 : vector<4x8x8xf32>
    %cst_30 = arith.constant dense<0.000000e+00> : vector<4x8xf32>
    %50 = vector.multi_reduction <add>, %49, %cst_30 [2] : vector<4x8x8xf32> to vector<4x8xf32>
    %51 = vector.shape_cast %50 : vector<4x8xf32> to vector<4x8x1xf32>
    %52 = arith.truncf %49 : vector<4x8x8xf32> to vector<4x8x8xbf16>
    "tpu.trace_start"() <{level = 10 : i32, message = "hqk,hkd->hqd"}> : () -> ()
    %cst_31 = arith.constant dense<0.000000e+00> : vector<4x8x8xf32>
    %53 = tpu.matmul %52, %35, %cst_31 {dimension_numbers = #tpu.dot_dimension_numbers<[2], [1], [1], [2], [0, 0, 0, 1, 1, 2], [0], [0]>} : vector<4x8x8xbf16>, vector<4x8x8xbf16>, vector<4x8x8xf32> -> vector<4x8x8xf32>
    "tpu.trace_stop"() : () -> ()
    %54 = tpu.reciprocal %51 {approx = true} : vector<4x8x1xf32> -> vector<4x8x1xf32>
    %55 = vector.broadcast %54 : vector<4x8x1xf32> to vector<4x8x8xf32>
    %56 = arith.mulf %53, %55 : vector<4x8x8xf32>
    %57 = tpu.transpose %56, [1, 0, 2] : vector<4x8x8xf32> -> vector<8x4x8xf32>
    %58 = vector.shape_cast %57 : vector<8x4x8xf32> to vector<8x32xf32>
    %59 = arith.truncf %58 : vector<8x32xf32> to vector<8x32xbf16>
    %c0_32 = arith.constant 0 : index
    %c0_33 = arith.constant 0 : index
    %60 = vector.load %arg11[%c0_32, %c0_33] : memref<32x32xbf16, #tpu.memory_space<vmem>>, vector<32x32xbf16>
    %cst_34 = arith.constant dense<0.000000e+00> : vector<8x32xf32>
    %61 = tpu.matmul %59, %60, %cst_34 {dimension_numbers = #tpu.dot_dimension_numbers<[1], [0], [0], [1], [0, 0, 1, 1], [], []>} : vector<8x32xbf16>, vector<32x32xbf16>, vector<8x32xf32> -> vector<8x32xf32>
    %c0_35 = arith.constant 0 : index
    %c0_36 = arith.constant 0 : index
    %62 = vector.load %arg12[%c0_35, %c0_36] : memref<1x32xf32, #tpu.memory_space<vmem>>, vector<1x32xf32>
    %63 = vector.broadcast %62 : vector<1x32xf32> to vector<8x32xf32>
    %64 = arith.addf %61, %63 : vector<8x32xf32>
    %65 = arith.extf %1 : vector<8x32xbf16> to vector<8x32xf32>
    %66 = arith.addf %64, %65 : vector<8x32xf32>
    %c0_37 = arith.constant 0 : index
    %c0_38 = arith.constant 0 : index
    %67 = vector.load %arg13[%c0_37, %c0_38] : memref<1x32xf32, #tpu.memory_space<vmem>>, vector<1x32xf32>
    %c0_39 = arith.constant 0 : index
    %c0_40 = arith.constant 0 : index
    %68 = vector.load %arg14[%c0_39, %c0_40] : memref<1x32xf32, #tpu.memory_space<vmem>>, vector<1x32xf32>
    %cst_41 = arith.constant dense<0.000000e+00> : vector<8xf32>
    %69 = vector.multi_reduction <add>, %66, %cst_41 [1] : vector<8x32xf32> to vector<8xf32>
    %70 = vector.shape_cast %69 : vector<8xf32> to vector<8x1xf32>
    %cst_42 = arith.constant 3.200000e+01 : f32
    %71 = vector.broadcast %cst_42 : f32 to vector<8x1xf32>
    %72 = arith.divf %70, %71 : vector<8x1xf32>
    %73 = vector.broadcast %72 : vector<8x1xf32> to vector<8x32xf32>
    %74 = arith.subf %66, %73 : vector<8x32xf32>
    %75 = arith.mulf %74, %74 : vector<8x32xf32>
    %cst_43 = arith.constant dense<0.000000e+00> : vector<8xf32>
    %76 = vector.multi_reduction <add>, %75, %cst_43 [1] : vector<8x32xf32> to vector<8xf32>
    %77 = vector.shape_cast %76 : vector<8xf32> to vector<8x1xf32>
    %cst_44 = arith.constant 3.200000e+01 : f32
    %78 = vector.broadcast %cst_44 : f32 to vector<8x1xf32>
    %79 = arith.divf %77, %78 : vector<8x1xf32>
    %cst_45 = arith.constant 9.99999974E-6 : f32
    %80 = vector.broadcast %cst_45 : f32 to vector<8x1xf32>
    %81 = arith.addf %79, %80 : vector<8x1xf32>
    %82 = math.rsqrt %81 : vector<8x1xf32>
    %83 = vector.broadcast %72 : vector<8x1xf32> to vector<8x32xf32>
    %84 = arith.subf %66, %83 : vector<8x32xf32>
    %85 = vector.broadcast %82 : vector<8x1xf32> to vector<8x32xf32>
    %86 = arith.mulf %84, %85 : vector<8x32xf32>
    %87 = vector.broadcast %67 : vector<1x32xf32> to vector<8x32xf32>
    %88 = arith.mulf %86, %87 : vector<8x32xf32>
    %89 = vector.broadcast %68 : vector<1x32xf32> to vector<8x32xf32>
    %90 = arith.addf %88, %89 : vector<8x32xf32>
    %91 = arith.truncf %90 : vector<8x32xf32> to vector<8x32xbf16>
    %c0_46 = arith.constant 0 : index
    %c0_47 = arith.constant 0 : index
    %c0_48 = arith.constant 0 : index
    %92 = vector.load %arg15[%c0_46, %c0_47, %c0_48] : memref<1x8x32xbf16, #tpu.memory_space<vmem>>, vector<1x8x32xbf16>
    %93 = vector.shape_cast %92 : vector<1x8x32xbf16> to vector<8x32xbf16>
    %94 = vector.shape_cast %91 : vector<8x32xbf16> to vector<1x8x32xbf16>
    tpu.vector_store %arg15[%c0_46, %c0_47, %c0_48], %94 {strides = array<i32>} : memref<1x8x32xbf16, #tpu.memory_space<vmem>>, vector<1x8x32xbf16>,
    return
  }
  func.func @transform_0(%arg0: i32) -> (i32, i32, i32) {
    %c0_i32 = arith.constant 0 : i32
    %c0_i32_0 = arith.constant 0 : i32
    %c0_i32_1 = arith.constant 0 : i32
    return %arg0, %c0_i32, %c0_i32_0 : i32, i32, i32
  }
  func.func @transform_1(%arg0: i32) -> (i32, i32, i32) {
    %c0_i32 = arith.constant 0 : i32
    %c0_i32_0 = arith.constant 0 : i32
    %c0_i32_1 = arith.constant 0 : i32
    return %arg0, %c0_i32, %c0_i32_0 : i32, i32, i32
  }
  func.func @transform_2(%arg0: i32) -> (i32, i32, i32) {
    %c0_i32 = arith.constant 0 : i32
    %c0_i32_0 = arith.constant 0 : i32
    %c0_i32_1 = arith.constant 0 : i32
    return %arg0, %c0_i32, %c0_i32_0 : i32, i32, i32
  }
  func.func @transform_3(%arg0: i32) -> (i32, i32, i32) {
    %c0_i32 = arith.constant 0 : i32
    %c0_i32_0 = arith.constant 0 : i32
    %c0_i32_1 = arith.constant 0 : i32
    return %arg0, %c0_i32, %c0_i32_0 : i32, i32, i32
  }
  func.func @transform_4(%arg0: i32) -> (i32, i32) {
    %c0_i32 = arith.constant 0 : i32
    %c0_i32_0 = arith.constant 0 : i32
    %c0_i32_1 = arith.constant 0 : i32
    return %c0_i32, %c0_i32_0 : i32, i32
  }
  func.func @transform_5(%arg0: i32) -> (i32, i32) {
    %c0_i32 = arith.constant 0 : i32
    %c0_i32_0 = arith.constant 0 : i32
    %c0_i32_1 = arith.constant 0 : i32
    return %c0_i32, %c0_i32_0 : i32, i32
  }
  func.func @transform_6(%arg0: i32) -> (i32, i32) {
    %c0_i32 = arith.constant 0 : i32
    %c0_i32_0 = arith.constant 0 : i32
    %c0_i32_1 = arith.constant 0 : i32
    return %c0_i32, %c0_i32_0 : i32, i32
  }
  func.func @transform_7(%arg0: i32) -> (i32, i32) {
    %c0_i32 = arith.constant 0 : i32
    %c0_i32_0 = arith.constant 0 : i32
    %c0_i32_1 = arith.constant 0 : i32
    return %c0_i32, %c0_i32_0 : i32, i32
  }
  func.func @transform_8(%arg0: i32) -> (i32, i32) {
    %c0_i32 = arith.constant 0 : i32
    %c0_i32_0 = arith.constant 0 : i32
    %c0_i32_1 = arith.constant 0 : i32
    return %c0_i32, %c0_i32_0 : i32, i32
  }
  func.func @transform_9(%arg0: i32) -> (i32, i32) {
    %c0_i32 = arith.constant 0 : i32
    %c0_i32_0 = arith.constant 0 : i32
    %c0_i32_1 = arith.constant 0 : i32
    return %c0_i32, %c0_i32_0 : i32, i32
  }
  func.func @transform_10(%arg0: i32) -> (i32, i32) {
    %c0_i32 = arith.constant 0 : i32
    %c0_i32_0 = arith.constant 0 : i32
    %c0_i32_1 = arith.constant 0 : i32
    return %c0_i32, %c0_i32_0 : i32, i32
  }
  func.func @transform_11(%arg0: i32) -> (i32, i32) {
    %c0_i32 = arith.constant 0 : i32
    %c0_i32_0 = arith.constant 0 : i32
    %c0_i32_1 = arith.constant 0 : i32
    return %c0_i32, %c0_i32_0 : i32, i32
  }
  func.func @transform_12(%arg0: i32) -> (i32, i32) {
    %c0_i32 = arith.constant 0 : i32
    %c0_i32_0 = arith.constant 0 : i32
    %c0_i32_1 = arith.constant 0 : i32
    return %c0_i32, %c0_i32_0 : i32, i32
  }
  func.func @transform_13(%arg0: i32) -> (i32, i32) {
    %c0_i32 = arith.constant 0 : i32
    %c0_i32_0 = arith.constant 0 : i32
    %c0_i32_1 = arith.constant 0 : i32
    return %c0_i32, %c0_i32_0 : i32, i32
  }
  func.func @transform_14(%arg0: i32) -> (i32, i32, i32) {
    %c0_i32 = arith.constant 0 : i32
    %c0_i32_0 = arith.constant 0 : i32
    %c0_i32_1 = arith.constant 0 : i32
    return %arg0, %c0_i32, %c0_i32_0 : i32, i32, i32
  }
}

module attributes {stable_mosaic.version = 11 : i64} {
  func.func @_self_attn_sublayer_kernel(%arg0: i32, %arg1: memref<1x8x32xf32, #tpu.memory_space<vmem>>, %arg2: memref<1x8x8xi8, #tpu.memory_space<vmem>>, %arg3: memref<32x32xbf16, #tpu.memory_space<vmem>>, %arg4: memref<1x32xf32, #tpu.memory_space<vmem>>, %arg5: memref<32x32xbf16, #tpu.memory_space<vmem>>, %arg6: memref<1x32xf32, #tpu.memory_space<vmem>>, %arg7: memref<32x32xbf16, #tpu.memory_space<vmem>>, %arg8: memref<1x32xf32, #tpu.memory_space<vmem>>, %arg9: memref<32x32xbf16, #tpu.memory_space<vmem>>, %arg10: memref<1x32xf32, #tpu.memory_space<vmem>>, %arg11: memref<1x32xf32, #tpu.memory_space<vmem>>, %arg12: memref<1x32xf32, #tpu.memory_space<vmem>>, %arg13: memref<1x8x32xbf16, #tpu.memory_space<vmem>>) attributes {dimension_semantics = [#tpu.dimension_semantics<parallel>], iteration_bounds = array<i64: 2>, scalar_prefetch = 0 : i64, scratch_operands = 0 : i64, tpu.core_type = #tpu.core_type<tc>, window_params = [{transform_indices = @transform_0, window_bounds = array<i64: 1, 8, 32>}, {transform_indices = @transform_1, window_bounds = array<i64: 1, 8, 8>}, {pipeline_mode = #tpu.pipeline_mode<synchronous>, transform_indices = @transform_2, window_bounds = array<i64: 32, 32>}, {pipeline_mode = #tpu.pipeline_mode<synchronous>, transform_indices = @transform_3, window_bounds = array<i64: 1, 32>}, {pipeline_mode = #tpu.pipeline_mode<synchronous>, transform_indices = @transform_4, window_bounds = array<i64: 32, 32>}, {pipeline_mode = #tpu.pipeline_mode<synchronous>, transform_indices = @transform_5, window_bounds = array<i64: 1, 32>}, {pipeline_mode = #tpu.pipeline_mode<synchronous>, transform_indices = @transform_6, window_bounds = array<i64: 32, 32>}, {pipeline_mode = #tpu.pipeline_mode<synchronous>, transform_indices = @transform_7, window_bounds = array<i64: 1, 32>}, {pipeline_mode = #tpu.pipeline_mode<synchronous>, transform_indices = @transform_8, window_bounds = array<i64: 32, 32>}, {pipeline_mode = #tpu.pipeline_mode<synchronous>, transform_indices = @transform_9, window_bounds = array<i64: 1, 32>}, {pipeline_mode = #tpu.pipeline_mode<synchronous>, transform_indices = @transform_10, window_bounds = array<i64: 1, 32>}, {pipeline_mode = #tpu.pipeline_mode<synchronous>, transform_indices = @transform_11, window_bounds = array<i64: 1, 32>}, {transform_indices = @transform_12, window_bounds = array<i64: 1, 8, 32>}]} {
    %c0 = arith.constant 0 : index
    %c0_0 = arith.constant 0 : index
    %c0_1 = arith.constant 0 : index
    %0 = vector.load %arg1[%c0, %c0_0, %c0_1] : memref<1x8x32xf32, #tpu.memory_space<vmem>>, vector<1x8x32xf32>
    %1 = vector.shape_cast %0 : vector<1x8x32xf32> to vector<8x32xf32>
    %2 = arith.truncf %1 : vector<8x32xf32> to vector<8x32xbf16>
    %c0_2 = arith.constant 0 : index
    %c0_3 = arith.constant 0 : index
    %3 = vector.load %arg3[%c0_2, %c0_3] : memref<32x32xbf16, #tpu.memory_space<vmem>>, vector<32x32xbf16>
    %cst = arith.constant dense<0.000000e+00> : vector<8x32xf32>
    %4 = tpu.matmul %2, %3, %cst {dimension_numbers = #tpu.dot_dimension_numbers<[1], [0], [0], [1], [0, 0, 1, 1], [], []>} : vector<8x32xbf16>, vector<32x32xbf16>, vector<8x32xf32> -> vector<8x32xf32>
    %c0_4 = arith.constant 0 : index
    %c0_5 = arith.constant 0 : index
    %5 = vector.load %arg4[%c0_4, %c0_5] : memref<1x32xf32, #tpu.memory_space<vmem>>, vector<1x32xf32>
    %6 = vector.broadcast %5 : vector<1x32xf32> to vector<8x32xf32>
    %7 = arith.addf %4, %6 : vector<8x32xf32>
    %c0_6 = arith.constant 0 : index
    %c0_7 = arith.constant 0 : index
    %8 = vector.load %arg5[%c0_6, %c0_7] : memref<32x32xbf16, #tpu.memory_space<vmem>>, vector<32x32xbf16>
    %cst_8 = arith.constant dense<0.000000e+00> : vector<8x32xf32>
    %9 = tpu.matmul %2, %8, %cst_8 {dimension_numbers = #tpu.dot_dimension_numbers<[1], [0], [0], [1], [0, 0, 1, 1], [], []>} : vector<8x32xbf16>, vector<32x32xbf16>, vector<8x32xf32> -> vector<8x32xf32>
    %c0_9 = arith.constant 0 : index
    %c0_10 = arith.constant 0 : index
    %10 = vector.load %arg6[%c0_9, %c0_10] : memref<1x32xf32, #tpu.memory_space<vmem>>, vector<1x32xf32>
    %11 = vector.broadcast %10 : vector<1x32xf32> to vector<8x32xf32>
    %12 = arith.addf %9, %11 : vector<8x32xf32>
    %c0_11 = arith.constant 0 : index
    %c0_12 = arith.constant 0 : index
    %13 = vector.load %arg7[%c0_11, %c0_12] : memref<32x32xbf16, #tpu.memory_space<vmem>>, vector<32x32xbf16>
    %cst_13 = arith.constant dense<0.000000e+00> : vector<8x32xf32>
    %14 = tpu.matmul %2, %13, %cst_13 {dimension_numbers = #tpu.dot_dimension_numbers<[1], [0], [0], [1], [0, 0, 1, 1], [], []>} : vector<8x32xbf16>, vector<32x32xbf16>, vector<8x32xf32> -> vector<8x32xf32>
    %c0_14 = arith.constant 0 : index
    %c0_15 = arith.constant 0 : index
    %15 = vector.load %arg8[%c0_14, %c0_15] : memref<1x32xf32, #tpu.memory_space<vmem>>, vector<1x32xf32>
    %16 = vector.broadcast %15 : vector<1x32xf32> to vector<8x32xf32>
    %17 = arith.addf %14, %16 : vector<8x32xf32>
    %c0_16 = arith.constant 0 : index
    %c0_17 = arith.constant 0 : index
    %c0_18 = arith.constant 0 : index
    %18 = vector.load %arg2[%c0_16, %c0_17, %c0_18] : memref<1x8x8xi8, #tpu.memory_space<vmem>>, vector<1x8x8xi8>
    %19 = vector.shape_cast %18 : vector<1x8x8xi8> to vector<8x8xi8>
    %cst_19 = arith.constant 0.176776692 : f32
    %20 = vector.broadcast %cst_19 : f32 to vector<8x32xf32>
    %21 = arith.mulf %7, %20 : vector<8x32xf32>
    %22 = vector.shape_cast %21 : vector<8x32xf32> to vector<8x4x8xf32>
    %23 = tpu.transpose %22, [1, 0, 2] : vector<8x4x8xf32> -> vector<4x8x8xf32>
    %24 = arith.truncf %23 : vector<4x8x8xf32> to vector<4x8x8xbf16>
    %25 = vector.shape_cast %12 : vector<8x32xf32> to vector<8x4x8xf32>
    %26 = tpu.transpose %25, [1, 0, 2] : vector<8x4x8xf32> -> vector<4x8x8xf32>
    %27 = arith.truncf %26 : vector<4x8x8xf32> to vector<4x8x8xbf16>
    %28 = vector.shape_cast %17 : vector<8x32xf32> to vector<8x4x8xf32>
    %29 = tpu.transpose %28, [1, 0, 2] : vector<8x4x8xf32> -> vector<4x8x8xf32>
    %30 = arith.truncf %29 : vector<4x8x8xf32> to vector<4x8x8xbf16>
    "tpu.trace_start"() <{level = 10 : i32, message = "hqd,hkd->hqk"}> : () -> ()
    %cst_20 = arith.constant dense<0.000000e+00> : vector<4x8x8xf32>
    %31 = tpu.matmul %24, %27, %cst_20 {dimension_numbers = #tpu.dot_dimension_numbers<[2], [2], [1], [1], [0, 0, 0, 1, 1, 1], [0], [0]>} : vector<4x8x8xbf16>, vector<4x8x8xbf16>, vector<4x8x8xf32> -> vector<4x8x8xf32>
    "tpu.trace_stop"() : () -> ()
    %32 = arith.sitofp %19 : vector<8x8xi8> to vector<8x8xf32>
    %33 = vector.shape_cast %32 : vector<8x8xf32> to vector<1x8x8xf32>
    %cst_21 = arith.constant 0.000000e+00 : f32
    %34 = vector.broadcast %cst_21 : f32 to vector<1x8x8xf32>
    %35 = arith.cmpf oeq, %33, %34 : vector<1x8x8xf32>
    %cst_22 = arith.constant -1.000000e+20 : f32
    %36 = vector.shape_cast %35 : vector<1x8x8xi1> to vector<1x8x8xi1>
    %37 = vector.broadcast %36 : vector<1x8x8xi1> to vector<4x8x8xi1>
    %38 = vector.broadcast %cst_22 : f32 to vector<4x8x8xf32>
    %39 = arith.select %37, %38, %31 : vector<4x8x8xi1>, vector<4x8x8xf32>
    %cst_23 = arith.constant dense<0xFF800000> : vector<4x8xf32>
    %40 = vector.multi_reduction <maximumf>, %39, %cst_23 [2] : vector<4x8x8xf32> to vector<4x8xf32>
    %41 = vector.shape_cast %40 : vector<4x8xf32> to vector<4x8x1xf32>
    %42 = vector.broadcast %41 : vector<4x8x1xf32> to vector<4x8x8xf32>
    %43 = arith.subf %39, %42 : vector<4x8x8xf32>
    %44 = math.exp %43 : vector<4x8x8xf32>
    %cst_24 = arith.constant dense<0.000000e+00> : vector<4x8xf32>
    %45 = vector.multi_reduction <add>, %44, %cst_24 [2] : vector<4x8x8xf32> to vector<4x8xf32>
    %46 = vector.shape_cast %45 : vector<4x8xf32> to vector<4x8x1xf32>
    %47 = arith.truncf %44 : vector<4x8x8xf32> to vector<4x8x8xbf16>
    "tpu.trace_start"() <{level = 10 : i32, message = "hqk,hkd->hqd"}> : () -> ()
    %cst_25 = arith.constant dense<0.000000e+00> : vector<4x8x8xf32>
    %48 = tpu.matmul %47, %30, %cst_25 {dimension_numbers = #tpu.dot_dimension_numbers<[2], [1], [1], [2], [0, 0, 0, 1, 1, 2], [0], [0]>} : vector<4x8x8xbf16>, vector<4x8x8xbf16>, vector<4x8x8xf32> -> vector<4x8x8xf32>
    "tpu.trace_stop"() : () -> ()
    %49 = tpu.reciprocal %46 {approx = true} : vector<4x8x1xf32> -> vector<4x8x1xf32>
    %50 = vector.broadcast %49 : vector<4x8x1xf32> to vector<4x8x8xf32>
    %51 = arith.mulf %48, %50 : vector<4x8x8xf32>
    %52 = tpu.transpose %51, [1, 0, 2] : vector<4x8x8xf32> -> vector<8x4x8xf32>
    %53 = vector.shape_cast %52 : vector<8x4x8xf32> to vector<8x32xf32>
    %54 = arith.truncf %53 : vector<8x32xf32> to vector<8x32xbf16>
    %c0_26 = arith.constant 0 : index
    %c0_27 = arith.constant 0 : index
    %55 = vector.load %arg9[%c0_26, %c0_27] : memref<32x32xbf16, #tpu.memory_space<vmem>>, vector<32x32xbf16>
    %cst_28 = arith.constant dense<0.000000e+00> : vector<8x32xf32>
    %56 = tpu.matmul %54, %55, %cst_28 {dimension_numbers = #tpu.dot_dimension_numbers<[1], [0], [0], [1], [0, 0, 1, 1], [], []>} : vector<8x32xbf16>, vector<32x32xbf16>, vector<8x32xf32> -> vector<8x32xf32>
    %c0_29 = arith.constant 0 : index
    %c0_30 = arith.constant 0 : index
    %57 = vector.load %arg10[%c0_29, %c0_30] : memref<1x32xf32, #tpu.memory_space<vmem>>, vector<1x32xf32>
    %58 = vector.broadcast %57 : vector<1x32xf32> to vector<8x32xf32>
    %59 = arith.addf %56, %58 : vector<8x32xf32>
    %60 = arith.addf %59, %1 : vector<8x32xf32>
    %c0_31 = arith.constant 0 : index
    %c0_32 = arith.constant 0 : index
    %61 = vector.load %arg11[%c0_31, %c0_32] : memref<1x32xf32, #tpu.memory_space<vmem>>, vector<1x32xf32>
    %c0_33 = arith.constant 0 : index
    %c0_34 = arith.constant 0 : index
    %62 = vector.load %arg12[%c0_33, %c0_34] : memref<1x32xf32, #tpu.memory_space<vmem>>, vector<1x32xf32>
    %cst_35 = arith.constant dense<0.000000e+00> : vector<8xf32>
    %63 = vector.multi_reduction <add>, %60, %cst_35 [1] : vector<8x32xf32> to vector<8xf32>
    %64 = vector.shape_cast %63 : vector<8xf32> to vector<8x1xf32>
    %cst_36 = arith.constant 3.200000e+01 : f32
    %65 = vector.broadcast %cst_36 : f32 to vector<8x1xf32>
    %66 = arith.divf %64, %65 : vector<8x1xf32>
    %67 = vector.broadcast %66 : vector<8x1xf32> to vector<8x32xf32>
    %68 = arith.subf %60, %67 : vector<8x32xf32>
    %69 = arith.mulf %68, %68 : vector<8x32xf32>
    %cst_37 = arith.constant dense<0.000000e+00> : vector<8xf32>
    %70 = vector.multi_reduction <add>, %69, %cst_37 [1] : vector<8x32xf32> to vector<8xf32>
    %71 = vector.shape_cast %70 : vector<8xf32> to vector<8x1xf32>
    %cst_38 = arith.constant 3.200000e+01 : f32
    %72 = vector.broadcast %cst_38 : f32 to vector<8x1xf32>
    %73 = arith.divf %71, %72 : vector<8x1xf32>
    %cst_39 = arith.constant 9.99999974E-6 : f32
    %74 = vector.broadcast %cst_39 : f32 to vector<8x1xf32>
    %75 = arith.addf %73, %74 : vector<8x1xf32>
    %76 = math.rsqrt %75 : vector<8x1xf32>
    %77 = vector.broadcast %66 : vector<8x1xf32> to vector<8x32xf32>
    %78 = arith.subf %60, %77 : vector<8x32xf32>
    %79 = vector.broadcast %76 : vector<8x1xf32> to vector<8x32xf32>
    %80 = arith.mulf %78, %79 : vector<8x32xf32>
    %81 = vector.broadcast %61 : vector<1x32xf32> to vector<8x32xf32>
    %82 = arith.mulf %80, %81 : vector<8x32xf32>
    %83 = vector.broadcast %62 : vector<1x32xf32> to vector<8x32xf32>
    %84 = arith.addf %82, %83 : vector<8x32xf32>
    %85 = arith.truncf %84 : vector<8x32xf32> to vector<8x32xbf16>
    %c0_40 = arith.constant 0 : index
    %c0_41 = arith.constant 0 : index
    %c0_42 = arith.constant 0 : index
    %86 = vector.load %arg13[%c0_40, %c0_41, %c0_42] : memref<1x8x32xbf16, #tpu.memory_space<vmem>>, vector<1x8x32xbf16>
    %87 = vector.shape_cast %86 : vector<1x8x32xbf16> to vector<8x32xbf16>
    %88 = vector.shape_cast %85 : vector<8x32xbf16> to vector<1x8x32xbf16>
    tpu.vector_store %arg13[%c0_40, %c0_41, %c0_42], %88 {strides = array<i32>} : memref<1x8x32xbf16, #tpu.memory_space<vmem>>, vector<1x8x32xbf16>,
    return
  }
  func.func @transform_0(%arg0: i32) -> (i32, i32, i32) {
    %c0_i32 = arith.constant 0 : i32
    %c0_i32_0 = arith.constant 0 : i32
    %c0_i32_1 = arith.constant 0 : i32
    return %arg0, %c0_i32, %c0_i32_0 : i32, i32, i32
  }
  func.func @transform_1(%arg0: i32) -> (i32, i32, i32) {
    %c0_i32 = arith.constant 0 : i32
    %c0_i32_0 = arith.constant 0 : i32
    %c0_i32_1 = arith.constant 0 : i32
    return %arg0, %c0_i32, %c0_i32_0 : i32, i32, i32
  }
  func.func @transform_2(%arg0: i32) -> (i32, i32) {
    %c0_i32 = arith.constant 0 : i32
    %c0_i32_0 = arith.constant 0 : i32
    %c0_i32_1 = arith.constant 0 : i32
    return %c0_i32, %c0_i32_0 : i32, i32
  }
  func.func @transform_3(%arg0: i32) -> (i32, i32) {
    %c0_i32 = arith.constant 0 : i32
    %c0_i32_0 = arith.constant 0 : i32
    %c0_i32_1 = arith.constant 0 : i32
    return %c0_i32, %c0_i32_0 : i32, i32
  }
  func.func @transform_4(%arg0: i32) -> (i32, i32) {
    %c0_i32 = arith.constant 0 : i32
    %c0_i32_0 = arith.constant 0 : i32
    %c0_i32_1 = arith.constant 0 : i32
    return %c0_i32, %c0_i32_0 : i32, i32
  }
  func.func @transform_5(%arg0: i32) -> (i32, i32) {
    %c0_i32 = arith.constant 0 : i32
    %c0_i32_0 = arith.constant 0 : i32
    %c0_i32_1 = arith.constant 0 : i32
    return %c0_i32, %c0_i32_0 : i32, i32
  }
  func.func @transform_6(%arg0: i32) -> (i32, i32) {
    %c0_i32 = arith.constant 0 : i32
    %c0_i32_0 = arith.constant 0 : i32
    %c0_i32_1 = arith.constant 0 : i32
    return %c0_i32, %c0_i32_0 : i32, i32
  }
  func.func @transform_7(%arg0: i32) -> (i32, i32) {
    %c0_i32 = arith.constant 0 : i32
    %c0_i32_0 = arith.constant 0 : i32
    %c0_i32_1 = arith.constant 0 : i32
    return %c0_i32, %c0_i32_0 : i32, i32
  }
  func.func @transform_8(%arg0: i32) -> (i32, i32) {
    %c0_i32 = arith.constant 0 : i32
    %c0_i32_0 = arith.constant 0 : i32
    %c0_i32_1 = arith.constant 0 : i32
    return %c0_i32, %c0_i32_0 : i32, i32
  }
  func.func @transform_9(%arg0: i32) -> (i32, i32) {
    %c0_i32 = arith.constant 0 : i32
    %c0_i32_0 = arith.constant 0 : i32
    %c0_i32_1 = arith.constant 0 : i32
    return %c0_i32, %c0_i32_0 : i32, i32
  }
  func.func @transform_10(%arg0: i32) -> (i32, i32) {
    %c0_i32 = arith.constant 0 : i32
    %c0_i32_0 = arith.constant 0 : i32
    %c0_i32_1 = arith.constant 0 : i32
    return %c0_i32, %c0_i32_0 : i32, i32
  }
  func.func @transform_11(%arg0: i32) -> (i32, i32) {
    %c0_i32 = arith.constant 0 : i32
    %c0_i32_0 = arith.constant 0 : i32
    %c0_i32_1 = arith.constant 0 : i32
    return %c0_i32, %c0_i32_0 : i32, i32
  }
  func.func @transform_12(%arg0: i32) -> (i32, i32, i32) {
    %c0_i32 = arith.constant 0 : i32
    %c0_i32_0 = arith.constant 0 : i32
    %c0_i32_1 = arith.constant 0 : i32
    return %arg0, %c0_i32, %c0_i32_0 : i32, i32, i32
  }
}

module attributes {stable_mosaic.version = 11 : i64} {
  func.func @_mlp_res_ln_kernel(%arg0: i32, %arg1: memref<16x32xbf16, #tpu.memory_space<vmem>>, %arg2: memref<32x64xbf16, #tpu.memory_space<vmem>>, %arg3: memref<1x64xf32, #tpu.memory_space<vmem>>, %arg4: memref<64x32xbf16, #tpu.memory_space<vmem>>, %arg5: memref<1x32xf32, #tpu.memory_space<vmem>>, %arg6: memref<1x32xf32, #tpu.memory_space<vmem>>, %arg7: memref<1x32xf32, #tpu.memory_space<vmem>>, %arg8: memref<16x32xf32, #tpu.memory_space<vmem>>) attributes {dimension_semantics = [#tpu.dimension_semantics<parallel>], iteration_bounds = array<i64: 1>, scalar_prefetch = 0 : i64, scratch_operands = 0 : i64, tpu.core_type = #tpu.core_type<tc>, window_params = [{transform_indices = @transform_0, window_bounds = array<i64: 16, 32>}, {pipeline_mode = #tpu.pipeline_mode<synchronous>, transform_indices = @transform_1, window_bounds = array<i64: 32, 64>}, {pipeline_mode = #tpu.pipeline_mode<synchronous>, transform_indices = @transform_2, window_bounds = array<i64: 1, 64>}, {pipeline_mode = #tpu.pipeline_mode<synchronous>, transform_indices = @transform_3, window_bounds = array<i64: 64, 32>}, {pipeline_mode = #tpu.pipeline_mode<synchronous>, transform_indices = @transform_4, window_bounds = array<i64: 1, 32>}, {pipeline_mode = #tpu.pipeline_mode<synchronous>, transform_indices = @transform_5, window_bounds = array<i64: 1, 32>}, {pipeline_mode = #tpu.pipeline_mode<synchronous>, transform_indices = @transform_6, window_bounds = array<i64: 1, 32>}, {transform_indices = @transform_7, window_bounds = array<i64: 16, 32>}]} {
    %c0 = arith.constant 0 : index
    %c0_0 = arith.constant 0 : index
    %0 = vector.load %arg1[%c0, %c0_0] : memref<16x32xbf16, #tpu.memory_space<vmem>>, vector<16x32xbf16>
    %c0_1 = arith.constant 0 : index
    %c0_2 = arith.constant 0 : index
    %1 = vector.load %arg2[%c0_1, %c0_2] : memref<32x64xbf16, #tpu.memory_space<vmem>>, vector<32x64xbf16>
    %cst = arith.constant dense<0.000000e+00> : vector<16x64xf32>
    %2 = tpu.matmul %0, %1, %cst {dimension_numbers = #tpu.dot_dimension_numbers<[1], [0], [0], [1], [0, 0, 1, 1], [], []>} : vector<16x32xbf16>, vector<32x64xbf16>, vector<16x64xf32> -> vector<16x64xf32>
    %c0_3 = arith.constant 0 : index
    %c0_4 = arith.constant 0 : index
    %3 = vector.load %arg3[%c0_3, %c0_4] : memref<1x64xf32, #tpu.memory_space<vmem>>, vector<1x64xf32>
    %4 = vector.broadcast %3 : vector<1x64xf32> to vector<16x64xf32>
    %5 = arith.addf %2, %4 : vector<16x64xf32>
    %cst_5 = arith.constant 0.000000e+00 : f32
    %6 = vector.broadcast %cst_5 : f32 to vector<16x64xf32>
    %7 = arith.maximumf %5, %6 : vector<16x64xf32>
    %8 = arith.truncf %7 : vector<16x64xf32> to vector<16x64xbf16>
    %c0_6 = arith.constant 0 : index
    %c0_7 = arith.constant 0 : index
    %9 = vector.load %arg4[%c0_6, %c0_7] : memref<64x32xbf16, #tpu.memory_space<vmem>>, vector<64x32xbf16>
    %cst_8 = arith.constant dense<0.000000e+00> : vector<16x32xf32>
    %10 = tpu.matmul %8, %9, %cst_8 {dimension_numbers = #tpu.dot_dimension_numbers<[1], [0], [0], [1], [0, 0, 1, 1], [], []>} : vector<16x64xbf16>, vector<64x32xbf16>, vector<16x32xf32> -> vector<16x32xf32>
    %c0_9 = arith.constant 0 : index
    %c0_10 = arith.constant 0 : index
    %11 = vector.load %arg5[%c0_9, %c0_10] : memref<1x32xf32, #tpu.memory_space<vmem>>, vector<1x32xf32>
    %12 = vector.broadcast %11 : vector<1x32xf32> to vector<16x32xf32>
    %13 = arith.addf %10, %12 : vector<16x32xf32>
    %14 = arith.extf %0 : vector<16x32xbf16> to vector<16x32xf32>
    %15 = arith.addf %13, %14 : vector<16x32xf32>
    %c0_11 = arith.constant 0 : index
    %c0_12 = arith.constant 0 : index
    %16 = vector.load %arg6[%c0_11, %c0_12] : memref<1x32xf32, #tpu.memory_space<vmem>>, vector<1x32xf32>
    %c0_13 = arith.constant 0 : index
    %c0_14 = arith.constant 0 : index
    %17 = vector.load %arg7[%c0_13, %c0_14] : memref<1x32xf32, #tpu.memory_space<vmem>>, vector<1x32xf32>
    %cst_15 = arith.constant dense<0.000000e+00> : vector<16xf32>
    %18 = vector.multi_reduction <add>, %15, %cst_15 [1] : vector<16x32xf32> to vector<16xf32>
    %19 = vector.shape_cast %18 : vector<16xf32> to vector<16x1xf32>
    %cst_16 = arith.constant 3.200000e+01 : f32
    %20 = vector.broadcast %cst_16 : f32 to vector<16x1xf32>
    %21 = arith.divf %19, %20 : vector<16x1xf32>
    %22 = vector.broadcast %21 : vector<16x1xf32> to vector<16x32xf32>
    %23 = arith.subf %15, %22 : vector<16x32xf32>
    %24 = arith.mulf %23, %23 : vector<16x32xf32>
    %cst_17 = arith.constant dense<0.000000e+00> : vector<16xf32>
    %25 = vector.multi_reduction <add>, %24, %cst_17 [1] : vector<16x32xf32> to vector<16xf32>
    %26 = vector.shape_cast %25 : vector<16xf32> to vector<16x1xf32>
    %cst_18 = arith.constant 3.200000e+01 : f32
    %27 = vector.broadcast %cst_18 : f32 to vector<16x1xf32>
    %28 = arith.divf %26, %27 : vector<16x1xf32>
    %cst_19 = arith.constant 9.99999974E-6 : f32
    %29 = vector.broadcast %cst_19 : f32 to vector<16x1xf32>
    %30 = arith.addf %28, %29 : vector<16x1xf32>
    %31 = math.rsqrt %30 : vector<16x1xf32>
    %32 = vector.broadcast %21 : vector<16x1xf32> to vector<16x32xf32>
    %33 = arith.subf %15, %32 : vector<16x32xf32>
    %34 = vector.broadcast %31 : vector<16x1xf32> to vector<16x32xf32>
    %35 = arith.mulf %33, %34 : vector<16x32xf32>
    %36 = vector.broadcast %16 : vector<1x32xf32> to vector<16x32xf32>
    %37 = arith.mulf %35, %36 : vector<16x32xf32>
    %38 = vector.broadcast %17 : vector<1x32xf32> to vector<16x32xf32>
    %39 = arith.addf %37, %38 : vector<16x32xf32>
    %c0_20 = arith.constant 0 : index
    %c0_21 = arith.constant 0 : index
    %40 = vector.load %arg8[%c0_20, %c0_21] : memref<16x32xf32, #tpu.memory_space<vmem>>, vector<16x32xf32>
    tpu.vector_store %arg8[%c0_20, %c0_21], %39 {strides = array<i32>} : memref<16x32xf32, #tpu.memory_space<vmem>>, vector<16x32xf32>,
    return
  }
  func.func @transform_0(%arg0: i32) -> (i32, i32) {
    %c0_i32 = arith.constant 0 : i32
    %c0_i32_0 = arith.constant 0 : i32
    return %arg0, %c0_i32 : i32, i32
  }
  func.func @transform_1(%arg0: i32) -> (i32, i32) {
    %c0_i32 = arith.constant 0 : i32
    %c0_i32_0 = arith.constant 0 : i32
    %c0_i32_1 = arith.constant 0 : i32
    return %c0_i32, %c0_i32_0 : i32, i32
  }
  func.func @transform_2(%arg0: i32) -> (i32, i32) {
    %c0_i32 = arith.constant 0 : i32
    %c0_i32_0 = arith.constant 0 : i32
    %c0_i32_1 = arith.constant 0 : i32
    return %c0_i32, %c0_i32_0 : i32, i32
  }
  func.func @transform_3(%arg0: i32) -> (i32, i32) {
    %c0_i32 = arith.constant 0 : i32
    %c0_i32_0 = arith.constant 0 : i32
    %c0_i32_1 = arith.constant 0 : i32
    return %c0_i32, %c0_i32_0 : i32, i32
  }
  func.func @transform_4(%arg0: i32) -> (i32, i32) {
    %c0_i32 = arith.constant 0 : i32
    %c0_i32_0 = arith.constant 0 : i32
    %c0_i32_1 = arith.constant 0 : i32
    return %c0_i32, %c0_i32_0 : i32, i32
  }
  func.func @transform_5(%arg0: i32) -> (i32, i32) {
    %c0_i32 = arith.constant 0 : i32
    %c0_i32_0 = arith.constant 0 : i32
    %c0_i32_1 = arith.constant 0 : i32
    return %c0_i32, %c0_i32_0 : i32, i32
  }
  func.func @transform_6(%arg0: i32) -> (i32, i32) {
    %c0_i32 = arith.constant 0 : i32
    %c0_i32_0 = arith.constant 0 : i32
    %c0_i32_1 = arith.constant 0 : i32
    return %c0_i32, %c0_i32_0 : i32, i32
  }
  func.func @transform_7(%arg0: i32) -> (i32, i32) {
    %c0_i32 = arith.constant 0 : i32
    %c0_i32_0 = arith.constant 0 : i32
    return %arg0, %c0_i32 : i32, i32
  }
}

</mosaic_0001>

<llo_original>
// kernel: pallas_decoder_block.5
$region0: #{pallas_decoder_block.5}
  #allocation0 [shape = 'u32[]', space=smem, size = 0x4, offset = 0x4, fixed_abs, tag = 'smem constant byte address 0x4 - core index']
  #allocation1 [shape = 'u32[144,128]{1,0:T(1,128)}', space=vmem, size = 0x12000, scoped, tag = 'internal scratch']
  %s0 = inlined_call_operand.vmem [shape: bf16[16,32], index: 0, kind: input, shape index: {}]
  %s1 = inlined_call_operand.vmem [shape: bf16[32,64], index: 1, kind: input, shape index: {}]
  %s2 = inlined_call_operand.vmem [shape: f32[1,64], index: 2, kind: input, shape index: {}]
  %s3 = inlined_call_operand.vmem [shape: bf16[64,32], index: 3, kind: input, shape index: {}]
  %s4 = inlined_call_operand.vmem [shape: f32[1,32], index: 4, kind: input, shape index: {}]
  %s5 = inlined_call_operand.vmem [shape: f32[1,32], index: 5, kind: input, shape index: {}]
  %s6 = inlined_call_operand.vmem [shape: f32[1,32], index: 6, kind: input, shape index: {}]
  %s7 = inlined_call_operand.hbm [shape: f32[16,32], index: 7, kind: output, shape index: {}]
  %s8 = sld [smem:[#allocation0]]
  $region38: #{pallas_decoder_block.5} parent=0
    _
  %s10 = ssub.s32 1, %s8
  %s11 = scalar_select 0, %s10, %s8
  $region1: #{pallas_decoder_block.5} parent=0
    #allocation2 [shape = 'u8[8192]{0}', space=vmem, size = 0x2000, scoped, tag = 'output window, operand 0, single buffered']
    #allocation3 [shape = 's32[1]{0}', space=sflag, size = 0x4, scoped, tag = 'scoped memory for pallas_decoder_block.5']
    %12 = vsyncpa [#allocation3], 0
    // Predicated region
    $region2: #{pallas_decoder_block.5} parent=1 // pred_check
      _
    $region3: #{pallas_decoder_block.5} parent=1 // pred_check_branch
      %14 = sbr.rel (0) target = $region5
    $region4: #{pallas_decoder_block.5} parent=1 // pred_region
      _
    $region5: #{pallas_decoder_block.5} parent=1 // pred_fallthru
      _
    // Predicated region
    $region6: #{pallas_decoder_block.5} parent=1 // pred_check
      _
    $region7: #{pallas_decoder_block.5} parent=1 // pred_check_branch
      %16 = sbr.rel (0) target = $region9
    $region8: #{pallas_decoder_block.5} parent=1 // pred_region
      _
    $region9: #{pallas_decoder_block.5} parent=1 // pred_fallthru
      _
    // Predicated region
    $region10: #{pallas_decoder_block.5} parent=1 // pred_check
      _
    $region11: #{pallas_decoder_block.5} parent=1 // pred_check_branch
      %18 = sbr.rel (0) target = $region13
    $region12: #{pallas_decoder_block.5} parent=1 // pred_region
      _
    $region13: #{pallas_decoder_block.5} parent=1 // pred_fallthru
      _
    // Predicated region
    $region14: #{pallas_decoder_block.5} parent=1 // pred_check
      _
    $region15: #{pallas_decoder_block.5} parent=1 // pred_check_branch
      %20 = sbr.rel (0) target = $region17
    $region16: #{pallas_decoder_block.5} parent=1 // pred_region
      _
    $region17: #{pallas_decoder_block.5} parent=1 // pred_fallthru
      _
    // Predicated region
    $region18: #{pallas_decoder_block.5} parent=1 // pred_check
      _
    $region19: #{pallas_decoder_block.5} parent=1 // pred_check_branch
      %22 = sbr.rel (0) target = $region21
    $region20: #{pallas_decoder_block.5} parent=1 // pred_region
      _
    $region21: #{pallas_decoder_block.5} parent=1 // pred_fallthru
      _
    // Predicated region
    $region22: #{pallas_decoder_block.5} parent=1 // pred_check
      _
    $region23: #{pallas_decoder_block.5} parent=1 // pred_check_branch
      %24 = sbr.rel (0) target = $region25
    $region24: #{pallas_decoder_block.5} parent=1 // pred_region
      _
    $region25: #{pallas_decoder_block.5} parent=1 // pred_fallthru
      _
    // Predicated region
    $region26: #{pallas_decoder_block.5} parent=1 // pred_check
      _
    $region27: #{pallas_decoder_block.5} parent=1 // pred_check_branch
      %26 = sbr.rel (0) target = $region29
    $region28: #{pallas_decoder_block.5} parent=1 // pred_region
      _
    $region29: #{pallas_decoder_block.5} parent=1 // pred_fallthru
      _
    %v28 = vld [vmem:[%s0] sm:$0xf]
    %v29 = vld [vmem:[%s0 + $0x4] sm:$0xf]
    %v30 = vld [vmem:[%s1] sm:$0xf]
    %v31 = vld [vmem:[%s1 + $0x4] sm:$0xf]
    %v32 = vld [vmem:[%s1 + $0x8] sm:$0xf]
    %v33 = vld [vmem:[%s1 + $0xc] sm:$0xf]
    %v34 = vld [vmem:[%s2] sm:$0x1]
    %v36 = vlaneseq
    %v37 = vshrl.u32 %v36, 7
    %v38 = vsub.s32 0, %v37
    %v39 = vrot.slane %v34, %v38
    %v43 = vunpack.c.l.b16 %v28
    %v44 = vunpack.c.l.b16 %v29
    %v45 = vpack.c.b16 %v44, %v43
    %v50 = vunpack.c.l.b16 %v30
    %v51 = vunpack.c.l.b16 %v31
    %v52 = vunpack.c.l.b16 %v32
    %v53 = vunpack.c.l.b16 %v33
    %v54 = vpack.c.b16 %v51, %v50
    %v55 = vpack.c.b16 %v53, %v52
    %vm58 = vcmask 261120
    %v60 = vsel %vm58, %v45, 0
    %62 = vmatprep.subr.bf16.mxu0 0
    %63 = vmatpush1.bf16.msra.mxu0 %v54
    %64 = vmatprep.subr.bf16.mxu0 0
    %65 = vmatpush1.bf16.msra.mxu0 %v55
    %66 = vmatprep.subr.bf16.mxu0 0
    %67 = vmatpush1.bf16.msra.mxu0 0
    %68 = vmatprep.subr.bf16.mxu0 0
    %69 = vmatpush1.bf16.msra.mxu0 0
    %70 = vmatprep.subr.bf16.mxu0 0
    %71 = vmatpush1.bf16.msra.mxu0 0
    %72 = vmatprep.subr.bf16.mxu0 0
    %73 = vmatpush1.bf16.msra.mxu0 0
    %74 = vmatprep.subr.bf16.mxu0 0
    %75 = vmatpush1.bf16.msra.mxu0 0
    %76 = vmatprep.subr.bf16.mxu0 0
    %77 = vmatpush1.bf16.msra.mxu0 0
    %78 = vmatprep.subr.bf16.mxu0 0
    %79 = vmatpush1.bf16.msra.mxu0 0
    %80 = vmatprep.subr.bf16.mxu0 0
    %81 = vmatpush1.bf16.msra.mxu0 0
    %82 = vmatprep.subr.bf16.mxu0 0
    %83 = vmatpush1.bf16.msra.mxu0 0
    %84 = vmatprep.subr.bf16.mxu0 0
    %85 = vmatpush1.bf16.msra.mxu0 0
    %86 = vmatprep.subr.bf16.mxu0 0
    %87 = vmatpush1.bf16.msra.mxu0 0
    %88 = vmatprep.subr.bf16.mxu0 0
    %89 = vmatpush1.bf16.msra.mxu0 0
    %90 = vmatprep.subr.bf16.mxu0 0
    %91 = vmatpush1.bf16.msra.mxu0 0
    %92 = vmatprep.subr.bf16.mxu0 0
    %93 = vmatpush1.bf16.msra.mxu0 0
    %94 = vmatprep.mubr.bf16.mxu0 0
    %95 = vmatmul.mubr.bf16.gmra.mrb[0].mxu0 %v60
    %v96 = vpop.f32.mrb[0].mxu0
    %v97 = vadd.f32 %v39, %v96
    %v98 = vpop.f32.mrb[0].mxu0
    %v99 = vpop.f32.mrb[0].mxu0
    %v100 = vadd.f32 %v39, %v99
    %v101 = vpop.f32.mrb[0].mxu0
    %102 = vdwg.mxu0
    %v103 = vmax.f32 %v97, 0.0
    %v104 = vmax.f32 %v100, 0.0
    %v105 = vpack.c.bf16 %v104, %v103
    %v106 = vld [vmem:[%s3] sm:$0xf]
    %v107 = vld [vmem:[%s3 + $0x4] sm:$0xf]
    %v108 = vld [vmem:[%s3 + $0x8] sm:$0xf]
    %v109 = vld [vmem:[%s3 + $0xc] sm:$0xf]
    %v110 = vld [vmem:[%s3 + $0x10] sm:$0xf]
    %v111 = vld [vmem:[%s3 + $0x14] sm:$0xf]
    %v112 = vld [vmem:[%s3 + $0x18] sm:$0xf]
    %v113 = vld [vmem:[%s3 + $0x1c] sm:$0xf]
    %v114 = vld [vmem:[%s4] sm:$0x1]
    %v116 = vlaneseq
    %v117 = vshrl.u32 %v116, 7
    %v118 = vsub.s32 0, %v117
    %v119 = vrot.slane %v114, %v118
    %v129 = vunpack.c.l.b16 %v106
    %v130 = vunpack.c.l.b16 %v107
    %v131 = vunpack.c.l.b16 %v108
    %v132 = vunpack.c.l.b16 %v109
    %v133 = vunpack.c.l.b16 %v110
    %v134 = vunpack.c.l.b16 %v111
    %v135 = vunpack.c.l.b16 %v112
    %v136 = vunpack.c.l.b16 %v113
    %v137 = vpack.c.b16 %v130, %v129
    %v138 = vpack.c.b16 %v132, %v131
    %v139 = vpack.c.b16 %v134, %v133
    %v140 = vpack.c.b16 %v136, %v135
    %vm145 = vcmask 523264
    %v147 = vsel %vm145, %v105, 0
    %149 = vmatprep.subr.bf16.mxu0 0
    %150 = vmatpush1.bf16.msra.mxu0 %v137
    %151 = vmatprep.subr.bf16.mxu0 0
    %152 = vmatpush1.bf16.msra.mxu0 %v138
    %153 = vmatprep.subr.bf16.mxu0 0
    %154 = vmatpush1.bf16.msra.mxu0 %v139
    %155 = vmatprep.subr.bf16.mxu0 0
    %156 = vmatpush1.bf16.msra.mxu0 %v140
    %157 = vmatprep.subr.bf16.mxu0 0
    %158 = vmatpush1.bf16.msra.mxu0 0
    %159 = vmatprep.subr.bf16.mxu0 0
    %160 = vmatpush1.bf16.msra.mxu0 0
    %161 = vmatprep.subr.bf16.mxu0 0
    %162 = vmatpush1.bf16.msra.mxu0 0
    %163 = vmatprep.subr.bf16.mxu0 0
    %164 = vmatpush1.bf16.msra.mxu0 0
    %165 = vmatprep.subr.bf16.mxu0 0
    %166 = vmatpush1.bf16.msra.mxu0 0
    %167 = vmatprep.subr.bf16.mxu0 0
    %168 = vmatpush1.bf16.msra.mxu0 0
    %169 = vmatprep.subr.bf16.mxu0 0
    %170 = vmatpush1.bf16.msra.mxu0 0
    %171 = vmatprep.subr.bf16.mxu0 0
    %172 = vmatpush1.bf16.msra.mxu0 0
    %173 = vmatprep.subr.bf16.mxu0 0
    %174 = vmatpush1.bf16.msra.mxu0 0
    %175 = vmatprep.subr.bf16.mxu0 0
    %176 = vmatpush1.bf16.msra.mxu0 0
    %177 = vmatprep.subr.bf16.mxu0 0
    %178 = vmatpush1.bf16.msra.mxu0 0
    %179 = vmatprep.subr.bf16.mxu0 0
    %180 = vmatpush1.bf16.msra.mxu0 0
    %181 = vmatprep.mubr.bf16.mxu0 0
    %182 = vmatmul.mubr.bf16.gmra.mrb[0].mxu0 %v147
    %v183 = vpop.f32.mrb[0].mxu0
    %v184 = vadd.f32 %v119, %v183
    %v185 = vpop.f32.mrb[0].mxu0
    %v186 = vpop.f32.mrb[0].mxu0
    %v187 = vadd.f32 %v119, %v186
    %v188 = vpop.f32.mrb[0].mxu0
    %189 = vdwg.mxu0
    %v190 = vunpack.c.l.bf16 %v28
    %v191 = vunpack.c.l.bf16 %v29
    %v192 = vadd.f32 %v184, %v190
    %v193 = vadd.f32 %v187, %v191
    %v194 = vld [vmem:[%s5] sm:$0x1]
    %v195 = vld [vmem:[%s6] sm:$0x1]
    %v196 = vsel %vm58, %v192, 0.0
    %197 = vadd.xlane.f32.xlu0 %v196
    %v198 = vpop.xlane.xlu0 %197
    %v199 = vsel %vm58, %v193, 0.0
    %200 = vadd.xlane.f32.xlu0 %v199
    %v201 = vpop.xlane.xlu0 %200
    %v202 = vrcp.pop 32.0
    %v203 = vmul.f32 %v198, %v202
    %v204 = vmul.f32 %v201, %v202
    %v205 = vsub.f32 %v192, %v203
    %v206 = vsub.f32 %v193, %v204
    %v207 = vmul.f32 %v205, %v205
    %v208 = vmul.f32 %v206, %v206
    %v209 = vsel %vm58, %v207, 0.0
    %210 = vadd.xlane.f32.xlu0 %v209
    %v211 = vpop.xlane.xlu0 %210
    %v212 = vsel %vm58, %v208, 0.0
    %213 = vadd.xlane.f32.xlu0 %v212
    %v214 = vpop.xlane.xlu0 %213
    %v215 = vmul.f32 %v211, %v202
    %v216 = vmul.f32 %v214, %v202
    %v217 = vadd.f32 %v215, 1e-05
    %v218 = vadd.f32 %v216, 1e-05
    %v219 = vrsqrt.pop %v217
    %v220 = vrsqrt.pop %v218
    %v221 = vmul.f32 %v205, %v219
    %v222 = vmul.f32 %v206, %v220
    %v224 = vlaneseq
    %v225 = vshrl.u32 %v224, 7
    %v226 = vsub.s32 0, %v225
    %v227 = vrot.slane %v194, %v226
    %v229 = vmul.f32 %v221, %v227
    %v230 = vmul.f32 %v222, %v227
    %v232 = vlaneseq
    %v233 = vshrl.u32 %v232, 7
    %v234 = vsub.s32 0, %v233
    %v235 = vrot.slane %v195, %v234
    %v237 = vadd.f32 %v229, %v235
    %v238 = vadd.f32 %v230, %v235
    %239 = vst.msk [vmem:[#allocation2] sm:$0xff] %vm58, %v237
    %240 = vst.msk [vmem:[#allocation2 + $0x8] sm:$0xff] %vm58, %v238
    // Predicated region
    $region30: #{pallas_decoder_block.5} parent=1 // pred_check
      _
    $region31: #{pallas_decoder_block.5} parent=1 // pred_check_branch
      %242 = sbr.rel (0) target = $region33
    $region32: #{pallas_decoder_block.5} parent=1 // pred_region
      %s244 = ssub.s32 256, 256
      %245 = vsyncadd [#allocation3], %s244
      %s246 = sshll.u32 [#allocation2], 4
      %s247 = int_to_ptr.vmem [resolvable:$true] %s246
      %252 = dma.vmem_to_hbm [thread:$0]  %s247, 256, %s7, [#allocation3], 128, 128, 8
    $region33: #{pallas_decoder_block.5} parent=1 // pred_fallthru
      _
    // Predicated region
    $region34: #{pallas_decoder_block.5} parent=1 // pred_check
      _
    $region35: #{pallas_decoder_block.5} parent=1 // pred_check_branch
      %254 = sbr.rel (0) target = $region37
    $region36: #{pallas_decoder_block.5} parent=1 // pred_region
      %255 = dma.done [#allocation3], 256
    $region37: #{pallas_decoder_block.5} parent=1 // pred_fallthru
      _
    %256 = vsyncpa [#allocation3], 1

// kernel: pallas_decoder_block.3
$region0: #{pallas_decoder_block.3}
  #allocation0 [shape = 'u32[]', space=smem, size = 0x4, offset = 0x4, fixed_abs, tag = 'smem constant byte address 0x4 - core index']
  #allocation1 [shape = 'u32[144,128]{1,0:T(1,128)}', space=vmem, size = 0x12000, scoped, tag = 'internal scratch']
  %s0 = inlined_call_operand.vmem [shape: f32[2,8,32], index: 0, kind: input, shape index: {}]
  %s1 = inlined_call_operand.vmem [shape: s8[2,8,8], index: 1, kind: input, shape index: {}]
  %s2 = inlined_call_operand.vmem [shape: bf16[32,32], index: 2, kind: input, shape index: {}]
  %s3 = inlined_call_operand.hbm [shape: f32[1,32], index: 3, kind: input, shape index: {}]
  %s4 = inlined_call_operand.vmem [shape: bf16[32,32], index: 4, kind: input, shape index: {}]
  %s5 = inlined_call_operand.hbm [shape: f32[1,32], index: 5, kind: input, shape index: {}]
  %s6 = inlined_call_operand.vmem [shape: bf16[32,32], index: 6, kind: input, shape index: {}]
  %s7 = inlined_call_operand.hbm [shape: f32[1,32], index: 7, kind: input, shape index: {}]
  %s8 = inlined_call_operand.vmem [shape: bf16[32,32], index: 8, kind: input, shape index: {}]
  %s9 = inlined_call_operand.hbm [shape: f32[1,32], index: 9, kind: input, shape index: {}]
  %s10 = inlined_call_operand.hbm [shape: f32[1,32], index: 10, kind: input, shape index: {}]
  %s11 = inlined_call_operand.hbm [shape: f32[1,32], index: 11, kind: input, shape index: {}]
  %s12 = inlined_call_operand.vmem [shape: bf16[2,8,32], index: 12, kind: output, shape index: {}]
  %s13 = sld [smem:[#allocation0]]
  $region105: #{pallas_decoder_block.3} parent=0
    _
  %s15 = ssub.s32 1, %s13
  %s16 = scalar_select 0, %s15, %s13
  $region1: #{pallas_decoder_block.3} parent=0
    #allocation2 [shape = 'u8[512]{0}', space=vmem, size = 0x400, scoped, tag = 'input window, operand 3, single buffered']
    #allocation3 [shape = 's32[2]{0}', space=sflag, size = 0x8, scoped, tag = 'scoped memory for pallas_decoder_block.3']
    #allocation4 [shape = 'u8[512]{0}', space=vmem, size = 0x400, scoped, tag = 'input window, operand 5, single buffered']
    #allocation5 [shape = 's32[1]{0}', space=sflag, size = 0x4, scoped, tag = 'scoped memory for pallas_decoder_block.3']
    #allocation6 [shape = 'u8[512]{0}', space=vmem, size = 0x400, scoped, tag = 'input window, operand 7, single buffered']
    #allocation7 [shape = 'u8[512]{0}', space=vmem, size = 0x400, scoped, tag = 'input window, operand 9, single buffered']
    #allocation8 [shape = 's32[1]{0}', space=sflag, size = 0x4, scoped, tag = 'scoped memory for pallas_decoder_block.3']
    #allocation9 [shape = 'u8[512]{0}', space=vmem, size = 0x400, scoped, tag = 'input window, operand 10, single buffered']
    #allocation10 [shape = 'u8[512]{0}', space=vmem, size = 0x400, scoped, tag = 'input window, operand 11, single buffered']
    #allocation11 [shape = 's32[1]{0}', space=sflag, size = 0x4, scoped, tag = 'scoped memory for pallas_decoder_block.3']
    %17 = vsyncpa [#allocation3], 0
    %18 = vsyncpa [#allocation5], 0
    %19 = vsyncpa [#allocation8], 0
    %20 = vsyncpa [#allocation11], 0
    loop: start=0, step=1, limit=4
    $region2: #{pallas_decoder_block.3} parent=1 // loop_pre_header
      _
    $region3: #{pallas_decoder_block.3} parent=1 // loop_header
      %s22 = sphi 0, %s26
      %p23 = scmp.ge.s32.totalorder %s22, 4
      %s32 = sphi 0, %s34
      %s35 = sphi 0, %s32
      %s36 = sphi 0, %s35
      %s52 = sphi 0, %s36
      %s58 = sphi 0, %s60
      %s61 = sphi 0, %s58
      %s62 = sphi 0, %s61
      %s78 = sphi 0, %s62
      %s82 = sphi 0, %s82
      %s84 = sphi 0, %s82
      %s85 = sphi 0, %s84
      %s99 = sphi 0, %s85
      %s103 = sphi 0, %s103
      %s105 = sphi 0, %s103
      %s106 = sphi 0, %s105
      %s120 = sphi 0, %s106
      %s124 = sphi 0, %s124
      %s126 = sphi 0, %s124
      %s127 = sphi 0, %s126
      %s141 = sphi 0, %s127
      %s145 = sphi 0, %s145
      %s147 = sphi 0, %s145
      %s148 = sphi 0, %s147
      %s162 = sphi 0, %s148
      %s166 = sphi 0, %s166
      %s168 = sphi 0, %s166
      %s169 = sphi 0, %s168
      %s183 = sphi 0, %s169
      %s187 = sphi 0, %s187
      %s189 = sphi 0, %s187
      %s190 = sphi 0, %s189
      %s204 = sphi 0, %s190
      %s208 = sphi 0, %s208
      %s210 = sphi 0, %s208
      %s211 = sphi 0, %s210
      %s225 = sphi 0, %s211
      %s229 = sphi 0, %s229
      %s231 = sphi 0, %s229
      %s232 = sphi 0, %s231
      %s246 = sphi 0, %s232
      %s250 = sphi 0, %s250
      %s252 = sphi 0, %s250
      %s253 = sphi 0, %s252
      %s267 = sphi 0, %s253
      %s271 = sphi 0, %s271
      %s273 = sphi 0, %s271
      %s274 = sphi 0, %s273
      %s288 = sphi 0, %s274
      %s294 = sphi 0, %s296
      %s297 = sphi 0, %s294
      %s298 = sphi 0, %s297
      %s314 = sphi 0, %s298
    $region4: #{pallas_decoder_block.3} parent=1 // loop_header_branch
      %25 = sbr.rel (%p23) target = $region8
    $region5: #{pallas_decoder_block.3} parent=1 // loop_body
      %s27 = ssub.s32 %s22, 1
      %s28 = ssub.s32 %s22, 2
      %s29 = sadd.s32 %s22, 1
      %s30 = ssub.s32 %s22, %s29
      %p31 = scmp.eq.s32.totalorder %s30, 0
      %s33 = sadd.s32 %s32, 1
      %s34 = scalar_select %p31, %s32, %s33
      %p37 = pneg %p31
      %p38 = scmp.eq.s32.totalorder %s22, 1
      %p39 = por %p37, %p38
      %p40 = scmp.ne.s32.totalorder %s32, %s35
      %p41 = scmp.eq.s32.totalorder %s22, 0
      %p42 = por %p40, %p41
      %p43 = scmp.ne.s32.totalorder %s32, %s35
      %p44 = scmp.eq.s32.totalorder %s27, 1
      %p45 = por %p43, %p44
      %p46 = scmp.ne.s32.totalorder %s35, %s36
      %p47 = scmp.eq.s32.totalorder %s27, 0
      %p48 = por %p46, %p47
      %p49 = scmp.ne.s32.totalorder %s35, %s36
      %p50 = scmp.eq.s32.totalorder %s28, 1
      %p51 = por %p49, %p50
      %p53 = scmp.ne.s32.totalorder %s36, %s52
      %p54 = scmp.eq.s32.totalorder %s28, 0
      %p55 = por %p53, %p54
      %s56 = ssub.s32 %s22, %s29
      %p57 = scmp.eq.s32.totalorder %s56, 0
      %s59 = sadd.s32 %s58, 1
      %s60 = scalar_select %p57, %s58, %s59
      %p63 = pneg %p57
      %p64 = scmp.eq.s32.totalorder %s22, 1
      %p65 = por %p63, %p64
      %p66 = scmp.ne.s32.totalorder %s58, %s61
      %p67 = scmp.eq.s32.totalorder %s22, 0
      %p68 = por %p66, %p67
      %p69 = scmp.ne.s32.totalorder %s58, %s61
      %p70 = scmp.eq.s32.totalorder %s27, 1
      %p71 = por %p69, %p70
      %p72 = scmp.ne.s32.totalorder %s61, %s62
      %p73 = scmp.eq.s32.totalorder %s27, 0
      %p74 = por %p72, %p73
      %p75 = scmp.ne.s32.totalorder %s61, %s62
      %p76 = scmp.eq.s32.totalorder %s28, 1
      %p77 = por %p75, %p76
      %p79 = scmp.ne.s32.totalorder %s62, %s78
      %p80 = scmp.eq.s32.totalorder %s28, 0
      %p81 = por %p79, %p80
      %s83 = sadd.s32 %s82, 1
      %p86 = scmp.eq.s32.totalorder %s22, 1
      %p87 = scmp.ne.s32.totalorder %s82, %s84
      %p88 = scmp.eq.s32.totalorder %s22, 0
      %p89 = por %p87, %p88
      %p90 = scmp.ne.s32.totalorder %s82, %s84
      %p91 = scmp.eq.s32.totalorder %s27, 1
      %p92 = por %p90, %p91
      %p93 = scmp.ne.s32.totalorder %s84, %s85
      %p94 = scmp.eq.s32.totalorder %s27, 0
      %p95 = por %p93, %p94
      %p96 = scmp.ne.s32.totalorder %s84, %s85
      %p97 = scmp.eq.s32.totalorder %s28, 1
      %p98 = por %p96, %p97
      %p100 = scmp.ne.s32.totalorder %s85, %s99
      %p101 = scmp.eq.s32.totalorder %s28, 0
      %p102 = por %p100, %p101
      %s104 = sadd.s32 %s103, 1
      %p107 = scmp.eq.s32.totalorder %s22, 1
      %p108 = scmp.ne.s32.totalorder %s103, %s105
      %p109 = scmp.eq.s32.totalorder %s22, 0
      %p110 = por %p108, %p109
      %p111 = scmp.ne.s32.totalorder %s103, %s105
      %p112 = scmp.eq.s32.totalorder %s27, 1
      %p113 = por %p111, %p112
      %p114 = scmp.ne.s32.totalorder %s105, %s106
      %p115 = scmp.eq.s32.totalorder %s27, 0
      %p116 = por %p114, %p115
      %p117 = scmp.ne.s32.totalorder %s105, %s106
      %p118 = scmp.eq.s32.totalorder %s28, 1
      %p119 = por %p117, %p118
      %p121 = scmp.ne.s32.totalorder %s106, %s120
      %p122 = scmp.eq.s32.totalorder %s28, 0
      %p123 = por %p121, %p122
      %s125 = sadd.s32 %s124, 1
      %p128 = scmp.eq.s32.totalorder %s22, 1
      %p129 = scmp.ne.s32.totalorder %s124, %s126
      %p130 = scmp.eq.s32.totalorder %s22, 0
      %p131 = por %p129, %p130
      %p132 = scmp.ne.s32.totalorder %s124, %s126
      %p133 = scmp.eq.s32.totalorder %s27, 1
      %p134 = por %p132, %p133
      %p135 = scmp.ne.s32.totalorder %s126, %s127
      %p136 = scmp.eq.s32.totalorder %s27, 0
      %p137 = por %p135, %p136
      %p138 = scmp.ne.s32.totalorder %s126, %s127
      %p139 = scmp.eq.s32.totalorder %s28, 1
      %p140 = por %p138, %p139
      %p142 = scmp.ne.s32.totalorder %s127, %s141
      %p143 = scmp.eq.s32.totalorder %s28, 0
      %p144 = por %p142, %p143
      %s146 = sadd.s32 %s145, 1
      %p149 = scmp.eq.s32.totalorder %s22, 1
      %p150 = scmp.ne.s32.totalorder %s145, %s147
      %p151 = scmp.eq.s32.totalorder %s22, 0
      %p152 = por %p150, %p151
      %p153 = scmp.ne.s32.totalorder %s145, %s147
      %p154 = scmp.eq.s32.totalorder %s27, 1
      %p155 = por %p153, %p154
      %p156 = scmp.ne.s32.totalorder %s147, %s148
      %p157 = scmp.eq.s32.totalorder %s27, 0
      %p158 = por %p156, %p157
      %p159 = scmp.ne.s32.totalorder %s147, %s148
      %p160 = scmp.eq.s32.totalorder %s28, 1
      %p161 = por %p159, %p160
      %p163 = scmp.ne.s32.totalorder %s148, %s162
      %p164 = scmp.eq.s32.totalorder %s28, 0
      %p165 = por %p163, %p164
      %s167 = sadd.s32 %s166, 1
      %p170 = scmp.eq.s32.totalorder %s22, 1
      %p171 = scmp.ne.s32.totalorder %s166, %s168
      %p172 = scmp.eq.s32.totalorder %s22, 0
      %p173 = por %p171, %p172
      %p174 = scmp.ne.s32.totalorder %s166, %s168
      %p175 = scmp.eq.s32.totalorder %s27, 1
      %p176 = por %p174, %p175
      %p177 = scmp.ne.s32.totalorder %s168, %s169
      %p178 = scmp.eq.s32.totalorder %s27, 0
      %p179 = por %p177, %p178
      %p180 = scmp.ne.s32.totalorder %s168, %s169
      %p181 = scmp.eq.s32.totalorder %s28, 1
      %p182 = por %p180, %p181
      %p184 = scmp.ne.s32.totalorder %s169, %s183
      %p185 = scmp.eq.s32.totalorder %s28, 0
      %p186 = por %p184, %p185
      %s188 = sadd.s32 %s187, 1
      %p191 = scmp.eq.s32.totalorder %s22, 1
      %p192 = scmp.ne.s32.totalorder %s187, %s189
      %p193 = scmp.eq.s32.totalorder %s22, 0
      %p194 = por %p192, %p193
      %p195 = scmp.ne.s32.totalorder %s187, %s189
      %p196 = scmp.eq.s32.totalorder %s27, 1
      %p197 = por %p195, %p196
      %p198 = scmp.ne.s32.totalorder %s189, %s190
      %p199 = scmp.eq.s32.totalorder %s27, 0
      %p200 = por %p198, %p199
      %p201 = scmp.ne.s32.totalorder %s189, %s190
      %p202 = scmp.eq.s32.totalorder %s28, 1
      %p203 = por %p201, %p202
      %p205 = scmp.ne.s32.totalorder %s190, %s204
      %p206 = scmp.eq.s32.totalorder %s28, 0
      %p207 = por %p205, %p206
      %s209 = sadd.s32 %s208, 1
      %p212 = scmp.eq.s32.totalorder %s22, 1
      %p213 = scmp.ne.s32.totalorder %s208, %s210
      %p214 = scmp.eq.s32.totalorder %s22, 0
      %p215 = por %p213, %p214
      %p216 = scmp.ne.s32.totalorder %s208, %s210
      %p217 = scmp.eq.s32.totalorder %s27, 1
      %p218 = por %p216, %p217
      %p219 = scmp.ne.s32.totalorder %s210, %s211
      %p220 = scmp.eq.s32.totalorder %s27, 0
      %p221 = por %p219, %p220
      %p222 = scmp.ne.s32.totalorder %s210, %s211
      %p223 = scmp.eq.s32.totalorder %s28, 1
      %p224 = por %p222, %p223
      %p226 = scmp.ne.s32.totalorder %s211, %s225
      %p227 = scmp.eq.s32.totalorder %s28, 0
      %p228 = por %p226, %p227
      %s230 = sadd.s32 %s229, 1
      %p233 = scmp.eq.s32.totalorder %s22, 1
      %p234 = scmp.ne.s32.totalorder %s229, %s231
      %p235 = scmp.eq.s32.totalorder %s22, 0
      %p236 = por %p234, %p235
      %p237 = scmp.ne.s32.totalorder %s229, %s231
      %p238 = scmp.eq.s32.totalorder %s27, 1
      %p239 = por %p237, %p238
      %p240 = scmp.ne.s32.totalorder %s231, %s232
      %p241 = scmp.eq.s32.totalorder %s27, 0
      %p242 = por %p240, %p241
      %p243 = scmp.ne.s32.totalorder %s231, %s232
      %p244 = scmp.eq.s32.totalorder %s28, 1
      %p245 = por %p243, %p244
      %p247 = scmp.ne.s32.totalorder %s232, %s246
      %p248 = scmp.eq.s32.totalorder %s28, 0
      %p249 = por %p247, %p248
      %s251 = sadd.s32 %s250, 1
      %p254 = scmp.eq.s32.totalorder %s22, 1
      %p255 = scmp.ne.s32.totalorder %s250, %s252
      %p256 = scmp.eq.s32.totalorder %s22, 0
      %p257 = por %p255, %p256
      %p258 = scmp.ne.s32.totalorder %s250, %s252
      %p259 = scmp.eq.s32.totalorder %s27, 1
      %p260 = por %p258, %p259
      %p261 = scmp.ne.s32.totalorder %s252, %s253
      %p262 = scmp.eq.s32.totalorder %s27, 0
      %p263 = por %p261, %p262
      %p264 = scmp.ne.s32.totalorder %s252, %s253
      %p265 = scmp.eq.s32.totalorder %s28, 1
      %p266 = por %p264, %p265
      %p268 = scmp.ne.s32.totalorder %s253, %s267
      %p269 = scmp.eq.s32.totalorder %s28, 0
      %p270 = por %p268, %p269
      %s272 = sadd.s32 %s271, 1
      %p275 = scmp.eq.s32.totalorder %s22, 1
      %p276 = scmp.ne.s32.totalorder %s271, %s273
      %p277 = scmp.eq.s32.totalorder %s22, 0
      %p278 = por %p276, %p277
      %p279 = scmp.ne.s32.totalorder %s271, %s273
      %p280 = scmp.eq.s32.totalorder %s27, 1
      %p281 = por %p279, %p280
      %p282 = scmp.ne.s32.totalorder %s273, %s274
      %p283 = scmp.eq.s32.totalorder %s27, 0
      %p284 = por %p282, %p283
      %p285 = scmp.ne.s32.totalorder %s273, %s274
      %p286 = scmp.eq.s32.totalorder %s28, 1
      %p287 = por %p285, %p286
      %p289 = scmp.ne.s32.totalorder %s274, %s288
      %p290 = scmp.eq.s32.totalorder %s28, 0
      %p291 = por %p289, %p290
      %s292 = ssub.s32 %s22, %s29
      %p293 = scmp.eq.s32.totalorder %s292, 0
      %s295 = sadd.s32 %s294, 1
      %s296 = scalar_select %p293, %s294, %s295
      %p299 = pneg %p293
      %p300 = scmp.eq.s32.totalorder %s22, 1
      %p301 = por %p299, %p300
      %p302 = scmp.ne.s32.totalorder %s294, %s297
      %p303 = scmp.eq.s32.totalorder %s22, 0
      %p304 = por %p302, %p303
      %p305 = scmp.ne.s32.totalorder %s294, %s297
      %p306 = scmp.eq.s32.totalorder %s27, 1
      %p307 = por %p305, %p306
      %p308 = scmp.ne.s32.totalorder %s297, %s298
      %p309 = scmp.eq.s32.totalorder %s27, 0
      %p310 = por %p308, %p309
      %p311 = scmp.ne.s32.totalorder %s297, %s298
      %p312 = scmp.eq.s32.totalorder %s28, 1
      %p313 = por %p311, %p312
      %p315 = scmp.ne.s32.totalorder %s298, %s314
      %p316 = scmp.eq.s32.totalorder %s28, 0
      %p317 = por %p315, %p316
      %p318 = scmp.le.s32.totalorder 1, %s22
      %p319 = scmp.lt.s32.totalorder %s22, 3
      %p320 = pnand %p318, %p319
      %p321 = pneg %p320
      // Predicated region
      $region9: #{pallas_decoder_block.3} parent=5 // pred_check
        _
      $region10: #{pallas_decoder_block.3} parent=5 // pred_check_branch
        %323 = sbr.rel (%p320) target = $region12
      $region11: #{pallas_decoder_block.3} parent=5 // pred_region
        %s324 = ssub.s32 %s22, 1
        // Predicated region
        $region13: #{pallas_decoder_block.3} parent=11 // pred_check
          %p325 = pneg %p95
        $region14: #{pallas_decoder_block.3} parent=11 // pred_check_branch
          %327 = sbr.rel (%p325) target = $region16
        $region15: #{pallas_decoder_block.3} parent=11 // pred_region
          _
        $region16: #{pallas_decoder_block.3} parent=11 // pred_fallthru
          _
        // Predicated region
        $region17: #{pallas_decoder_block.3} parent=11 // pred_check
          %p328 = pneg %p116
        $region18: #{pallas_decoder_block.3} parent=11 // pred_check_branch
          %330 = sbr.rel (%p328) target = $region20
        $region19: #{pallas_decoder_block.3} parent=11 // pred_region
          %s332 = ssub.s32 16, 16
          %333 = vsyncadd [#allocation3], %s332
          %s335 = sshll.u32 [#allocation2], 4
          %s336 = int_to_ptr.vmem [resolvable:$true] %s335
          %338 = dma.hbm_to_vmem [thread:$0]  %s3, 16, %s336, [#allocation3]
        $region20: #{pallas_decoder_block.3} parent=11 // pred_fallthru
          _
        // Predicated region
        $region21: #{pallas_decoder_block.3} parent=11 // pred_check
          %p339 = pneg %p137
        $region22: #{pallas_decoder_block.3} parent=11 // pred_check_branch
          %341 = sbr.rel (%p339) target = $region24
        $region23: #{pallas_decoder_block.3} parent=11 // pred_region
          _
        $region24: #{pallas_decoder_block.3} parent=11 // pred_fallthru
          _
        // Predicated region
        $region25: #{pallas_decoder_block.3} parent=11 // pred_check
          %p342 = pneg %p158
        $region26: #{pallas_decoder_block.3} parent=11 // pred_check_branch
          %344 = sbr.rel (%p342) target = $region28
        $region27: #{pallas_decoder_block.3} parent=11 // pred_region
          %s346 = ssub.s32 16, 16
          %347 = vsyncadd [#allocation5], %s346
          %s349 = sshll.u32 [#allocation4], 4
          %s350 = int_to_ptr.vmem [resolvable:$true] %s349
          %352 = dma.hbm_to_vmem [thread:$0]  %s5, 16, %s350, [#allocation5]
        $region28: #{pallas_decoder_block.3} parent=11 // pred_fallthru
          _
        // Predicated region
        $region29: #{pallas_decoder_block.3} parent=11 // pred_check
          %p353 = pneg %p179
        $region30: #{pallas_decoder_block.3} parent=11 // pred_check_branch
          %355 = sbr.rel (%p353) target = $region32
        $region31: #{pallas_decoder_block.3} parent=11 // pred_region
          _
        $region32: #{pallas_decoder_block.3} parent=11 // pred_fallthru
          _
        // Predicated region
        $region33: #{pallas_decoder_block.3} parent=11 // pred_check
          %p356 = pneg %p200
        $region34: #{pallas_decoder_block.3} parent=11 // pred_check_branch
          %358 = sbr.rel (%p356) target = $region36
        $region35: #{pallas_decoder_block.3} parent=11 // pred_region
          %s360 = ssub.s32 16, 16
          %361 = vsyncadd [#allocation5], %s360
          %s363 = sshll.u32 [#allocation6], 4
          %s364 = int_to_ptr.vmem [resolvable:$true] %s363
          %366 = dma.hbm_to_vmem [thread:$0]  %s7, 16, %s364, [#allocation5]
        $region36: #{pallas_decoder_block.3} parent=11 // pred_fallthru
          _
        // Predicated region
        $region37: #{pallas_decoder_block.3} parent=11 // pred_check
          %p367 = pneg %p221
        $region38: #{pallas_decoder_block.3} parent=11 // pred_check_branch
          %369 = sbr.rel (%p367) target = $region40
        $region39: #{pallas_decoder_block.3} parent=11 // pred_region
          _
        $region40: #{pallas_decoder_block.3} parent=11 // pred_fallthru
          _
        // Predicated region
        $region41: #{pallas_decoder_block.3} parent=11 // pred_check
          %p370 = pneg %p242
        $region42: #{pallas_decoder_block.3} parent=11 // pred_check_branch
          %372 = sbr.rel (%p370) target = $region44
        $region43: #{pallas_decoder_block.3} parent=11 // pred_region
          %s374 = ssub.s32 16, 16
          %375 = vsyncadd [#allocation8], %s374
          %s377 = sshll.u32 [#allocation7], 4
          %s378 = int_to_ptr.vmem [resolvable:$true] %s377
          %380 = dma.hbm_to_vmem [thread:$0]  %s9, 16, %s378, [#allocation8]
        $region44: #{pallas_decoder_block.3} parent=11 // pred_fallthru
          _
        // Predicated region
        $region45: #{pallas_decoder_block.3} parent=11 // pred_check
          %p381 = pneg %p263
        $region46: #{pallas_decoder_block.3} parent=11 // pred_check_branch
          %383 = sbr.rel (%p381) target = $region48
        $region47: #{pallas_decoder_block.3} parent=11 // pred_region
          %s385 = ssub.s32 16, 16
          %386 = vsyncadd [#allocation8], %s385
          %s388 = sshll.u32 [#allocation9], 4
          %s389 = int_to_ptr.vmem [resolvable:$true] %s388
          %391 = dma.hbm_to_vmem [thread:$0]  %s10, 16, %s389, [#allocation8]
        $region48: #{pallas_decoder_block.3} parent=11 // pred_fallthru
          _
        // Predicated region
        $region49: #{pallas_decoder_block.3} parent=11 // pred_check
          %p392 = pneg %p284
        $region50: #{pallas_decoder_block.3} parent=11 // pred_check_branch
          %394 = sbr.rel (%p392) target = $region52
        $region51: #{pallas_decoder_block.3} parent=11 // pred_region
          %s396 = ssub.s32 16, 16
          %397 = vsyncadd [#allocation11], %s396
          %s399 = sshll.u32 [#allocation10], 4
          %s400 = int_to_ptr.vmem [resolvable:$true] %s399
          %402 = dma.hbm_to_vmem [thread:$0]  %s11, 16, %s400, [#allocation11]
        $region52: #{pallas_decoder_block.3} parent=11 // pred_fallthru
          _
      $region12: #{pallas_decoder_block.3} parent=5 // pred_fallthru
        _
      %p403 = scmp.lt.s32.totalorder %s22, 2
      // Predicated region
      $region53: #{pallas_decoder_block.3} parent=5 // pred_check
        %p404 = pneg %p403
      $region54: #{pallas_decoder_block.3} parent=5 // pred_check_branch
        %406 = sbr.rel (%p404) target = $region56
      $region55: #{pallas_decoder_block.3} parent=5 // pred_region
        // Predicated region
        $region57: #{pallas_decoder_block.3} parent=55 // pred_check
          %p407 = pneg %p42
        $region58: #{pallas_decoder_block.3} parent=55 // pred_check_branch
          %409 = sbr.rel (%p407) target = $region60
        $region59: #{pallas_decoder_block.3} parent=55 // pred_region
          %p410 = scmp.lt.s32.totalorder %s22, 1
          %s411 = scalar_select %p410, %s22, 1
          %s412 = smul.addr %s411, 8
          %s413 = scalar_lea.vmem %s0, %s412
        $region60: #{pallas_decoder_block.3} parent=55 // pred_fallthru
          _
        // Predicated region
        $region61: #{pallas_decoder_block.3} parent=55 // pred_check
          %p414 = pneg %p68
        $region62: #{pallas_decoder_block.3} parent=55 // pred_check_branch
          %416 = sbr.rel (%p414) target = $region64
        $region63: #{pallas_decoder_block.3} parent=55 // pred_region
          %p417 = scmp.lt.s32.totalorder %s22, 1
          %s418 = scalar_select %p417, %s22, 1
          %s419 = smul.addr %s418, 2
          %s420 = scalar_lea.vmem %s1, %s419
        $region64: #{pallas_decoder_block.3} parent=55 // pred_fallthru
          _
      $region56: #{pallas_decoder_block.3} parent=5 // pred_fallthru
        _
      %p421 = scmp.le.s32.totalorder 1, %s22
      %p422 = scmp.lt.s32.totalorder %s22, 3
      %p423 = pnand %p421, %p422
      %p424 = pneg %p423
      // Predicated region
      $region65: #{pallas_decoder_block.3} parent=5 // pred_check
        _
      $region66: #{pallas_decoder_block.3} parent=5 // pred_check_branch
        %426 = sbr.rel (%p423) target = $region68
      $region67: #{pallas_decoder_block.3} parent=5 // pred_region
        %s427 = ssub.s32 %s22, 1
        // Predicated region
        $region69: #{pallas_decoder_block.3} parent=67 // pred_check
          %p428 = pneg %p116
        $region70: #{pallas_decoder_block.3} parent=67 // pred_check_branch
          %430 = sbr.rel (%p428) target = $region72
        $region71: #{pallas_decoder_block.3} parent=67 // pred_region
          %431 = dma.done [#allocation3], 16
        $region72: #{pallas_decoder_block.3} parent=67 // pred_fallthru
          _
        // Predicated region
        $region73: #{pallas_decoder_block.3} parent=67 // pred_check
          %p432 = pneg %p158
        $region74: #{pallas_decoder_block.3} parent=67 // pred_check_branch
          %434 = sbr.rel (%p432) target = $region76
        $region75: #{pallas_decoder_block.3} parent=67 // pred_region
          %435 = dma.done [#allocation5], 16
        $region76: #{pallas_decoder_block.3} parent=67 // pred_fallthru
          _
        // Predicated region
        $region77: #{pallas_decoder_block.3} parent=67 // pred_check
          %p436 = pneg %p200
        $region78: #{pallas_decoder_block.3} parent=67 // pred_check_branch
          %438 = sbr.rel (%p436) target = $region80
        $region79: #{pallas_decoder_block.3} parent=67 // pred_region
          %439 = dma.done [#allocation5], 16
        $region80: #{pallas_decoder_block.3} parent=67 // pred_fallthru
          _
        // Predicated region
        $region81: #{pallas_decoder_block.3} parent=67 // pred_check
          %p440 = pneg %p242
        $region82: #{pallas_decoder_block.3} parent=67 // pred_check_branch
          %442 = sbr.rel (%p440) target = $region84
        $region83: #{pallas_decoder_block.3} parent=67 // pred_region
          %443 = dma.done [#allocation8], 16
        $region84: #{pallas_decoder_block.3} parent=67 // pred_fallthru
          _
        // Predicated region
        $region85: #{pallas_decoder_block.3} parent=67 // pred_check
          %p444 = pneg %p263
        $region86: #{pallas_decoder_block.3} parent=67 // pred_check_branch
          %446 = sbr.rel (%p444) target = $region88
        $region87: #{pallas_decoder_block.3} parent=67 // pred_region
          %447 = dma.done [#allocation8], 16
        $region88: #{pallas_decoder_block.3} parent=67 // pred_fallthru
          _
        // Predicated region
        $region89: #{pallas_decoder_block.3} parent=67 // pred_check
          %p448 = pneg %p284
        $region90: #{pallas_decoder_block.3} parent=67 // pred_check_branch
          %450 = sbr.rel (%p448) target = $region92
        $region91: #{pallas_decoder_block.3} parent=67 // pred_region
          %451 = dma.done [#allocation11], 16
        $region92: #{pallas_decoder_block.3} parent=67 // pred_fallthru
          _
        %p452 = scmp.lt.s32.totalorder %s27, 1
        %s453 = scalar_select %p452, %s27, 1
        %s454 = smul.addr %s453, 8
        %s455 = scalar_lea.vmem %s0, %s454
        %p456 = pneg %p48
        %p457 = pneg %p45
        %p458 = scmp.lt.s32.totalorder %s27, 1
        %s459 = scalar_select %p458, %s27, 1
        %s460 = smul.addr %s459, 2
        %s461 = scalar_lea.vmem %s1, %s460
        %p462 = pneg %p74
        %p463 = pneg %p71
        %p464 = pneg %p95
        %p465 = pneg %p92
        %p466 = pneg %p116
        %p467 = pneg %p113
        %p468 = pneg %p137
        %p469 = pneg %p134
        %p470 = pneg %p158
        %p471 = pneg %p155
        %p472 = pneg %p179
        %p473 = pneg %p176
        %p474 = pneg %p200
        %p475 = pneg %p197
        %p476 = pneg %p221
        %p477 = pneg %p218
        %p478 = pneg %p242
        %p479 = pneg %p239
        %p480 = pneg %p263
        %p481 = pneg %p260
        %p482 = pneg %p284
        %p483 = pneg %p281
        %p484 = pneg %p310
        %p485 = pneg %p307
        %p486 = scmp.lt.s32.totalorder %s27, 1
        %s487 = scalar_select %p486, %s27, 1
        %s488 = smul.addr %s487, 4
        %s489 = scalar_lea.vmem %s12, %s488
        %p490 = scmp.lt.s32.totalorder %s27, 1
        %s491 = scalar_select %p490, %s27, 1
        %s492 = smul.addr %s491, 8
        %s493 = scalar_lea.vmem %s0, %s492
        %p494 = scmp.lt.s32.totalorder %s27, 1
        %s495 = scalar_select %p494, %s27, 1
        %s496 = smul.addr %s495, 2
        %s497 = scalar_lea.vmem %s1, %s496
        %p498 = scmp.lt.s32.totalorder %s27, 1
        %s499 = scalar_select %p498, %s27, 1
        %s500 = smul.addr %s499, 4
        %s501 = scalar_lea.vmem %s12, %s500
        %v503 = vld [vmem:[%s493] sm:$0xff]
        %v504 = vpack.c.bf16 %v503, %v503
        %v505 = vld [vmem:[%s2] sm:$0xf]
        %v506 = vld [vmem:[%s2 + $0x4] sm:$0xf]
        %v507 = vld [vmem:[%s2 + $0x8] sm:$0xf]
        %v508 = vld [vmem:[%s2 + $0xc] sm:$0xf]
        %v509 = vld [vmem:[#allocation2] sm:$0x1]
        %v511 = vlaneseq
        %v512 = vshrl.u32 %v511, 7
        %v513 = vsub.s32 0, %v512
        %v514 = vrot.slane %v509, %v513
        %v520 = vunpack.c.l.b16 %v505
        %v521 = vunpack.c.l.b16 %v506
        %v522 = vunpack.c.l.b16 %v507
        %v523 = vunpack.c.l.b16 %v508
        %v524 = vpack.c.b16 %v521, %v520
        %v525 = vpack.c.b16 %v523, %v522
        %vm528 = vcmask 261120
        %v530 = vsel %vm528, %v504, 0
        %532 = vmatprep.subr.bf16.mxu0 0
        %533 = vmatpush1.bf16.msra.mxu0 %v524
        %534 = vmatprep.subr.bf16.mxu0 0
        %535 = vmatpush1.bf16.msra.mxu0 %v525
        %536 = vmatprep.subr.bf16.mxu0 0
        %537 = vmatpush1.bf16.msra.mxu0 0
        %538 = vmatprep.subr.bf16.mxu0 0
        %539 = vmatpush1.bf16.msra.mxu0 0
        %540 = vmatprep.subr.bf16.mxu0 0
        %541 = vmatpush1.bf16.msra.mxu0 0
        %542 = vmatprep.subr.bf16.mxu0 0
        %543 = vmatpush1.bf16.msra.mxu0 0
        %544 = vmatprep.subr.bf16.mxu0 0
        %545 = vmatpush1.bf16.msra.mxu0 0
        %546 = vmatprep.subr.bf16.mxu0 0
        %547 = vmatpush1.bf16.msra.mxu0 0
        %548 = vmatprep.subr.bf16.mxu0 0
        %549 = vmatpush1.bf16.msra.mxu0 0
        %550 = vmatprep.subr.bf16.mxu0 0
        %551 = vmatpush1.bf16.msra.mxu0 0
        %552 = vmatprep.subr.bf16.mxu0 0
        %553 = vmatpush1.bf16.msra.mxu0 0
        %554 = vmatprep.subr.bf16.mxu0 0
        %555 = vmatpush1.bf16.msra.mxu0 0
        %556 = vmatprep.subr.bf16.mxu0 0
        %557 = vmatpush1.bf16.msra.mxu0 0
        %558 = vmatprep.subr.bf16.mxu0 0
        %559 = vmatpush1.bf16.msra.mxu0 0
        %560 = vmatprep.subr.bf16.mxu0 0
        %561 = vmatpush1.bf16.msra.mxu0 0
        %562 = vmatprep.subr.bf16.mxu0 0
        %563 = vmatpush1.bf16.msra.mxu0 0
        %564 = vmatprep.mubr.bf16.mxu0 0
        %565 = vmatmul.mubr.bf16.gmra.mrb[0].mxu0 %v530
        %v566 = vpop.f32.mrb[0].mxu0
        %v567 = vadd.f32 %v514, %v566
        %v568 = vpop.f32.mrb[0].mxu0
        %v569 = vpop.f32.mrb[0].mxu0
        %v570 = vpop.f32.mrb[0].mxu0
        %571 = vdwg.mxu0
        %v572 = vld [vmem:[%s4] sm:$0xf]
        %v573 = vld [vmem:[%s4 + $0x4] sm:$0xf]
        %v574 = vld [vmem:[%s4 + $0x8] sm:$0xf]
        %v575 = vld [vmem:[%s4 + $0xc] sm:$0xf]
        %v576 = vld [vmem:[#allocation4] sm:$0x1]
        %v578 = vlaneseq
        %v579 = vshrl.u32 %v578, 7
        %v580 = vsub.s32 0, %v579
        %v581 = vrot.slane %v576, %v580
        %v587 = vunpack.c.l.b16 %v572
        %v588 = vunpack.c.l.b16 %v573
        %v589 = vunpack.c.l.b16 %v574
        %v590 = vunpack.c.l.b16 %v575
        %v591 = vpack.c.b16 %v588, %v587
        %v592 = vpack.c.b16 %v590, %v589
        %595 = vmatprep.subr.bf16.mxu0 0
        %596 = vmatpush1.bf16.msra.mxu0 %v591
        %597 = vmatprep.subr.bf16.mxu0 0
        %598 = vmatpush1.bf16.msra.mxu0 %v592
        %599 = vmatprep.subr.bf16.mxu0 0
        %600 = vmatpush1.bf16.msra.mxu0 0
        %601 = vmatprep.subr.bf16.mxu0 0
        %602 = vmatpush1.bf16.msra.mxu0 0
        %603 = vmatprep.subr.bf16.mxu0 0
        %604 = vmatpush1.bf16.msra.mxu0 0
        %605 = vmatprep.subr.bf16.mxu0 0
        %606 = vmatpush1.bf16.msra.mxu0 0
        %607 = vmatprep.subr.bf16.mxu0 0
        %608 = vmatpush1.bf16.msra.mxu0 0
        %609 = vmatprep.subr.bf16.mxu0 0
        %610 = vmatpush1.bf16.msra.mxu0 0
        %611 = vmatprep.subr.bf16.mxu0 0
        %612 = vmatpush1.bf16.msra.mxu0 0
        %613 = vmatprep.subr.bf16.mxu0 0
        %614 = vmatpush1.bf16.msra.mxu0 0
        %615 = vmatprep.subr.bf16.mxu0 0
        %616 = vmatpush1.bf16.msra.mxu0 0
        %617 = vmatprep.subr.bf16.mxu0 0
        %618 = vmatpush1.bf16.msra.mxu0 0
        %619 = vmatprep.subr.bf16.mxu0 0
        %620 = vmatpush1.bf16.msra.mxu0 0
        %621 = vmatprep.subr.bf16.mxu0 0
        %622 = vmatpush1.bf16.msra.mxu0 0
        %623 = vmatprep.subr.bf16.mxu0 0
        %624 = vmatpush1.bf16.msra.mxu0 0
        %625 = vmatprep.subr.bf16.mxu0 0
        %626 = vmatpush1.bf16.msra.mxu0 0
        %627 = vmatprep.mubr.bf16.mxu0 0
        %628 = vmatmul.mubr.bf16.gmra.mrb[0].mxu0 %v530
        %v629 = vpop.f32.mrb[0].mxu0
        %v630 = vadd.f32 %v581, %v629
        %v631 = vpop.f32.mrb[0].mxu0
        %v632 = vpop.f32.mrb[0].mxu0
        %v633 = vpop.f32.mrb[0].mxu0
        %634 = vdwg.mxu0
        %v635 = vld [vmem:[%s6] sm:$0xf]
        %v636 = vld [vmem:[%s6 + $0x4] sm:$0xf]
        %v637 = vld [vmem:[%s6 + $0x8] sm:$0xf]
        %v638 = vld [vmem:[%s6 + $0xc] sm:$0xf]
        %v639 = vld [vmem:[#allocation6] sm:$0x1]
        %v641 = vlaneseq
        %v642 = vshrl.u32 %v641, 7
        %v643 = vsub.s32 0, %v642
        %v644 = vrot.slane %v639, %v643
        %v650 = vunpack.c.l.b16 %v635
        %v651 = vunpack.c.l.b16 %v636
        %v652 = vunpack.c.l.b16 %v637
        %v653 = vunpack.c.l.b16 %v638
        %v654 = vpack.c.b16 %v651, %v650
        %v655 = vpack.c.b16 %v653, %v652
        %658 = vmatprep.subr.bf16.mxu0 0
        %659 = vmatpush1.bf16.msra.mxu0 %v654
        %660 = vmatprep.subr.bf16.mxu0 0
        %661 = vmatpush1.bf16.msra.mxu0 %v655
        %662 = vmatprep.subr.bf16.mxu0 0
        %663 = vmatpush1.bf16.msra.mxu0 0
        %664 = vmatprep.subr.bf16.mxu0 0
        %665 = vmatpush1.bf16.msra.mxu0 0
        %666 = vmatprep.subr.bf16.mxu0 0
        %667 = vmatpush1.bf16.msra.mxu0 0
        %668 = vmatprep.subr.bf16.mxu0 0
        %669 = vmatpush1.bf16.msra.mxu0 0
        %670 = vmatprep.subr.bf16.mxu0 0
        %671 = vmatpush1.bf16.msra.mxu0 0
        %672 = vmatprep.subr.bf16.mxu0 0
        %673 = vmatpush1.bf16.msra.mxu0 0
        %674 = vmatprep.subr.bf16.mxu0 0
        %675 = vmatpush1.bf16.msra.mxu0 0
        %676 = vmatprep.subr.bf16.mxu0 0
        %677 = vmatpush1.bf16.msra.mxu0 0
        %678 = vmatprep.subr.bf16.mxu0 0
        %679 = vmatpush1.bf16.msra.mxu0 0
        %680 = vmatprep.subr.bf16.mxu0 0
        %681 = vmatpush1.bf16.msra.mxu0 0
        %682 = vmatprep.subr.bf16.mxu0 0
        %683 = vmatpush1.bf16.msra.mxu0 0
        %684 = vmatprep.subr.bf16.mxu0 0
        %685 = vmatpush1.bf16.msra.mxu0 0
        %686 = vmatprep.subr.bf16.mxu0 0
        %687 = vmatpush1.bf16.msra.mxu0 0
        %688 = vmatprep.subr.bf16.mxu0 0
        %689 = vmatpush1.bf16.msra.mxu0 0
        %690 = vmatprep.mubr.bf16.mxu0 0
        %691 = vmatmul.mubr.bf16.gmra.mrb[0].mxu0 %v530
        %v692 = vpop.f32.mrb[0].mxu0
        %v693 = vadd.f32 %v644, %v692
        %v694 = vpop.f32.mrb[0].mxu0
        %v695 = vpop.f32.mrb[0].mxu0
        %v696 = vpop.f32.mrb[0].mxu0
        %697 = vdwg.mxu0
        %v698 = vld [vmem:[%s497] sm:$0x3]
        %v699 = vmul.f32 %v567, 0.17677669
        %701 = vrot.lane.b32.xlu0 %v699, 120
        %v702 = vpop.permute.xlu0 %701
        %704 = vrot.lane.b32.xlu0 %v699, 112
        %v705 = vpop.permute.xlu0 %704
        %707 = vrot.lane.b32.xlu0 %v699, 104
        %v708 = vpop.permute.xlu0 %707
        %v710 = vcombine.low %v699, %v705
        %v711 = vcombine.high %v699, %v705
        %v713 = vunpack.c.l.s4 1983009808
        %v714 = vunpack.c.0.s8 %v713
        %v715 = vlaneseq
        %v716 = vshrl.u32 %v715, 7
        %v717 = vsub.s32 %v714, %v716
        %v718 = vrot.slane %v710, %v717
        %v720 = vunpack.c.l.s4 1983009808
        %v721 = vunpack.c.0.s8 %v720
        %v722 = vlaneseq
        %v723 = vshrl.u32 %v722, 7
        %v724 = vsub.s32 %v721, %v723
        %v725 = vrot.slane %v711, %v724
        %v726 = vcombine.low %v702, %v708
        %v727 = vcombine.high %v702, %v708
        %v729 = vunpack.c.l.s4 1983009808
        %v730 = vunpack.c.0.s8 %v729
        %v731 = vlaneseq
        %v732 = vshrl.u32 %v731, 7
        %v733 = vsub.s32 %v730, %v732
        %v734 = vrot.slane %v726, %v733
        %v736 = vunpack.c.l.s4 1983009808
        %v737 = vunpack.c.0.s8 %v736
        %v738 = vlaneseq
        %v739 = vshrl.u32 %v738, 7
        %v740 = vsub.s32 %v737, %v739
        %v741 = vrot.slane %v727, %v740
        %v742 = vcombine.low %v718, %v734
        %v743 = vcombine.high %v718, %v734
        %v745 = vunpack.c.l.s4 1934713408
        %v746 = vunpack.c.0.s8 %v745
        %v747 = vlaneseq
        %v748 = vshrl.u32 %v747, 7
        %v749 = vsub.s32 %v746, %v748
        %v750 = vrot.slane %v742, %v749
        %v752 = vunpack.c.l.s4 1934713408
        %v753 = vunpack.c.0.s8 %v752
        %v754 = vlaneseq
        %v755 = vshrl.u32 %v754, 7
        %v756 = vsub.s32 %v753, %v755
        %v757 = vrot.slane %v743, %v756
        %v758 = vcombine.low %v725, %v741
        %v759 = vcombine.high %v725, %v741
        %v761 = vunpack.c.l.s4 1934713408
        %v762 = vunpack.c.0.s8 %v761
        %v763 = vlaneseq
        %v764 = vshrl.u32 %v763, 7
        %v765 = vsub.s32 %v762, %v764
        %v766 = vrot.slane %v758, %v765
        %v768 = vunpack.c.l.s4 1934713408
        %v769 = vunpack.c.0.s8 %v768
        %v770 = vlaneseq
        %v771 = vshrl.u32 %v770, 7
        %v772 = vsub.s32 %v769, %v771
        %v773 = vrot.slane %v759, %v772
        %v774 = vcombine.high %v750, 0.0
        %v775 = vcombine.high %v757, 0.0
        %v776 = vcombine.high %v766, 0.0
        %v777 = vcombine.high %v773, 0.0
        %v778 = vcombine.low %v750, %v757
        %v780 = vunpack.c.l.s4 1983009808
        %v781 = vunpack.c.0.s8 %v780
        %v782 = vlaneseq
        %v783 = vshrl.u32 %v782, 7
        %v784 = vsub.s32 %v781, %v783
        %v785 = vrot.slane %v778, %v784
        %v786 = vcombine.low %v774, %v775
        %v788 = vunpack.c.l.s4 1983009808
        %v789 = vunpack.c.0.s8 %v788
        %v790 = vlaneseq
        %v791 = vshrl.u32 %v790, 7
        %v792 = vsub.s32 %v789, %v791
        %v793 = vrot.slane %v786, %v792
        %v794 = vcombine.low %v766, %v773
        %v796 = vunpack.c.l.s4 1983009808
        %v797 = vunpack.c.0.s8 %v796
        %v798 = vlaneseq
        %v799 = vshrl.u32 %v798, 7
        %v800 = vsub.s32 %v797, %v799
        %v801 = vrot.slane %v794, %v800
        %v802 = vcombine.low %v776, %v777
        %v804 = vunpack.c.l.s4 1983009808
        %v805 = vunpack.c.0.s8 %v804
        %v806 = vlaneseq
        %v807 = vshrl.u32 %v806, 7
        %v808 = vsub.s32 %v805, %v807
        %v809 = vrot.slane %v802, %v808
        %v810 = vcombine.low %v785, %v793
        %v811 = vcombine.high %v785, %v793
        %v813 = vunpack.c.l.s4 1934713408
        %v814 = vunpack.c.0.s8 %v813
        %v815 = vlaneseq
        %v816 = vshrl.u32 %v815, 7
        %v817 = vsub.s32 %v814, %v816
        %v818 = vrot.slane %v810, %v817
        %v820 = vunpack.c.l.s4 1934713408
        %v821 = vunpack.c.0.s8 %v820
        %v822 = vlaneseq
        %v823 = vshrl.u32 %v822, 7
        %v824 = vsub.s32 %v821, %v823
        %v825 = vrot.slane %v811, %v824
        %v826 = vcombine.low %v801, %v809
        %v827 = vcombine.high %v801, %v809
        %v829 = vunpack.c.l.s4 1934713408
        %v830 = vunpack.c.0.s8 %v829
        %v831 = vlaneseq
        %v832 = vshrl.u32 %v831, 7
        %v833 = vsub.s32 %v830, %v832
        %v834 = vrot.slane %v826, %v833
        %v836 = vunpack.c.l.s4 1934713408
        %v837 = vunpack.c.0.s8 %v836
        %v838 = vlaneseq
        %v839 = vshrl.u32 %v838, 7
        %v840 = vsub.s32 %v837, %v839
        %v841 = vrot.slane %v827, %v840
        %v842 = vcombine.low %v818, %v834
        %v843 = vcombine.high %v818, %v834
        %v844 = vcombine.low %v825, %v841
        %v845 = vcombine.high %v825, %v841
        %v846 = vpack.c.bf16 %v842, %v842
        %v847 = vpack.c.bf16 %v843, %v843
        %v848 = vpack.c.bf16 %v844, %v844
        %v849 = vpack.c.bf16 %v845, %v845
        %851 = vrot.lane.b32.xlu0 %v630, 120
        %v852 = vpop.permute.xlu0 %851
        %854 = vrot.lane.b32.xlu0 %v630, 112
        %v855 = vpop.permute.xlu0 %854
        %857 = vrot.lane.b32.xlu0 %v630, 104
        %v858 = vpop.permute.xlu0 %857
        %v860 = vcombine.low %v630, %v855
        %v861 = vcombine.high %v630, %v855
        %v863 = vunpack.c.l.s4 1983009808
        %v864 = vunpack.c.0.s8 %v863
        %v865 = vlaneseq
        %v866 = vshrl.u32 %v865, 7
        %v867 = vsub.s32 %v864, %v866
        %v868 = vrot.slane %v860, %v867
        %v870 = vunpack.c.l.s4 1983009808
        %v871 = vunpack.c.0.s8 %v870
        %v872 = vlaneseq
        %v873 = vshrl.u32 %v872, 7
        %v874 = vsub.s32 %v871, %v873
        %v875 = vrot.slane %v861, %v874
        %v876 = vcombine.low %v852, %v858
        %v877 = vcombine.high %v852, %v858
        %v879 = vunpack.c.l.s4 1983009808
        %v880 = vunpack.c.0.s8 %v879
        %v881 = vlaneseq
        %v882 = vshrl.u32 %v881, 7
        %v883 = vsub.s32 %v880, %v882
        %v884 = vrot.slane %v876, %v883
        %v886 = vunpack.c.l.s4 1983009808
        %v887 = vunpack.c.0.s8 %v886
        %v888 = vlaneseq
        %v889 = vshrl.u32 %v888, 7
        %v890 = vsub.s32 %v887, %v889
        %v891 = vrot.slane %v877, %v890
        %v892 = vcombine.low %v868, %v884
        %v893 = vcombine.high %v868, %v884
        %v895 = vunpack.c.l.s4 1934713408
        %v896 = vunpack.c.0.s8 %v895
        %v897 = vlaneseq
        %v898 = vshrl.u32 %v897, 7
        %v899 = vsub.s32 %v896, %v898
        %v900 = vrot.slane %v892, %v899
        %v902 = vunpack.c.l.s4 1934713408
        %v903 = vunpack.c.0.s8 %v902
        %v904 = vlaneseq
        %v905 = vshrl.u32 %v904, 7
        %v906 = vsub.s32 %v903, %v905
        %v907 = vrot.slane %v893, %v906
        %v908 = vcombine.low %v875, %v891
        %v909 = vcombine.high %v875, %v891
        %v911 = vunpack.c.l.s4 1934713408
        %v912 = vunpack.c.0.s8 %v911
        %v913 = vlaneseq
        %v914 = vshrl.u32 %v913, 7
        %v915 = vsub.s32 %v912, %v914
        %v916 = vrot.slane %v908, %v915
        %v918 = vunpack.c.l.s4 1934713408
        %v919 = vunpack.c.0.s8 %v918
        %v920 = vlaneseq
        %v921 = vshrl.u32 %v920, 7
        %v922 = vsub.s32 %v919, %v921
        %v923 = vrot.slane %v909, %v922
        %v924 = vcombine.high %v900, 0.0
        %v925 = vcombine.high %v907, 0.0
        %v926 = vcombine.high %v916, 0.0
        %v927 = vcombine.high %v923, 0.0
        %v928 = vcombine.low %v900, %v907
        %v930 = vunpack.c.l.s4 1983009808
        %v931 = vunpack.c.0.s8 %v930
        %v932 = vlaneseq
        %v933 = vshrl.u32 %v932, 7
        %v934 = vsub.s32 %v931, %v933
        %v935 = vrot.slane %v928, %v934
        %v936 = vcombine.low %v924, %v925
        %v938 = vunpack.c.l.s4 1983009808
        %v939 = vunpack.c.0.s8 %v938
        %v940 = vlaneseq
        %v941 = vshrl.u32 %v940, 7
        %v942 = vsub.s32 %v939, %v941
        %v943 = vrot.slane %v936, %v942
        %v944 = vcombine.low %v916, %v923
        %v946 = vunpack.c.l.s4 1983009808
        %v947 = vunpack.c.0.s8 %v946
        %v948 = vlaneseq
        %v949 = vshrl.u32 %v948, 7
        %v950 = vsub.s32 %v947, %v949
        %v951 = vrot.slane %v944, %v950
        %v952 = vcombine.low %v926, %v927
        %v954 = vunpack.c.l.s4 1983009808
        %v955 = vunpack.c.0.s8 %v954
        %v956 = vlaneseq
        %v957 = vshrl.u32 %v956, 7
        %v958 = vsub.s32 %v955, %v957
        %v959 = vrot.slane %v952, %v958
        %v960 = vcombine.low %v935, %v943
        %v961 = vcombine.high %v935, %v943
        %v963 = vunpack.c.l.s4 1934713408
        %v964 = vunpack.c.0.s8 %v963
        %v965 = vlaneseq
        %v966 = vshrl.u32 %v965, 7
        %v967 = vsub.s32 %v964, %v966
        %v968 = vrot.slane %v960, %v967
        %v970 = vunpack.c.l.s4 1934713408
        %v971 = vunpack.c.0.s8 %v970
        %v972 = vlaneseq
        %v973 = vshrl.u32 %v972, 7
        %v974 = vsub.s32 %v971, %v973
        %v975 = vrot.slane %v961, %v974
        %v976 = vcombine.low %v951, %v959
        %v977 = vcombine.high %v951, %v959
        %v979 = vunpack.c.l.s4 1934713408
        %v980 = vunpack.c.0.s8 %v979
        %v981 = vlaneseq
        %v982 = vshrl.u32 %v981, 7
        %v983 = vsub.s32 %v980, %v982
        %v984 = vrot.slane %v976, %v983
        %v986 = vunpack.c.l.s4 1934713408
        %v987 = vunpack.c.0.s8 %v986
        %v988 = vlaneseq
        %v989 = vshrl.u32 %v988, 7
        %v990 = vsub.s32 %v987, %v989
        %v991 = vrot.slane %v977, %v990
        %v992 = vcombine.low %v968, %v984
        %v993 = vcombine.high %v968, %v984
        %v994 = vcombine.low %v975, %v991
        %v995 = vcombine.high %v975, %v991
        %v996 = vpack.c.bf16 %v992, %v992
        %v997 = vpack.c.bf16 %v993, %v993
        %v998 = vpack.c.bf16 %v994, %v994
        %v999 = vpack.c.bf16 %v995, %v995
        %1001 = vrot.lane.b32.xlu0 %v693, 120
        %v1002 = vpop.permute.xlu0 %1001
        %1004 = vrot.lane.b32.xlu0 %v693, 112
        %v1005 = vpop.permute.xlu0 %1004
        %1007 = vrot.lane.b32.xlu0 %v693, 104
        %v1008 = vpop.permute.xlu0 %1007
        %v1010 = vcombine.low %v693, %v1005
        %v1011 = vcombine.high %v693, %v1005
        %v1013 = vunpack.c.l.s4 1983009808
        %v1014 = vunpack.c.0.s8 %v1013
        %v1015 = vlaneseq
        %v1016 = vshrl.u32 %v1015, 7
        %v1017 = vsub.s32 %v1014, %v1016
        %v1018 = vrot.slane %v1010, %v1017
        %v1020 = vunpack.c.l.s4 1983009808
        %v1021 = vunpack.c.0.s8 %v1020
        %v1022 = vlaneseq
        %v1023 = vshrl.u32 %v1022, 7
        %v1024 = vsub.s32 %v1021, %v1023
        %v1025 = vrot.slane %v1011, %v1024
        %v1026 = vcombine.low %v1002, %v1008
        %v1027 = vcombine.high %v1002, %v1008
        %v1029 = vunpack.c.l.s4 1983009808
        %v1030 = vunpack.c.0.s8 %v1029
        %v1031 = vlaneseq
        %v1032 = vshrl.u32 %v1031, 7
        %v1033 = vsub.s32 %v1030, %v1032
        %v1034 = vrot.slane %v1026, %v1033
        %v1036 = vunpack.c.l.s4 1983009808
        %v1037 = vunpack.c.0.s8 %v1036
        %v1038 = vlaneseq
        %v1039 = vshrl.u32 %v1038, 7
        %v1040 = vsub.s32 %v1037, %v1039
        %v1041 = vrot.slane %v1027, %v1040
        %v1042 = vcombine.low %v1018, %v1034
        %v1043 = vcombine.high %v1018, %v1034
        %v1045 = vunpack.c.l.s4 1934713408
        %v1046 = vunpack.c.0.s8 %v1045
        %v1047 = vlaneseq
        %v1048 = vshrl.u32 %v1047, 7
        %v1049 = vsub.s32 %v1046, %v1048
        %v1050 = vrot.slane %v1042, %v1049
        %v1052 = vunpack.c.l.s4 1934713408
        %v1053 = vunpack.c.0.s8 %v1052
        %v1054 = vlaneseq
        %v1055 = vshrl.u32 %v1054, 7
        %v1056 = vsub.s32 %v1053, %v1055
        %v1057 = vrot.slane %v1043, %v1056
        %v1058 = vcombine.low %v1025, %v1041
        %v1059 = vcombine.high %v1025, %v1041
        %v1061 = vunpack.c.l.s4 1934713408
        %v1062 = vunpack.c.0.s8 %v1061
        %v1063 = vlaneseq
        %v1064 = vshrl.u32 %v1063, 7
        %v1065 = vsub.s32 %v1062, %v1064
        %v1066 = vrot.slane %v1058, %v1065
        %v1068 = vunpack.c.l.s4 1934713408
        %v1069 = vunpack.c.0.s8 %v1068
        %v1070 = vlaneseq
        %v1071 = vshrl.u32 %v1070, 7
        %v1072 = vsub.s32 %v1069, %v1071
        %v1073 = vrot.slane %v1059, %v1072
        %v1074 = vcombine.high %v1050, 0.0
        %v1075 = vcombine.high %v1057, 0.0
        %v1076 = vcombine.high %v1066, 0.0
        %v1077 = vcombine.high %v1073, 0.0
        %v1078 = vcombine.low %v1050, %v1057
        %v1080 = vunpack.c.l.s4 1983009808
        %v1081 = vunpack.c.0.s8 %v1080
        %v1082 = vlaneseq
        %v1083 = vshrl.u32 %v1082, 7
        %v1084 = vsub.s32 %v1081, %v1083
        %v1085 = vrot.slane %v1078, %v1084
        %v1086 = vcombine.low %v1074, %v1075
        %v1088 = vunpack.c.l.s4 1983009808
        %v1089 = vunpack.c.0.s8 %v1088
        %v1090 = vlaneseq
        %v1091 = vshrl.u32 %v1090, 7
        %v1092 = vsub.s32 %v1089, %v1091
        %v1093 = vrot.slane %v1086, %v1092
        %v1094 = vcombine.low %v1066, %v1073
        %v1096 = vunpack.c.l.s4 1983009808
        %v1097 = vunpack.c.0.s8 %v1096
        %v1098 = vlaneseq
        %v1099 = vshrl.u32 %v1098, 7
        %v1100 = vsub.s32 %v1097, %v1099
        %v1101 = vrot.slane %v1094, %v1100
        %v1102 = vcombine.low %v1076, %v1077
        %v1104 = vunpack.c.l.s4 1983009808
        %v1105 = vunpack.c.0.s8 %v1104
        %v1106 = vlaneseq
        %v1107 = vshrl.u32 %v1106, 7
        %v1108 = vsub.s32 %v1105, %v1107
        %v1109 = vrot.slane %v1102, %v1108
        %v1110 = vcombine.low %v1085, %v1093
        %v1111 = vcombine.high %v1085, %v1093
        %v1113 = vunpack.c.l.s4 1934713408
        %v1114 = vunpack.c.0.s8 %v1113
        %v1115 = vlaneseq
        %v1116 = vshrl.u32 %v1115, 7
        %v1117 = vsub.s32 %v1114, %v1116
        %v1118 = vrot.slane %v1110, %v1117
        %v1120 = vunpack.c.l.s4 1934713408
        %v1121 = vunpack.c.0.s8 %v1120
        %v1122 = vlaneseq
        %v1123 = vshrl.u32 %v1122, 7
        %v1124 = vsub.s32 %v1121, %v1123
        %v1125 = vrot.slane %v1111, %v1124
        %v1126 = vcombine.low %v1101, %v1109
        %v1127 = vcombine.high %v1101, %v1109
        %v1129 = vunpack.c.l.s4 1934713408
        %v1130 = vunpack.c.0.s8 %v1129
        %v1131 = vlaneseq
        %v1132 = vshrl.u32 %v1131, 7
        %v1133 = vsub.s32 %v1130, %v1132
        %v1134 = vrot.slane %v1126, %v1133
        %v1136 = vunpack.c.l.s4 1934713408
        %v1137 = vunpack.c.0.s8 %v1136
        %v1138 = vlaneseq
        %v1139 = vshrl.u32 %v1138, 7
        %v1140 = vsub.s32 %v1137, %v1139
        %v1141 = vrot.slane %v1127, %v1140
        %v1142 = vcombine.low %v1118, %v1134
        %v1143 = vcombine.high %v1118, %v1134
        %v1144 = vcombine.low %v1125, %v1141
        %v1145 = vcombine.high %v1125, %v1141
        %v1146 = vpack.c.bf16 %v1142, %v1142
        %v1147 = vpack.c.bf16 %v1143, %v1143
        %v1148 = vpack.c.bf16 %v1144, %v1144
        %v1149 = vpack.c.bf16 %v1145, %v1145
        %vm1150 = vcmask 64512
        %v1152 = vsel %vm1150, %v846, 0
        %v1155 = vsel %vm1150, %v996, 0
        %1157 = vmatprep.subr.bf16.mxu0 0
        %1158 = vmatpush1.bf16.xpose.msra.mxu0 %v1155
        %1159 = vmatprep.subr.bf16.mxu0 0
        %1160 = vmatpush1.bf16.xpose.msra.mxu0 0
        %1161 = vmatprep.subr.bf16.mxu0 0
        %1162 = vmatpush1.bf16.xpose.msra.mxu0 0
        %1163 = vmatprep.subr.bf16.mxu0 0
        %1164 = vmatpush1.bf16.xpose.msra.mxu0 0
        %1165 = vmatprep.subr.bf16.mxu0 0
        %1166 = vmatpush1.bf16.xpose.msra.mxu0 0
        %1167 = vmatprep.subr.bf16.mxu0 0
        %1168 = vmatpush1.bf16.xpose.msra.mxu0 0
        %1169 = vmatprep.subr.bf16.mxu0 0
        %1170 = vmatpush1.bf16.xpose.msra.mxu0 0
        %1171 = vmatprep.subr.bf16.mxu0 0
        %1172 = vmatpush1.bf16.xpose.msra.mxu0 0
        %1173 = vmatprep.subr.bf16.mxu0 0
        %1174 = vmatpush1.bf16.xpose.msra.mxu0 0
        %1175 = vmatprep.subr.bf16.mxu0 0
        %1176 = vmatpush1.bf16.xpose.msra.mxu0 0
        %1177 = vmatprep.subr.bf16.mxu0 0
        %1178 = vmatpush1.bf16.xpose.msra.mxu0 0
        %1179 = vmatprep.subr.bf16.mxu0 0
        %1180 = vmatpush1.bf16.xpose.msra.mxu0 0
        %1181 = vmatprep.subr.bf16.mxu0 0
        %1182 = vmatpush1.bf16.xpose.msra.mxu0 0
        %1183 = vmatprep.subr.bf16.mxu0 0
        %1184 = vmatpush1.bf16.xpose.msra.mxu0 0
        %1185 = vmatprep.subr.bf16.mxu0 0
        %1186 = vmatpush1.bf16.xpose.msra.mxu0 0
        %1187 = vmatprep.subr.bf16.mxu0 0
        %1188 = vmatpush1.bf16.xpose.msra.mxu0 0
        %1189 = vmatprep.mubr.bf16.mxu0 0
        %1190 = vmatmul.mubr.bf16.gmra.mrb[0].mxu0 %v1152
        %v1191 = vpop.f32.mrb[0].mxu0
        %v1192 = vadd.f32 0.0, %v1191
        %v1193 = vpop.f32.mrb[0].mxu0
        %v1194 = vpop.f32.mrb[0].mxu0
        %v1195 = vpop.f32.mrb[0].mxu0
        %1196 = vdwg.mxu0
        %v1198 = vsel %vm1150, %v847, 0
        %v1201 = vsel %vm1150, %v997, 0
        %1203 = vmatprep.subr.bf16.mxu0 0
        %1204 = vmatpush1.bf16.xpose.msra.mxu0 %v1201
        %1205 = vmatprep.subr.bf16.mxu0 0
        %1206 = vmatpush1.bf16.xpose.msra.mxu0 0
        %1207 = vmatprep.subr.bf16.mxu0 0
        %1208 = vmatpush1.bf16.xpose.msra.mxu0 0
        %1209 = vmatprep.subr.bf16.mxu0 0
        %1210 = vmatpush1.bf16.xpose.msra.mxu0 0
        %1211 = vmatprep.subr.bf16.mxu0 0
        %1212 = vmatpush1.bf16.xpose.msra.mxu0 0
        %1213 = vmatprep.subr.bf16.mxu0 0
        %1214 = vmatpush1.bf16.xpose.msra.mxu0 0
        %1215 = vmatprep.subr.bf16.mxu0 0
        %1216 = vmatpush1.bf16.xpose.msra.mxu0 0
        %1217 = vmatprep.subr.bf16.mxu0 0
        %1218 = vmatpush1.bf16.xpose.msra.mxu0 0
        %1219 = vmatprep.subr.bf16.mxu0 0
        %1220 = vmatpush1.bf16.xpose.msra.mxu0 0
        %1221 = vmatprep.subr.bf16.mxu0 0
        %1222 = vmatpush1.bf16.xpose.msra.mxu0 0
        %1223 = vmatprep.subr.bf16.mxu0 0
        %1224 = vmatpush1.bf16.xpose.msra.mxu0 0
        %1225 = vmatprep.subr.bf16.mxu0 0
        %1226 = vmatpush1.bf16.xpose.msra.mxu0 0
        %1227 = vmatprep.subr.bf16.mxu0 0
        %1228 = vmatpush1.bf16.xpose.msra.mxu0 0
        %1229 = vmatprep.subr.bf16.mxu0 0
        %1230 = vmatpush1.bf16.xpose.msra.mxu0 0
        %1231 = vmatprep.subr.bf16.mxu0 0
        %1232 = vmatpush1.bf16.xpose.msra.mxu0 0
        %1233 = vmatprep.subr.bf16.mxu0 0
        %1234 = vmatpush1.bf16.xpose.msra.mxu0 0
        %1235 = vmatprep.mubr.bf16.mxu0 0
        %1236 = vmatmul.mubr.bf16.gmra.mrb[0].mxu0 %v1198
        %v1237 = vpop.f32.mrb[0].mxu0
        %v1238 = vadd.f32 0.0, %v1237
        %v1239 = vpop.f32.mrb[0].mxu0
        %v1240 = vpop.f32.mrb[0].mxu0
        %v1241 = vpop.f32.mrb[0].mxu0
        %1242 = vdwg.mxu0
        %v1244 = vsel %vm1150, %v848, 0
        %v1247 = vsel %vm1150, %v998, 0
        %1249 = vmatprep.subr.bf16.mxu0 0
        %1250 = vmatpush1.bf16.xpose.msra.mxu0 %v1247
        %1251 = vmatprep.subr.bf16.mxu0 0
        %1252 = vmatpush1.bf16.xpose.msra.mxu0 0
        %1253 = vmatprep.subr.bf16.mxu0 0
        %1254 = vmatpush1.bf16.xpose.msra.mxu0 0
        %1255 = vmatprep.subr.bf16.mxu0 0
        %1256 = vmatpush1.bf16.xpose.msra.mxu0 0
        %1257 = vmatprep.subr.bf16.mxu0 0
        %1258 = vmatpush1.bf16.xpose.msra.mxu0 0
        %1259 = vmatprep.subr.bf16.mxu0 0
        %1260 = vmatpush1.bf16.xpose.msra.mxu0 0
        %1261 = vmatprep.subr.bf16.mxu0 0
        %1262 = vmatpush1.bf16.xpose.msra.mxu0 0
        %1263 = vmatprep.subr.bf16.mxu0 0
        %1264 = vmatpush1.bf16.xpose.msra.mxu0 0
        %1265 = vmatprep.subr.bf16.mxu0 0
        %1266 = vmatpush1.bf16.xpose.msra.mxu0 0
        %1267 = vmatprep.subr.bf16.mxu0 0
        %1268 = vmatpush1.bf16.xpose.msra.mxu0 0
        %1269 = vmatprep.subr.bf16.mxu0 0
        %1270 = vmatpush1.bf16.xpose.msra.mxu0 0
        %1271 = vmatprep.subr.bf16.mxu0 0
        %1272 = vmatpush1.bf16.xpose.msra.mxu0 0
        %1273 = vmatprep.subr.bf16.mxu0 0
        %1274 = vmatpush1.bf16.xpose.msra.mxu0 0
        %1275 = vmatprep.subr.bf16.mxu0 0
        %1276 = vmatpush1.bf16.xpose.msra.mxu0 0
        %1277 = vmatprep.subr.bf16.mxu0 0
        %1278 = vmatpush1.bf16.xpose.msra.mxu0 0
        %1279 = vmatprep.subr.bf16.mxu0 0
        %1280 = vmatpush1.bf16.xpose.msra.mxu0 0
        %1281 = vmatprep.mubr.bf16.mxu0 0
        %1282 = vmatmul.mubr.bf16.gmra.mrb[0].mxu0 %v1244
        %v1283 = vpop.f32.mrb[0].mxu0
        %v1284 = vadd.f32 0.0, %v1283
        %v1285 = vpop.f32.mrb[0].mxu0
        %v1286 = vpop.f32.mrb[0].mxu0
        %v1287 = vpop.f32.mrb[0].mxu0
        %1288 = vdwg.mxu0
        %v1290 = vsel %vm1150, %v849, 0
        %v1293 = vsel %vm1150, %v999, 0
        %1295 = vmatprep.subr.bf16.mxu0 0
        %1296 = vmatpush1.bf16.xpose.msra.mxu0 %v1293
        %1297 = vmatprep.subr.bf16.mxu0 0
        %1298 = vmatpush1.bf16.xpose.msra.mxu0 0
        %1299 = vmatprep.subr.bf16.mxu0 0
        %1300 = vmatpush1.bf16.xpose.msra.mxu0 0
        %1301 = vmatprep.subr.bf16.mxu0 0
        %1302 = vmatpush1.bf16.xpose.msra.mxu0 0
        %1303 = vmatprep.subr.bf16.mxu0 0
        %1304 = vmatpush1.bf16.xpose.msra.mxu0 0
        %1305 = vmatprep.subr.bf16.mxu0 0
        %1306 = vmatpush1.bf16.xpose.msra.mxu0 0
        %1307 = vmatprep.subr.bf16.mxu0 0
        %1308 = vmatpush1.bf16.xpose.msra.mxu0 0
        %1309 = vmatprep.subr.bf16.mxu0 0
        %1310 = vmatpush1.bf16.xpose.msra.mxu0 0
        %1311 = vmatprep.subr.bf16.mxu0 0
        %1312 = vmatpush1.bf16.xpose.msra.mxu0 0
        %1313 = vmatprep.subr.bf16.mxu0 0
        %1314 = vmatpush1.bf16.xpose.msra.mxu0 0
        %1315 = vmatprep.subr.bf16.mxu0 0
        %1316 = vmatpush1.bf16.xpose.msra.mxu0 0
        %1317 = vmatprep.subr.bf16.mxu0 0
        %1318 = vmatpush1.bf16.xpose.msra.mxu0 0
        %1319 = vmatprep.subr.bf16.mxu0 0
        %1320 = vmatpush1.bf16.xpose.msra.mxu0 0
        %1321 = vmatprep.subr.bf16.mxu0 0
        %1322 = vmatpush1.bf16.xpose.msra.mxu0 0
        %1323 = vmatprep.subr.bf16.mxu0 0
        %1324 = vmatpush1.bf16.xpose.msra.mxu0 0
        %1325 = vmatprep.subr.bf16.mxu0 0
        %1326 = vmatpush1.bf16.xpose.msra.mxu0 0
        %1327 = vmatprep.mubr.bf16.mxu0 0
        %1328 = vmatmul.mubr.bf16.gmra.mrb[0].mxu0 %v1290
        %v1329 = vpop.f32.mrb[0].mxu0
        %v1330 = vadd.f32 0.0, %v1329
        %v1331 = vpop.f32.mrb[0].mxu0
        %v1332 = vpop.f32.mrb[0].mxu0
        %v1333 = vpop.f32.mrb[0].mxu0
        %1334 = vdwg.mxu0
        %v1335 = vunpack.c.0.s8 %v698
        %v1336 = vcvt.s32.f32 %v1335
        %vm1337 = vcmp.eq.f32.partialorder %v1336, 0.0
        %v1338 = vsel %vm1337, 1, 0
        %vm1339 = vcmp.eq.s32.totalorder %v1338, 1
        %v1340 = vsel %vm1339, -1e+20, %v1192
        %v1341 = vsel %vm1339, -1e+20, %v1238
        %v1342 = vsel %vm1339, -1e+20, %v1284
        %v1343 = vsel %vm1339, -1e+20, %v1330
        %v1344 = vsel %vm1150, %v1340, -inf
        %1345 = vmax.xlane.f32.xlu0 %v1344
        %v1346 = vpop.xlane.xlu0 %1345
        %v1347 = vsel %vm1150, %v1341, -inf
        %1348 = vmax.xlane.f32.xlu0 %v1347
        %v1349 = vpop.xlane.xlu0 %1348
        %v1350 = vsel %vm1150, %v1342, -inf
        %1351 = vmax.xlane.f32.xlu0 %v1350
        %v1352 = vpop.xlane.xlu0 %1351
        %v1353 = vsel %vm1150, %v1343, -inf
        %1354 = vmax.xlane.f32.xlu0 %v1353
        %v1355 = vpop.xlane.xlu0 %1354
        %v1356 = vsub.f32 %v1340, %v1346
        %v1357 = vsub.f32 %v1341, %v1349
        %v1358 = vsub.f32 %v1342, %v1352
        %v1359 = vsub.f32 %v1343, %v1355
        %v1360 = vmul.f32 %v1356, 1.442695
        %v1361 = vpow.pop %v1360
        %v1362 = vmul.f32 %v1357, 1.442695
        %v1363 = vpow.pop %v1362
        %v1364 = vmul.f32 %v1358, 1.442695
        %v1365 = vpow.pop %v1364
        %v1366 = vmul.f32 %v1359, 1.442695
        %v1367 = vpow.pop %v1366
        %v1368 = vsel %vm1150, %v1361, 0.0
        %1369 = vadd.xlane.f32.xlu0 %v1368
        %v1370 = vpop.xlane.xlu0 %1369
        %v1371 = vsel %vm1150, %v1363, 0.0
        %1372 = vadd.xlane.f32.xlu0 %v1371
        %v1373 = vpop.xlane.xlu0 %1372
        %v1374 = vsel %vm1150, %v1365, 0.0
        %1375 = vadd.xlane.f32.xlu0 %v1374
        %v1376 = vpop.xlane.xlu0 %1375
        %v1377 = vsel %vm1150, %v1367, 0.0
        %1378 = vadd.xlane.f32.xlu0 %v1377
        %v1379 = vpop.xlane.xlu0 %1378
        %v1380 = vpack.c.bf16 %v1361, %v1361
        %v1381 = vpack.c.bf16 %v1363, %v1363
        %v1382 = vpack.c.bf16 %v1365, %v1365
        %v1383 = vpack.c.bf16 %v1367, %v1367
        %v1385 = vsel %vm1150, %v1380, 0
        %vm1387 = vcmask 1043456
        %v1389 = vsel %vm1387, %v1146, 0
        %1391 = vmatprep.subr.bf16.mxu0 0
        %1392 = vmatpush1.bf16.msra.mxu0 %v1389
        %1393 = vmatprep.subr.bf16.mxu0 0
        %1394 = vmatpush1.bf16.msra.mxu0 0
        %1395 = vmatprep.subr.bf16.mxu0 0
        %1396 = vmatpush1.bf16.msra.mxu0 0
        %1397 = vmatprep.subr.bf16.mxu0 0
        %1398 = vmatpush1.bf16.msra.mxu0 0
        %1399 = vmatprep.subr.bf16.mxu0 0
        %1400 = vmatpush1.bf16.msra.mxu0 0
        %1401 = vmatprep.subr.bf16.mxu0 0
        %1402 = vmatpush1.bf16.msra.mxu0 0
        %1403 = vmatprep.subr.bf16.mxu0 0
        %1404 = vmatpush1.bf16.msra.mxu0 0
        %1405 = vmatprep.subr.bf16.mxu0 0
        %1406 = vmatpush1.bf16.msra.mxu0 0
        %1407 = vmatprep.subr.bf16.mxu0 0
        %1408 = vmatpush1.bf16.msra.mxu0 0
        %1409 = vmatprep.subr.bf16.mxu0 0
        %1410 = vmatpush1.bf16.msra.mxu0 0
        %1411 = vmatprep.subr.bf16.mxu0 0
        %1412 = vmatpush1.bf16.msra.mxu0 0
        %1413 = vmatprep.subr.bf16.mxu0 0
        %1414 = vmatpush1.bf16.msra.mxu0 0
        %1415 = vmatprep.subr.bf16.mxu0 0
        %1416 = vmatpush1.bf16.msra.mxu0 0
        %1417 = vmatprep.subr.bf16.mxu0 0
        %1418 = vmatpush1.bf16.msra.mxu0 0
        %1419 = vmatprep.subr.bf16.mxu0 0
        %1420 = vmatpush1.bf16.msra.mxu0 0
        %1421 = vmatprep.subr.bf16.mxu0 0
        %1422 = vmatpush1.bf16.msra.mxu0 0
        %1423 = vmatprep.mubr.bf16.mxu0 0
        %1424 = vmatmul.mubr.bf16.gmra.mrb[0].mxu0 %v1385
        %v1425 = vpop.f32.mrb[0].mxu0
        %v1426 = vadd.f32 0.0, %v1425
        %v1427 = vpop.f32.mrb[0].mxu0
        %v1428 = vpop.f32.mrb[0].mxu0
        %v1429 = vpop.f32.mrb[0].mxu0
        %1430 = vdwg.mxu0
        %v1432 = vsel %vm1150, %v1381, 0
        %v1435 = vsel %vm1387, %v1147, 0
        %1437 = vmatprep.subr.bf16.mxu0 0
        %1438 = vmatpush1.bf16.msra.mxu0 %v1435
        %1439 = vmatprep.subr.bf16.mxu0 0
        %1440 = vmatpush1.bf16.msra.mxu0 0
        %1441 = vmatprep.subr.bf16.mxu0 0
        %1442 = vmatpush1.bf16.msra.mxu0 0
        %1443 = vmatprep.subr.bf16.mxu0 0
        %1444 = vmatpush1.bf16.msra.mxu0 0
        %1445 = vmatprep.subr.bf16.mxu0 0
        %1446 = vmatpush1.bf16.msra.mxu0 0
        %1447 = vmatprep.subr.bf16.mxu0 0
        %1448 = vmatpush1.bf16.msra.mxu0 0
        %1449 = vmatprep.subr.bf16.mxu0 0
        %1450 = vmatpush1.bf16.msra.mxu0 0
        %1451 = vmatprep.subr.bf16.mxu0 0
        %1452 = vmatpush1.bf16.msra.mxu0 0
        %1453 = vmatprep.subr.bf16.mxu0 0
        %1454 = vmatpush1.bf16.msra.mxu0 0
        %1455 = vmatprep.subr.bf16.mxu0 0
        %1456 = vmatpush1.bf16.msra.mxu0 0
        %1457 = vmatprep.subr.bf16.mxu0 0
        %1458 = vmatpush1.bf16.msra.mxu0 0
        %1459 = vmatprep.subr.bf16.mxu0 0
        %1460 = vmatpush1.bf16.msra.mxu0 0
        %1461 = vmatprep.subr.bf16.mxu0 0
        %1462 = vmatpush1.bf16.msra.mxu0 0
        %1463 = vmatprep.subr.bf16.mxu0 0
        %1464 = vmatpush1.bf16.msra.mxu0 0
        %1465 = vmatprep.subr.bf16.mxu0 0
        %1466 = vmatpush1.bf16.msra.mxu0 0
        %1467 = vmatprep.subr.bf16.mxu0 0
        %1468 = vmatpush1.bf16.msra.mxu0 0
        %1469 = vmatprep.mubr.bf16.mxu0 0
        %1470 = vmatmul.mubr.bf16.gmra.mrb[0].mxu0 %v1432
        %v1471 = vpop.f32.mrb[0].mxu0
        %v1472 = vadd.f32 0.0, %v1471
        %v1473 = vpop.f32.mrb[0].mxu0
        %v1474 = vpop.f32.mrb[0].mxu0
        %v1475 = vpop.f32.mrb[0].mxu0
        %1476 = vdwg.mxu0
        %v1478 = vsel %vm1150, %v1382, 0
        %v1481 = vsel %vm1387, %v1148, 0
        %1483 = vmatprep.subr.bf16.mxu0 0
        %1484 = vmatpush1.bf16.msra.mxu0 %v1481
        %1485 = vmatprep.subr.bf16.mxu0 0
        %1486 = vmatpush1.bf16.msra.mxu0 0
        %1487 = vmatprep.subr.bf16.mxu0 0
        %1488 = vmatpush1.bf16.msra.mxu0 0
        %1489 = vmatprep.subr.bf16.mxu0 0
        %1490 = vmatpush1.bf16.msra.mxu0 0
        %1491 = vmatprep.subr.bf16.mxu0 0
        %1492 = vmatpush1.bf16.msra.mxu0 0
        %1493 = vmatprep.subr.bf16.mxu0 0
        %1494 = vmatpush1.bf16.msra.mxu0 0
        %1495 = vmatprep.subr.bf16.mxu0 0
        %1496 = vmatpush1.bf16.msra.mxu0 0
        %1497 = vmatprep.subr.bf16.mxu0 0
        %1498 = vmatpush1.bf16.msra.mxu0 0
        %1499 = vmatprep.subr.bf16.mxu0 0
        %1500 = vmatpush1.bf16.msra.mxu0 0
        %1501 = vmatprep.subr.bf16.mxu0 0
        %1502 = vmatpush1.bf16.msra.mxu0 0
        %1503 = vmatprep.subr.bf16.mxu0 0
        %1504 = vmatpush1.bf16.msra.mxu0 0
        %1505 = vmatprep.subr.bf16.mxu0 0
        %1506 = vmatpush1.bf16.msra.mxu0 0
        %1507 = vmatprep.subr.bf16.mxu0 0
        %1508 = vmatpush1.bf16.msra.mxu0 0
        %1509 = vmatprep.subr.bf16.mxu0 0
        %1510 = vmatpush1.bf16.msra.mxu0 0
        %1511 = vmatprep.subr.bf16.mxu0 0
        %1512 = vmatpush1.bf16.msra.mxu0 0
        %1513 = vmatprep.subr.bf16.mxu0 0
        %1514 = vmatpush1.bf16.msra.mxu0 0
        %1515 = vmatprep.mubr.bf16.mxu0 0
        %1516 = vmatmul.mubr.bf16.gmra.mrb[0].mxu0 %v1478
        %v1517 = vpop.f32.mrb[0].mxu0
        %v1518 = vadd.f32 0.0, %v1517
        %v1519 = vpop.f32.mrb[0].mxu0
        %v1520 = vpop.f32.mrb[0].mxu0
        %v1521 = vpop.f32.mrb[0].mxu0
        %1522 = vdwg.mxu0
        %v1524 = vsel %vm1150, %v1383, 0
        %v1527 = vsel %vm1387, %v1149, 0
        %1529 = vmatprep.subr.bf16.mxu0 0
        %1530 = vmatpush1.bf16.msra.mxu0 %v1527
        %1531 = vmatprep.subr.bf16.mxu0 0
        %1532 = vmatpush1.bf16.msra.mxu0 0
        %1533 = vmatprep.subr.bf16.mxu0 0
        %1534 = vmatpush1.bf16.msra.mxu0 0
        %1535 = vmatprep.subr.bf16.mxu0 0
        %1536 = vmatpush1.bf16.msra.mxu0 0
        %1537 = vmatprep.subr.bf16.mxu0 0
        %1538 = vmatpush1.bf16.msra.mxu0 0
        %1539 = vmatprep.subr.bf16.mxu0 0
        %1540 = vmatpush1.bf16.msra.mxu0 0
        %1541 = vmatprep.subr.bf16.mxu0 0
        %1542 = vmatpush1.bf16.msra.mxu0 0
        %1543 = vmatprep.subr.bf16.mxu0 0
        %1544 = vmatpush1.bf16.msra.mxu0 0
        %1545 = vmatprep.subr.bf16.mxu0 0
        %1546 = vmatpush1.bf16.msra.mxu0 0
        %1547 = vmatprep.subr.bf16.mxu0 0
        %1548 = vmatpush1.bf16.msra.mxu0 0
        %1549 = vmatprep.subr.bf16.mxu0 0
        %1550 = vmatpush1.bf16.msra.mxu0 0
        %1551 = vmatprep.subr.bf16.mxu0 0
        %1552 = vmatpush1.bf16.msra.mxu0 0
        %1553 = vmatprep.subr.bf16.mxu0 0
        %1554 = vmatpush1.bf16.msra.mxu0 0
        %1555 = vmatprep.subr.bf16.mxu0 0
        %1556 = vmatpush1.bf16.msra.mxu0 0
        %1557 = vmatprep.subr.bf16.mxu0 0
        %1558 = vmatpush1.bf16.msra.mxu0 0
        %1559 = vmatprep.subr.bf16.mxu0 0
        %1560 = vmatpush1.bf16.msra.mxu0 0
        %1561 = vmatprep.mubr.bf16.mxu0 0
        %1562 = vmatmul.mubr.bf16.gmra.mrb[0].mxu0 %v1524
        %v1563 = vpop.f32.mrb[0].mxu0
        %v1564 = vadd.f32 0.0, %v1563
        %v1565 = vpop.f32.mrb[0].mxu0
        %v1566 = vpop.f32.mrb[0].mxu0
        %v1567 = vpop.f32.mrb[0].mxu0
        %1568 = vdwg.mxu0
        %v1569 = vrcp.pop %v1370
        %v1570 = vrcp.pop %v1373
        %v1571 = vrcp.pop %v1376
        %v1572 = vrcp.pop %v1379
        %v1573 = vmul.f32 %v1426, %v1569
        %v1574 = vmul.f32 %v1472, %v1570
        %v1575 = vmul.f32 %v1518, %v1571
        %v1576 = vmul.f32 %v1564, %v1572
        %v1577 = vcombine.low %v1573, %v1575
        %v1578 = vcombine.high %v1573, %v1575
        %v1580 = vunpack.c.l.s4 1983009808
        %v1581 = vunpack.c.0.s8 %v1580
        %v1582 = vlaneseq
        %v1583 = vshrl.u32 %v1582, 7
        %v1584 = vsub.s32 %v1581, %v1583
        %v1585 = vrot.slane %v1577, %v1584
        %v1587 = vunpack.c.l.s4 1983009808
        %v1588 = vunpack.c.0.s8 %v1587
        %v1589 = vlaneseq
        %v1590 = vshrl.u32 %v1589, 7
        %v1591 = vsub.s32 %v1588, %v1590
        %v1592 = vrot.slane %v1578, %v1591
        %v1593 = vcombine.low %v1574, %v1576
        %v1594 = vcombine.high %v1574, %v1576
        %v1596 = vunpack.c.l.s4 1983009808
        %v1597 = vunpack.c.0.s8 %v1596
        %v1598 = vlaneseq
        %v1599 = vshrl.u32 %v1598, 7
        %v1600 = vsub.s32 %v1597, %v1599
        %v1601 = vrot.slane %v1593, %v1600
        %v1603 = vunpack.c.l.s4 1983009808
        %v1604 = vunpack.c.0.s8 %v1603
        %v1605 = vlaneseq
        %v1606 = vshrl.u32 %v1605, 7
        %v1607 = vsub.s32 %v1604, %v1606
        %v1608 = vrot.slane %v1594, %v1607
        %v1609 = vcombine.low %v1585, %v1601
        %v1610 = vcombine.high %v1585, %v1601
        %v1612 = vunpack.c.l.s4 1934713408
        %v1613 = vunpack.c.0.s8 %v1612
        %v1614 = vlaneseq
        %v1615 = vshrl.u32 %v1614, 7
        %v1616 = vsub.s32 %v1613, %v1615
        %v1617 = vrot.slane %v1609, %v1616
        %v1619 = vunpack.c.l.s4 1934713408
        %v1620 = vunpack.c.0.s8 %v1619
        %v1621 = vlaneseq
        %v1622 = vshrl.u32 %v1621, 7
        %v1623 = vsub.s32 %v1620, %v1622
        %v1624 = vrot.slane %v1610, %v1623
        %v1625 = vcombine.low %v1592, %v1608
        %v1626 = vcombine.high %v1592, %v1608
        %v1628 = vunpack.c.l.s4 1934713408
        %v1629 = vunpack.c.0.s8 %v1628
        %v1630 = vlaneseq
        %v1631 = vshrl.u32 %v1630, 7
        %v1632 = vsub.s32 %v1629, %v1631
        %v1633 = vrot.slane %v1625, %v1632
        %v1635 = vunpack.c.l.s4 1934713408
        %v1636 = vunpack.c.0.s8 %v1635
        %v1637 = vlaneseq
        %v1638 = vshrl.u32 %v1637, 7
        %v1639 = vsub.s32 %v1636, %v1638
        %v1640 = vrot.slane %v1626, %v1639
        %v1641 = vcombine.high %v1617, 0.0
        %v1642 = vcombine.high %v1624, 0.0
        %v1643 = vcombine.high %v1633, 0.0
        %v1644 = vcombine.high %v1640, 0.0
        %v1645 = vcombine.low %v1617, %v1624
        %v1647 = vunpack.c.l.s4 1983009808
        %v1648 = vunpack.c.0.s8 %v1647
        %v1649 = vlaneseq
        %v1650 = vshrl.u32 %v1649, 7
        %v1651 = vsub.s32 %v1648, %v1650
        %v1652 = vrot.slane %v1645, %v1651
        %v1653 = vcombine.low %v1641, %v1642
        %v1655 = vunpack.c.l.s4 1983009808
        %v1656 = vunpack.c.0.s8 %v1655
        %v1657 = vlaneseq
        %v1658 = vshrl.u32 %v1657, 7
        %v1659 = vsub.s32 %v1656, %v1658
        %v1660 = vrot.slane %v1653, %v1659
        %v1661 = vcombine.low %v1633, %v1640
        %v1663 = vunpack.c.l.s4 1983009808
        %v1664 = vunpack.c.0.s8 %v1663
        %v1665 = vlaneseq
        %v1666 = vshrl.u32 %v1665, 7
        %v1667 = vsub.s32 %v1664, %v1666
        %v1668 = vrot.slane %v1661, %v1667
        %v1669 = vcombine.low %v1643, %v1644
        %v1671 = vunpack.c.l.s4 1983009808
        %v1672 = vunpack.c.0.s8 %v1671
        %v1673 = vlaneseq
        %v1674 = vshrl.u32 %v1673, 7
        %v1675 = vsub.s32 %v1672, %v1674
        %v1676 = vrot.slane %v1669, %v1675
        %v1677 = vcombine.low %v1652, %v1660
        %v1678 = vcombine.high %v1652, %v1660
        %v1680 = vunpack.c.l.s4 1934713408
        %v1681 = vunpack.c.0.s8 %v1680
        %v1682 = vlaneseq
        %v1683 = vshrl.u32 %v1682, 7
        %v1684 = vsub.s32 %v1681, %v1683
        %v1685 = vrot.slane %v1677, %v1684
        %v1687 = vunpack.c.l.s4 1934713408
        %v1688 = vunpack.c.0.s8 %v1687
        %v1689 = vlaneseq
        %v1690 = vshrl.u32 %v1689, 7
        %v1691 = vsub.s32 %v1688, %v1690
        %v1692 = vrot.slane %v1678, %v1691
        %v1693 = vcombine.low %v1668, %v1676
        %v1694 = vcombine.high %v1668, %v1676
        %v1696 = vunpack.c.l.s4 1934713408
        %v1697 = vunpack.c.0.s8 %v1696
        %v1698 = vlaneseq
        %v1699 = vshrl.u32 %v1698, 7
        %v1700 = vsub.s32 %v1697, %v1699
        %v1701 = vrot.slane %v1693, %v1700
        %v1703 = vunpack.c.l.s4 1934713408
        %v1704 = vunpack.c.0.s8 %v1703
        %v1705 = vlaneseq
        %v1706 = vshrl.u32 %v1705, 7
        %v1707 = vsub.s32 %v1704, %v1706
        %v1708 = vrot.slane %v1694, %v1707
        %v1709 = vcombine.low %v1685, %v1701
        %v1710 = vcombine.high %v1685, %v1701
        %v1711 = vcombine.low %v1692, %v1708
        %v1712 = vcombine.high %v1692, %v1708
        %1714 = vrot.lane.b32.xlu0 %v1710, 8
        %v1715 = vpop.permute.xlu0 %1714
        %1718 = vrot.lane.b32.xlu0 %v1711, 16
        %v1719 = vpop.permute.xlu0 %1718
        %1722 = vrot.lane.b32.xlu0 %v1712, 24
        %v1723 = vpop.permute.xlu0 %1722
        %v1725 = vsel %vm1150, %v1709, %v1715
        %vm1726 = vcmask 130048
        %v1727 = vsel %vm1726, %v1725, %v1719
        %vm1728 = vcmask 195584
        %v1729 = vsel %vm1728, %v1727, %v1723
        %v1730 = vpack.c.bf16 %v1729, %v1729
        %v1731 = vld [vmem:[%s8] sm:$0xf]
        %v1732 = vld [vmem:[%s8 + $0x4] sm:$0xf]
        %v1733 = vld [vmem:[%s8 + $0x8] sm:$0xf]
        %v1734 = vld [vmem:[%s8 + $0xc] sm:$0xf]
        %v1735 = vld [vmem:[#allocation7] sm:$0x1]
        %v1737 = vlaneseq
        %v1738 = vshrl.u32 %v1737, 7
        %v1739 = vsub.s32 0, %v1738
        %v1740 = vrot.slane %v1735, %v1739
        %v1746 = vunpack.c.l.b16 %v1731
        %v1747 = vunpack.c.l.b16 %v1732
        %v1748 = vunpack.c.l.b16 %v1733
        %v1749 = vunpack.c.l.b16 %v1734
        %v1750 = vpack.c.b16 %v1747, %v1746
        %v1751 = vpack.c.b16 %v1749, %v1748
        %v1755 = vsel %vm528, %v1730, 0
        %1757 = vmatprep.subr.bf16.mxu0 0
        %1758 = vmatpush1.bf16.msra.mxu0 %v1750
        %1759 = vmatprep.subr.bf16.mxu0 0
        %1760 = vmatpush1.bf16.msra.mxu0 %v1751
        %1761 = vmatprep.subr.bf16.mxu0 0
        %1762 = vmatpush1.bf16.msra.mxu0 0
        %1763 = vmatprep.subr.bf16.mxu0 0
        %1764 = vmatpush1.bf16.msra.mxu0 0
        %1765 = vmatprep.subr.bf16.mxu0 0
        %1766 = vmatpush1.bf16.msra.mxu0 0
        %1767 = vmatprep.subr.bf16.mxu0 0
        %1768 = vmatpush1.bf16.msra.mxu0 0
        %1769 = vmatprep.subr.bf16.mxu0 0
        %1770 = vmatpush1.bf16.msra.mxu0 0
        %1771 = vmatprep.subr.bf16.mxu0 0
        %1772 = vmatpush1.bf16.msra.mxu0 0
        %1773 = vmatprep.subr.bf16.mxu0 0
        %1774 = vmatpush1.bf16.msra.mxu0 0
        %1775 = vmatprep.subr.bf16.mxu0 0
        %1776 = vmatpush1.bf16.msra.mxu0 0
        %1777 = vmatprep.subr.bf16.mxu0 0
        %1778 = vmatpush1.bf16.msra.mxu0 0
        %1779 = vmatprep.subr.bf16.mxu0 0
        %1780 = vmatpush1.bf16.msra.mxu0 0
        %1781 = vmatprep.subr.bf16.mxu0 0
        %1782 = vmatpush1.bf16.msra.mxu0 0
        %1783 = vmatprep.subr.bf16.mxu0 0
        %1784 = vmatpush1.bf16.msra.mxu0 0
        %1785 = vmatprep.subr.bf16.mxu0 0
        %1786 = vmatpush1.bf16.msra.mxu0 0
        %1787 = vmatprep.subr.bf16.mxu0 0
        %1788 = vmatpush1.bf16.msra.mxu0 0
        %1789 = vmatprep.mubr.bf16.mxu0 0
        %1790 = vmatmul.mubr.bf16.gmra.mrb[0].mxu0 %v1755
        %v1791 = vpop.f32.mrb[0].mxu0
        %v1792 = vadd.f32 %v1740, %v1791
        %v1793 = vpop.f32.mrb[0].mxu0
        %v1794 = vpop.f32.mrb[0].mxu0
        %v1795 = vpop.f32.mrb[0].mxu0
        %1796 = vdwg.mxu0
        %v1797 = vadd.f32 %v1792, %v503
        %v1798 = vld [vmem:[#allocation9] sm:$0x1]
        %v1799 = vld [vmem:[#allocation10] sm:$0x1]
        %v1800 = vsel %vm528, %v1797, 0.0
        %1801 = vadd.xlane.f32.xlu0 %v1800
        %v1802 = vpop.xlane.xlu0 %1801
        %v1803 = vrcp.pop 32.0
        %v1804 = vmul.f32 %v1802, %v1803
        %v1805 = vsub.f32 %v1797, %v1804
        %v1806 = vmul.f32 %v1805, %v1805
        %v1807 = vsel %vm528, %v1806, 0.0
        %1808 = vadd.xlane.f32.xlu0 %v1807
        %v1809 = vpop.xlane.xlu0 %1808
        %v1810 = vmul.f32 %v1809, %v1803
        %v1811 = vadd.f32 %v1810, 1e-05
        %v1812 = vrsqrt.pop %v1811
        %v1813 = vmul.f32 %v1805, %v1812
        %v1815 = vlaneseq
        %v1816 = vshrl.u32 %v1815, 7
        %v1817 = vsub.s32 0, %v1816
        %v1818 = vrot.slane %v1798, %v1817
        %v1820 = vmul.f32 %v1813, %v1818
        %v1822 = vlaneseq
        %v1823 = vshrl.u32 %v1822, 7
        %v1824 = vsub.s32 0, %v1823
        %v1825 = vrot.slane %v1799, %v1824
        %v1827 = vadd.f32 %v1820, %v1825
        %v1828 = vpack.c.bf16 %v1827, %v1827
        %vm1829 = vcmask 257024
        %1830 = vst.msk [vmem:[%s501] sm:$0xf] %vm1829, %v1828
        %p1831 = scmp.lt.s32.totalorder %s27, 1
        %s1832 = scalar_select %p1831, %s27, 1
        %s1833 = smul.addr %s1832, 4
        %s1834 = scalar_lea.vmem %s12, %s1833
        // Predicated region
        $region93: #{pallas_decoder_block.3} parent=67 // pred_check
          %p1835 = pneg %p307
        $region94: #{pallas_decoder_block.3} parent=67 // pred_check_branch
          %1837 = sbr.rel (%p1835) target = $region96
        $region95: #{pallas_decoder_block.3} parent=67 // pred_region
          _
        $region96: #{pallas_decoder_block.3} parent=67 // pred_fallthru
          _
      $region68: #{pallas_decoder_block.3} parent=5 // pred_fallthru
        _
      %p1838 = scmp.le.s32.totalorder 2, %s22
      // Predicated region
      $region97: #{pallas_decoder_block.3} parent=5 // pred_check
        %p1839 = pneg %p1838
      $region98: #{pallas_decoder_block.3} parent=5 // pred_check_branch
        %1841 = sbr.rel (%p1839) target = $region100
      $region99: #{pallas_decoder_block.3} parent=5 // pred_region
        %s1842 = ssub.s32 %s22, 2
        // Predicated region
        $region101: #{pallas_decoder_block.3} parent=99 // pred_check
          %p1843 = pneg %p313
        $region102: #{pallas_decoder_block.3} parent=99 // pred_check_branch
          %1845 = sbr.rel (%p1843) target = $region104
        $region103: #{pallas_decoder_block.3} parent=99 // pred_region
          %p1846 = scmp.lt.s32.totalorder %s28, 1
          %s1847 = scalar_select %p1846, %s28, 1
          %s1848 = smul.addr %s1847, 4
          %s1849 = scalar_lea.vmem %s12, %s1848
        $region104: #{pallas_decoder_block.3} parent=99 // pred_fallthru
          _
      $region100: #{pallas_decoder_block.3} parent=5 // pred_fallthru
        _
    $region6: #{pallas_decoder_block.3} parent=1 // loop_footer
      %s26 = sadd.s32 1, %s22
    $region7: #{pallas_decoder_block.3} parent=1 // loop_footer_branch
      %21 = sbr.rel target = $region3
    $region8: #{pallas_decoder_block.3} parent=1 // loop_exit
      _
    %1850 = vsyncpa [#allocation3], 1
    %s1851 = scalar_lea.sflag [#allocation3], 1
    %1852 = vsyncpa %s1851, 1
    %1853 = vsyncpa [#allocation5], 1
    %1854 = vsyncpa [#allocation8], 1
    %1855 = vsyncpa [#allocation11], 1

// kernel: pallas_decoder_block.4
$region0: #{pallas_decoder_block.4}
  #allocation0 [shape = 'u32[]', space=smem, size = 0x4, offset = 0x4, fixed_abs, tag = 'smem constant byte address 0x4 - core index']
  #allocation1 [shape = 'u32[144,128]{1,0:T(1,128)}', space=vmem, size = 0x12000, scoped, tag = 'internal scratch']
  %s0 = inlined_call_operand.vmem [shape: bf16[2,8,32], index: 0, kind: input, shape index: {}]
  %s1 = inlined_call_operand.vmem [shape: f32[2,8,32], index: 1, kind: input, shape index: {}]
  %s2 = inlined_call_operand.vmem [shape: f32[2,8,32], index: 2, kind: input, shape index: {}]
  %s3 = inlined_call_operand.vmem [shape: s8[2,8,8], index: 3, kind: input, shape index: {}]
  %s4 = inlined_call_operand.vmem [shape: bf16[32,32], index: 4, kind: input, shape index: {}]
  %s5 = inlined_call_operand.vmem [shape: f32[1,32], index: 5, kind: input, shape index: {}]
  %s6 = inlined_call_operand.vmem [shape: bf16[32,32], index: 6, kind: input, shape index: {}]
  %s7 = inlined_call_operand.vmem [shape: f32[1,32], index: 7, kind: input, shape index: {}]
  %s8 = inlined_call_operand.vmem [shape: bf16[32,32], index: 8, kind: input, shape index: {}]
  %s9 = inlined_call_operand.vmem [shape: f32[1,32], index: 9, kind: input, shape index: {}]
  %s10 = inlined_call_operand.vmem [shape: bf16[32,32], index: 10, kind: input, shape index: {}]
  %s11 = inlined_call_operand.vmem [shape: f32[1,32], index: 11, kind: input, shape index: {}]
  %s12 = inlined_call_operand.vmem [shape: f32[1,32], index: 12, kind: input, shape index: {}]
  %s13 = inlined_call_operand.vmem [shape: f32[1,32], index: 13, kind: input, shape index: {}]
  %s14 = inlined_call_operand.vmem [shape: bf16[2,8,32], index: 14, kind: output, shape index: {}]
  %s15 = sld [smem:[#allocation0]]
  $region89: #{pallas_decoder_block.4} parent=0
    _
  %s17 = ssub.s32 1, %s15
  %s18 = scalar_select 0, %s17, %s15
  loop: start=0, step=1, limit=4
  $region2: #{pallas_decoder_block.4} parent=0 // loop_pre_header
    _
  $region3: #{pallas_decoder_block.4} parent=0 // loop_header
    %s20 = sphi 0, %s24
    %p21 = scmp.ge.s32.totalorder %s20, 4
    %s30 = sphi 0, %s32
    %s33 = sphi 0, %s30
    %s34 = sphi 0, %s33
    %s50 = sphi 0, %s34
    %s56 = sphi 0, %s58
    %s59 = sphi 0, %s56
    %s60 = sphi 0, %s59
    %s76 = sphi 0, %s60
    %s82 = sphi 0, %s84
    %s85 = sphi 0, %s82
    %s86 = sphi 0, %s85
    %s102 = sphi 0, %s86
    %s108 = sphi 0, %s110
    %s111 = sphi 0, %s108
    %s112 = sphi 0, %s111
    %s128 = sphi 0, %s112
    %s132 = sphi 0, %s132
    %s134 = sphi 0, %s132
    %s135 = sphi 0, %s134
    %s149 = sphi 0, %s135
    %s153 = sphi 0, %s153
    %s155 = sphi 0, %s153
    %s156 = sphi 0, %s155
    %s170 = sphi 0, %s156
    %s174 = sphi 0, %s174
    %s176 = sphi 0, %s174
    %s177 = sphi 0, %s176
    %s191 = sphi 0, %s177
    %s195 = sphi 0, %s195
    %s197 = sphi 0, %s195
    %s198 = sphi 0, %s197
    %s212 = sphi 0, %s198
    %s216 = sphi 0, %s216
    %s218 = sphi 0, %s216
    %s219 = sphi 0, %s218
    %s233 = sphi 0, %s219
    %s237 = sphi 0, %s237
    %s239 = sphi 0, %s237
    %s240 = sphi 0, %s239
    %s254 = sphi 0, %s240
    %s258 = sphi 0, %s258
    %s260 = sphi 0, %s258
    %s261 = sphi 0, %s260
    %s275 = sphi 0, %s261
    %s279 = sphi 0, %s279
    %s281 = sphi 0, %s279
    %s282 = sphi 0, %s281
    %s296 = sphi 0, %s282
    %s300 = sphi 0, %s300
    %s302 = sphi 0, %s300
    %s303 = sphi 0, %s302
    %s317 = sphi 0, %s303
    %s321 = sphi 0, %s321
    %s323 = sphi 0, %s321
    %s324 = sphi 0, %s323
    %s338 = sphi 0, %s324
    %s344 = sphi 0, %s346
    %s347 = sphi 0, %s344
    %s348 = sphi 0, %s347
    %s364 = sphi 0, %s348
  $region4: #{pallas_decoder_block.4} parent=0 // loop_header_branch
    %23 = sbr.rel (%p21) target = $region8
  $region5: #{pallas_decoder_block.4} parent=0 // loop_body
    %s25 = ssub.s32 %s20, 1
    %s26 = ssub.s32 %s20, 2
    %s27 = sadd.s32 %s20, 1
    %s28 = ssub.s32 %s20, %s27
    %p29 = scmp.eq.s32.totalorder %s28, 0
    %s31 = sadd.s32 %s30, 1
    %s32 = scalar_select %p29, %s30, %s31
    %p35 = pneg %p29
    %p36 = scmp.eq.s32.totalorder %s20, 1
    %p37 = por %p35, %p36
    %p38 = scmp.ne.s32.totalorder %s30, %s33
    %p39 = scmp.eq.s32.totalorder %s20, 0
    %p40 = por %p38, %p39
    %p41 = scmp.ne.s32.totalorder %s30, %s33
    %p42 = scmp.eq.s32.totalorder %s25, 1
    %p43 = por %p41, %p42
    %p44 = scmp.ne.s32.totalorder %s33, %s34
    %p45 = scmp.eq.s32.totalorder %s25, 0
    %p46 = por %p44, %p45
    %p47 = scmp.ne.s32.totalorder %s33, %s34
    %p48 = scmp.eq.s32.totalorder %s26, 1
    %p49 = por %p47, %p48
    %p51 = scmp.ne.s32.totalorder %s34, %s50
    %p52 = scmp.eq.s32.totalorder %s26, 0
    %p53 = por %p51, %p52
    %s54 = ssub.s32 %s20, %s27
    %p55 = scmp.eq.s32.totalorder %s54, 0
    %s57 = sadd.s32 %s56, 1
    %s58 = scalar_select %p55, %s56, %s57
    %p61 = pneg %p55
    %p62 = scmp.eq.s32.totalorder %s20, 1
    %p63 = por %p61, %p62
    %p64 = scmp.ne.s32.totalorder %s56, %s59
    %p65 = scmp.eq.s32.totalorder %s20, 0
    %p66 = por %p64, %p65
    %p67 = scmp.ne.s32.totalorder %s56, %s59
    %p68 = scmp.eq.s32.totalorder %s25, 1
    %p69 = por %p67, %p68
    %p70 = scmp.ne.s32.totalorder %s59, %s60
    %p71 = scmp.eq.s32.totalorder %s25, 0
    %p72 = por %p70, %p71
    %p73 = scmp.ne.s32.totalorder %s59, %s60
    %p74 = scmp.eq.s32.totalorder %s26, 1
    %p75 = por %p73, %p74
    %p77 = scmp.ne.s32.totalorder %s60, %s76
    %p78 = scmp.eq.s32.totalorder %s26, 0
    %p79 = por %p77, %p78
    %s80 = ssub.s32 %s20, %s27
    %p81 = scmp.eq.s32.totalorder %s80, 0
    %s83 = sadd.s32 %s82, 1
    %s84 = scalar_select %p81, %s82, %s83
    %p87 = pneg %p81
    %p88 = scmp.eq.s32.totalorder %s20, 1
    %p89 = por %p87, %p88
    %p90 = scmp.ne.s32.totalorder %s82, %s85
    %p91 = scmp.eq.s32.totalorder %s20, 0
    %p92 = por %p90, %p91
    %p93 = scmp.ne.s32.totalorder %s82, %s85
    %p94 = scmp.eq.s32.totalorder %s25, 1
    %p95 = por %p93, %p94
    %p96 = scmp.ne.s32.totalorder %s85, %s86
    %p97 = scmp.eq.s32.totalorder %s25, 0
    %p98 = por %p96, %p97
    %p99 = scmp.ne.s32.totalorder %s85, %s86
    %p100 = scmp.eq.s32.totalorder %s26, 1
    %p101 = por %p99, %p100
    %p103 = scmp.ne.s32.totalorder %s86, %s102
    %p104 = scmp.eq.s32.totalorder %s26, 0
    %p105 = por %p103, %p104
    %s106 = ssub.s32 %s20, %s27
    %p107 = scmp.eq.s32.totalorder %s106, 0
    %s109 = sadd.s32 %s108, 1
    %s110 = scalar_select %p107, %s108, %s109
    %p113 = pneg %p107
    %p114 = scmp.eq.s32.totalorder %s20, 1
    %p115 = por %p113, %p114
    %p116 = scmp.ne.s32.totalorder %s108, %s111
    %p117 = scmp.eq.s32.totalorder %s20, 0
    %p118 = por %p116, %p117
    %p119 = scmp.ne.s32.totalorder %s108, %s111
    %p120 = scmp.eq.s32.totalorder %s25, 1
    %p121 = por %p119, %p120
    %p122 = scmp.ne.s32.totalorder %s111, %s112
    %p123 = scmp.eq.s32.totalorder %s25, 0
    %p124 = por %p122, %p123
    %p125 = scmp.ne.s32.totalorder %s111, %s112
    %p126 = scmp.eq.s32.totalorder %s26, 1
    %p127 = por %p125, %p126
    %p129 = scmp.ne.s32.totalorder %s112, %s128
    %p130 = scmp.eq.s32.totalorder %s26, 0
    %p131 = por %p129, %p130
    %s133 = sadd.s32 %s132, 1
    %p136 = scmp.eq.s32.totalorder %s20, 1
    %p137 = scmp.ne.s32.totalorder %s132, %s134
    %p138 = scmp.eq.s32.totalorder %s20, 0
    %p139 = por %p137, %p138
    %p140 = scmp.ne.s32.totalorder %s132, %s134
    %p141 = scmp.eq.s32.totalorder %s25, 1
    %p142 = por %p140, %p141
    %p143 = scmp.ne.s32.totalorder %s134, %s135
    %p144 = scmp.eq.s32.totalorder %s25, 0
    %p145 = por %p143, %p144
    %p146 = scmp.ne.s32.totalorder %s134, %s135
    %p147 = scmp.eq.s32.totalorder %s26, 1
    %p148 = por %p146, %p147
    %p150 = scmp.ne.s32.totalorder %s135, %s149
    %p151 = scmp.eq.s32.totalorder %s26, 0
    %p152 = por %p150, %p151
    %s154 = sadd.s32 %s153, 1
    %p157 = scmp.eq.s32.totalorder %s20, 1
    %p158 = scmp.ne.s32.totalorder %s153, %s155
    %p159 = scmp.eq.s32.totalorder %s20, 0
    %p160 = por %p158, %p159
    %p161 = scmp.ne.s32.totalorder %s153, %s155
    %p162 = scmp.eq.s32.totalorder %s25, 1
    %p163 = por %p161, %p162
    %p164 = scmp.ne.s32.totalorder %s155, %s156
    %p165 = scmp.eq.s32.totalorder %s25, 0
    %p166 = por %p164, %p165
    %p167 = scmp.ne.s32.totalorder %s155, %s156
    %p168 = scmp.eq.s32.totalorder %s26, 1
    %p169 = por %p167, %p168
    %p171 = scmp.ne.s32.totalorder %s156, %s170
    %p172 = scmp.eq.s32.totalorder %s26, 0
    %p173 = por %p171, %p172
    %s175 = sadd.s32 %s174, 1
    %p178 = scmp.eq.s32.totalorder %s20, 1
    %p179 = scmp.ne.s32.totalorder %s174, %s176
    %p180 = scmp.eq.s32.totalorder %s20, 0
    %p181 = por %p179, %p180
    %p182 = scmp.ne.s32.totalorder %s174, %s176
    %p183 = scmp.eq.s32.totalorder %s25, 1
    %p184 = por %p182, %p183
    %p185 = scmp.ne.s32.totalorder %s176, %s177
    %p186 = scmp.eq.s32.totalorder %s25, 0
    %p187 = por %p185, %p186
    %p188 = scmp.ne.s32.totalorder %s176, %s177
    %p189 = scmp.eq.s32.totalorder %s26, 1
    %p190 = por %p188, %p189
    %p192 = scmp.ne.s32.totalorder %s177, %s191
    %p193 = scmp.eq.s32.totalorder %s26, 0
    %p194 = por %p192, %p193
    %s196 = sadd.s32 %s195, 1
    %p199 = scmp.eq.s32.totalorder %s20, 1
    %p200 = scmp.ne.s32.totalorder %s195, %s197
    %p201 = scmp.eq.s32.totalorder %s20, 0
    %p202 = por %p200, %p201
    %p203 = scmp.ne.s32.totalorder %s195, %s197
    %p204 = scmp.eq.s32.totalorder %s25, 1
    %p205 = por %p203, %p204
    %p206 = scmp.ne.s32.totalorder %s197, %s198
    %p207 = scmp.eq.s32.totalorder %s25, 0
    %p208 = por %p206, %p207
    %p209 = scmp.ne.s32.totalorder %s197, %s198
    %p210 = scmp.eq.s32.totalorder %s26, 1
    %p211 = por %p209, %p210
    %p213 = scmp.ne.s32.totalorder %s198, %s212
    %p214 = scmp.eq.s32.totalorder %s26, 0
    %p215 = por %p213, %p214
    %s217 = sadd.s32 %s216, 1
    %p220 = scmp.eq.s32.totalorder %s20, 1
    %p221 = scmp.ne.s32.totalorder %s216, %s218
    %p222 = scmp.eq.s32.totalorder %s20, 0
    %p223 = por %p221, %p222
    %p224 = scmp.ne.s32.totalorder %s216, %s218
    %p225 = scmp.eq.s32.totalorder %s25, 1
    %p226 = por %p224, %p225
    %p227 = scmp.ne.s32.totalorder %s218, %s219
    %p228 = scmp.eq.s32.totalorder %s25, 0
    %p229 = por %p227, %p228
    %p230 = scmp.ne.s32.totalorder %s218, %s219
    %p231 = scmp.eq.s32.totalorder %s26, 1
    %p232 = por %p230, %p231
    %p234 = scmp.ne.s32.totalorder %s219, %s233
    %p235 = scmp.eq.s32.totalorder %s26, 0
    %p236 = por %p234, %p235
    %s238 = sadd.s32 %s237, 1
    %p241 = scmp.eq.s32.totalorder %s20, 1
    %p242 = scmp.ne.s32.totalorder %s237, %s239
    %p243 = scmp.eq.s32.totalorder %s20, 0
    %p244 = por %p242, %p243
    %p245 = scmp.ne.s32.totalorder %s237, %s239
    %p246 = scmp.eq.s32.totalorder %s25, 1
    %p247 = por %p245, %p246
    %p248 = scmp.ne.s32.totalorder %s239, %s240
    %p249 = scmp.eq.s32.totalorder %s25, 0
    %p250 = por %p248, %p249
    %p251 = scmp.ne.s32.totalorder %s239, %s240
    %p252 = scmp.eq.s32.totalorder %s26, 1
    %p253 = por %p251, %p252
    %p255 = scmp.ne.s32.totalorder %s240, %s254
    %p256 = scmp.eq.s32.totalorder %s26, 0
    %p257 = por %p255, %p256
    %s259 = sadd.s32 %s258, 1
    %p262 = scmp.eq.s32.totalorder %s20, 1
    %p263 = scmp.ne.s32.totalorder %s258, %s260
    %p264 = scmp.eq.s32.totalorder %s20, 0
    %p265 = por %p263, %p264
    %p266 = scmp.ne.s32.totalorder %s258, %s260
    %p267 = scmp.eq.s32.totalorder %s25, 1
    %p268 = por %p266, %p267
    %p269 = scmp.ne.s32.totalorder %s260, %s261
    %p270 = scmp.eq.s32.totalorder %s25, 0
    %p271 = por %p269, %p270
    %p272 = scmp.ne.s32.totalorder %s260, %s261
    %p273 = scmp.eq.s32.totalorder %s26, 1
    %p274 = por %p272, %p273
    %p276 = scmp.ne.s32.totalorder %s261, %s275
    %p277 = scmp.eq.s32.totalorder %s26, 0
    %p278 = por %p276, %p277
    %s280 = sadd.s32 %s279, 1
    %p283 = scmp.eq.s32.totalorder %s20, 1
    %p284 = scmp.ne.s32.totalorder %s279, %s281
    %p285 = scmp.eq.s32.totalorder %s20, 0
    %p286 = por %p284, %p285
    %p287 = scmp.ne.s32.totalorder %s279, %s281
    %p288 = scmp.eq.s32.totalorder %s25, 1
    %p289 = por %p287, %p288
    %p290 = scmp.ne.s32.totalorder %s281, %s282
    %p291 = scmp.eq.s32.totalorder %s25, 0
    %p292 = por %p290, %p291
    %p293 = scmp.ne.s32.totalorder %s281, %s282
    %p294 = scmp.eq.s32.totalorder %s26, 1
    %p295 = por %p293, %p294
    %p297 = scmp.ne.s32.totalorder %s282, %s296
    %p298 = scmp.eq.s32.totalorder %s26, 0
    %p299 = por %p297, %p298
    %s301 = sadd.s32 %s300, 1
    %p304 = scmp.eq.s32.totalorder %s20, 1
    %p305 = scmp.ne.s32.totalorder %s300, %s302
    %p306 = scmp.eq.s32.totalorder %s20, 0
    %p307 = por %p305, %p306
    %p308 = scmp.ne.s32.totalorder %s300, %s302
    %p309 = scmp.eq.s32.totalorder %s25, 1
    %p310 = por %p308, %p309
    %p311 = scmp.ne.s32.totalorder %s302, %s303
    %p312 = scmp.eq.s32.totalorder %s25, 0
    %p313 = por %p311, %p312
    %p314 = scmp.ne.s32.totalorder %s302, %s303
    %p315 = scmp.eq.s32.totalorder %s26, 1
    %p316 = por %p314, %p315
    %p318 = scmp.ne.s32.totalorder %s303, %s317
    %p319 = scmp.eq.s32.totalorder %s26, 0
    %p320 = por %p318, %p319
    %s322 = sadd.s32 %s321, 1
    %p325 = scmp.eq.s32.totalorder %s20, 1
    %p326 = scmp.ne.s32.totalorder %s321, %s323
    %p327 = scmp.eq.s32.totalorder %s20, 0
    %p328 = por %p326, %p327
    %p329 = scmp.ne.s32.totalorder %s321, %s323
    %p330 = scmp.eq.s32.totalorder %s25, 1
    %p331 = por %p329, %p330
    %p332 = scmp.ne.s32.totalorder %s323, %s324
    %p333 = scmp.eq.s32.totalorder %s25, 0
    %p334 = por %p332, %p333
    %p335 = scmp.ne.s32.totalorder %s323, %s324
    %p336 = scmp.eq.s32.totalorder %s26, 1
    %p337 = por %p335, %p336
    %p339 = scmp.ne.s32.totalorder %s324, %s338
    %p340 = scmp.eq.s32.totalorder %s26, 0
    %p341 = por %p339, %p340
    %s342 = ssub.s32 %s20, %s27
    %p343 = scmp.eq.s32.totalorder %s342, 0
    %s345 = sadd.s32 %s344, 1
    %s346 = scalar_select %p343, %s344, %s345
    %p349 = pneg %p343
    %p350 = scmp.eq.s32.totalorder %s20, 1
    %p351 = por %p349, %p350
    %p352 = scmp.ne.s32.totalorder %s344, %s347
    %p353 = scmp.eq.s32.totalorder %s20, 0
    %p354 = por %p352, %p353
    %p355 = scmp.ne.s32.totalorder %s344, %s347
    %p356 = scmp.eq.s32.totalorder %s25, 1
    %p357 = por %p355, %p356
    %p358 = scmp.ne.s32.totalorder %s347, %s348
    %p359 = scmp.eq.s32.totalorder %s25, 0
    %p360 = por %p358, %p359
    %p361 = scmp.ne.s32.totalorder %s347, %s348
    %p362 = scmp.eq.s32.totalorder %s26, 1
    %p363 = por %p361, %p362
    %p365 = scmp.ne.s32.totalorder %s348, %s364
    %p366 = scmp.eq.s32.totalorder %s26, 0
    %p367 = por %p365, %p366
    %p368 = scmp.le.s32.totalorder 1, %s20
    %p369 = scmp.lt.s32.totalorder %s20, 3
    %p370 = pnand %p368, %p369
    %p371 = pneg %p370
    // Predicated region
    $region9: #{pallas_decoder_block.4} parent=5 // pred_check
      _
    $region10: #{pallas_decoder_block.4} parent=5 // pred_check_branch
      %373 = sbr.rel (%p370) target = $region12
    $region11: #{pallas_decoder_block.4} parent=5 // pred_region
      %s374 = ssub.s32 %s20, 1
      // Predicated region
      $region13: #{pallas_decoder_block.4} parent=11 // pred_check
        %p375 = pneg %p145
      $region14: #{pallas_decoder_block.4} parent=11 // pred_check_branch
        %377 = sbr.rel (%p375) target = $region16
      $region15: #{pallas_decoder_block.4} parent=11 // pred_region
        _
      $region16: #{pallas_decoder_block.4} parent=11 // pred_fallthru
        _
      // Predicated region
      $region17: #{pallas_decoder_block.4} parent=11 // pred_check
        %p378 = pneg %p166
      $region18: #{pallas_decoder_block.4} parent=11 // pred_check_branch
        %380 = sbr.rel (%p378) target = $region20
      $region19: #{pallas_decoder_block.4} parent=11 // pred_region
        _
      $region20: #{pallas_decoder_block.4} parent=11 // pred_fallthru
        _
      // Predicated region
      $region21: #{pallas_decoder_block.4} parent=11 // pred_check
        %p381 = pneg %p187
      $region22: #{pallas_decoder_block.4} parent=11 // pred_check_branch
        %383 = sbr.rel (%p381) target = $region24
      $region23: #{pallas_decoder_block.4} parent=11 // pred_region
        _
      $region24: #{pallas_decoder_block.4} parent=11 // pred_fallthru
        _
      // Predicated region
      $region25: #{pallas_decoder_block.4} parent=11 // pred_check
        %p384 = pneg %p208
      $region26: #{pallas_decoder_block.4} parent=11 // pred_check_branch
        %386 = sbr.rel (%p384) target = $region28
      $region27: #{pallas_decoder_block.4} parent=11 // pred_region
        _
      $region28: #{pallas_decoder_block.4} parent=11 // pred_fallthru
        _
      // Predicated region
      $region29: #{pallas_decoder_block.4} parent=11 // pred_check
        %p387 = pneg %p229
      $region30: #{pallas_decoder_block.4} parent=11 // pred_check_branch
        %389 = sbr.rel (%p387) target = $region32
      $region31: #{pallas_decoder_block.4} parent=11 // pred_region
        _
      $region32: #{pallas_decoder_block.4} parent=11 // pred_fallthru
        _
      // Predicated region
      $region33: #{pallas_decoder_block.4} parent=11 // pred_check
        %p390 = pneg %p250
      $region34: #{pallas_decoder_block.4} parent=11 // pred_check_branch
        %392 = sbr.rel (%p390) target = $region36
      $region35: #{pallas_decoder_block.4} parent=11 // pred_region
        _
      $region36: #{pallas_decoder_block.4} parent=11 // pred_fallthru
        _
      // Predicated region
      $region37: #{pallas_decoder_block.4} parent=11 // pred_check
        %p393 = pneg %p271
      $region38: #{pallas_decoder_block.4} parent=11 // pred_check_branch
        %395 = sbr.rel (%p393) target = $region40
      $region39: #{pallas_decoder_block.4} parent=11 // pred_region
        _
      $region40: #{pallas_decoder_block.4} parent=11 // pred_fallthru
        _
      // Predicated region
      $region41: #{pallas_decoder_block.4} parent=11 // pred_check
        %p396 = pneg %p292
      $region42: #{pallas_decoder_block.4} parent=11 // pred_check_branch
        %398 = sbr.rel (%p396) target = $region44
      $region43: #{pallas_decoder_block.4} parent=11 // pred_region
        _
      $region44: #{pallas_decoder_block.4} parent=11 // pred_fallthru
        _
      // Predicated region
      $region45: #{pallas_decoder_block.4} parent=11 // pred_check
        %p399 = pneg %p313
      $region46: #{pallas_decoder_block.4} parent=11 // pred_check_branch
        %401 = sbr.rel (%p399) target = $region48
      $region47: #{pallas_decoder_block.4} parent=11 // pred_region
        _
      $region48: #{pallas_decoder_block.4} parent=11 // pred_fallthru
        _
      // Predicated region
      $region49: #{pallas_decoder_block.4} parent=11 // pred_check
        %p402 = pneg %p334
      $region50: #{pallas_decoder_block.4} parent=11 // pred_check_branch
        %404 = sbr.rel (%p402) target = $region52
      $region51: #{pallas_decoder_block.4} parent=11 // pred_region
        _
      $region52: #{pallas_decoder_block.4} parent=11 // pred_fallthru
        _
    $region12: #{pallas_decoder_block.4} parent=5 // pred_fallthru
      _
    %p405 = scmp.lt.s32.totalorder %s20, 2
    // Predicated region
    $region53: #{pallas_decoder_block.4} parent=5 // pred_check
      %p406 = pneg %p405
    $region54: #{pallas_decoder_block.4} parent=5 // pred_check_branch
      %408 = sbr.rel (%p406) target = $region56
    $region55: #{pallas_decoder_block.4} parent=5 // pred_region
      // Predicated region
      $region57: #{pallas_decoder_block.4} parent=55 // pred_check
        %p409 = pneg %p40
      $region58: #{pallas_decoder_block.4} parent=55 // pred_check_branch
        %411 = sbr.rel (%p409) target = $region60
      $region59: #{pallas_decoder_block.4} parent=55 // pred_region
        %p412 = scmp.lt.s32.totalorder %s20, 1
        %s413 = scalar_select %p412, %s20, 1
        %s414 = smul.addr %s413, 4
        %s415 = scalar_lea.vmem %s0, %s414
      $region60: #{pallas_decoder_block.4} parent=55 // pred_fallthru
        _
      // Predicated region
      $region61: #{pallas_decoder_block.4} parent=55 // pred_check
        %p416 = pneg %p66
      $region62: #{pallas_decoder_block.4} parent=55 // pred_check_branch
        %418 = sbr.rel (%p416) target = $region64
      $region63: #{pallas_decoder_block.4} parent=55 // pred_region
        %p419 = scmp.lt.s32.totalorder %s20, 1
        %s420 = scalar_select %p419, %s20, 1
        %s421 = smul.addr %s420, 8
        %s422 = scalar_lea.vmem %s1, %s421
      $region64: #{pallas_decoder_block.4} parent=55 // pred_fallthru
        _
      // Predicated region
      $region65: #{pallas_decoder_block.4} parent=55 // pred_check
        %p423 = pneg %p92
      $region66: #{pallas_decoder_block.4} parent=55 // pred_check_branch
        %425 = sbr.rel (%p423) target = $region68
      $region67: #{pallas_decoder_block.4} parent=55 // pred_region
        %p426 = scmp.lt.s32.totalorder %s20, 1
        %s427 = scalar_select %p426, %s20, 1
        %s428 = smul.addr %s427, 8
        %s429 = scalar_lea.vmem %s2, %s428
      $region68: #{pallas_decoder_block.4} parent=55 // pred_fallthru
        _
      // Predicated region
      $region69: #{pallas_decoder_block.4} parent=55 // pred_check
        %p430 = pneg %p118
      $region70: #{pallas_decoder_block.4} parent=55 // pred_check_branch
        %432 = sbr.rel (%p430) target = $region72
      $region71: #{pallas_decoder_block.4} parent=55 // pred_region
        %p433 = scmp.lt.s32.totalorder %s20, 1
        %s434 = scalar_select %p433, %s20, 1
        %s435 = smul.addr %s434, 2
        %s436 = scalar_lea.vmem %s3, %s435
      $region72: #{pallas_decoder_block.4} parent=55 // pred_fallthru
        _
    $region56: #{pallas_decoder_block.4} parent=5 // pred_fallthru
      _
    %p437 = scmp.le.s32.totalorder 1, %s20
    %p438 = scmp.lt.s32.totalorder %s20, 3
    %p439 = pnand %p437, %p438
    %p440 = pneg %p439
    // Predicated region
    $region73: #{pallas_decoder_block.4} parent=5 // pred_check
      _
    $region74: #{pallas_decoder_block.4} parent=5 // pred_check_branch
      %442 = sbr.rel (%p439) target = $region76
    $region75: #{pallas_decoder_block.4} parent=5 // pred_region
      %s443 = ssub.s32 %s20, 1
      %p444 = scmp.lt.s32.totalorder %s25, 1
      %s445 = scalar_select %p444, %s25, 1
      %s446 = smul.addr %s445, 4
      %s447 = scalar_lea.vmem %s0, %s446
      %p448 = pneg %p46
      %p449 = pneg %p43
      %p450 = scmp.lt.s32.totalorder %s25, 1
      %s451 = scalar_select %p450, %s25, 1
      %s452 = smul.addr %s451, 8
      %s453 = scalar_lea.vmem %s1, %s452
      %p454 = pneg %p72
      %p455 = pneg %p69
      %p456 = scmp.lt.s32.totalorder %s25, 1
      %s457 = scalar_select %p456, %s25, 1
      %s458 = smul.addr %s457, 8
      %s459 = scalar_lea.vmem %s2, %s458
      %p460 = pneg %p98
      %p461 = pneg %p95
      %p462 = scmp.lt.s32.totalorder %s25, 1
      %s463 = scalar_select %p462, %s25, 1
      %s464 = smul.addr %s463, 2
      %s465 = scalar_lea.vmem %s3, %s464
      %p466 = pneg %p124
      %p467 = pneg %p121
      %p468 = pneg %p145
      %p469 = pneg %p142
      %p470 = pneg %p166
      %p471 = pneg %p163
      %p472 = pneg %p187
      %p473 = pneg %p184
      %p474 = pneg %p208
      %p475 = pneg %p205
      %p476 = pneg %p229
      %p477 = pneg %p226
      %p478 = pneg %p250
      %p479 = pneg %p247
      %p480 = pneg %p271
      %p481 = pneg %p268
      %p482 = pneg %p292
      %p483 = pneg %p289
      %p484 = pneg %p313
      %p485 = pneg %p310
      %p486 = pneg %p334
      %p487 = pneg %p331
      %p488 = pneg %p360
      %p489 = pneg %p357
      %p490 = scmp.lt.s32.totalorder %s25, 1
      %s491 = scalar_select %p490, %s25, 1
      %s492 = smul.addr %s491, 4
      %s493 = scalar_lea.vmem %s14, %s492
      %p494 = scmp.lt.s32.totalorder %s25, 1
      %s495 = scalar_select %p494, %s25, 1
      %s496 = smul.addr %s495, 4
      %s497 = scalar_lea.vmem %s0, %s496
      %p498 = scmp.lt.s32.totalorder %s25, 1
      %s499 = scalar_select %p498, %s25, 1
      %s500 = smul.addr %s499, 8
      %s501 = scalar_lea.vmem %s1, %s500
      %p502 = scmp.lt.s32.totalorder %s25, 1
      %s503 = scalar_select %p502, %s25, 1
      %s504 = smul.addr %s503, 8
      %s505 = scalar_lea.vmem %s2, %s504
      %p506 = scmp.lt.s32.totalorder %s25, 1
      %s507 = scalar_select %p506, %s25, 1
      %s508 = smul.addr %s507, 2
      %s509 = scalar_lea.vmem %s3, %s508
      %p510 = scmp.lt.s32.totalorder %s25, 1
      %s511 = scalar_select %p510, %s25, 1
      %s512 = smul.addr %s511, 4
      %s513 = scalar_lea.vmem %s14, %s512
      %v515 = vld [vmem:[%s497] sm:$0xf]
      %v516 = vld [vmem:[%s501] sm:$0xff]
      %v517 = vpack.c.bf16 %v516, %v516
      %v518 = vld [vmem:[%s505] sm:$0xff]
      %v519 = vpack.c.bf16 %v518, %v518
      %v520 = vld [vmem:[%s4] sm:$0xf]
      %v521 = vld [vmem:[%s4 + $0x4] sm:$0xf]
      %v522 = vld [vmem:[%s4 + $0x8] sm:$0xf]
      %v523 = vld [vmem:[%s4 + $0xc] sm:$0xf]
      %v524 = vld [vmem:[%s5] sm:$0x1]
      %v526 = vlaneseq
      %v527 = vshrl.u32 %v526, 7
      %v528 = vsub.s32 0, %v527
      %v529 = vrot.slane %v524, %v528
      %v535 = vunpack.c.l.b16 %v520
      %v536 = vunpack.c.l.b16 %v521
      %v537 = vunpack.c.l.b16 %v522
      %v538 = vunpack.c.l.b16 %v523
      %v539 = vpack.c.b16 %v536, %v535
      %v540 = vpack.c.b16 %v538, %v537
      %vm543 = vcmask 261120
      %v545 = vsel %vm543, %v515, 0
      %547 = vmatprep.subr.bf16.mxu0 0
      %548 = vmatpush1.bf16.msra.mxu0 %v539
      %549 = vmatprep.subr.bf16.mxu0 0
      %550 = vmatpush1.bf16.msra.mxu0 %v540
      %551 = vmatprep.subr.bf16.mxu0 0
      %552 = vmatpush1.bf16.msra.mxu0 0
      %553 = vmatprep.subr.bf16.mxu0 0
      %554 = vmatpush1.bf16.msra.mxu0 0
      %555 = vmatprep.subr.bf16.mxu0 0
      %556 = vmatpush1.bf16.msra.mxu0 0
      %557 = vmatprep.subr.bf16.mxu0 0
      %558 = vmatpush1.bf16.msra.mxu0 0
      %559 = vmatprep.subr.bf16.mxu0 0
      %560 = vmatpush1.bf16.msra.mxu0 0
      %561 = vmatprep.subr.bf16.mxu0 0
      %562 = vmatpush1.bf16.msra.mxu0 0
      %563 = vmatprep.subr.bf16.mxu0 0
      %564 = vmatpush1.bf16.msra.mxu0 0
      %565 = vmatprep.subr.bf16.mxu0 0
      %566 = vmatpush1.bf16.msra.mxu0 0
      %567 = vmatprep.subr.bf16.mxu0 0
      %568 = vmatpush1.bf16.msra.mxu0 0
      %569 = vmatprep.subr.bf16.mxu0 0
      %570 = vmatpush1.bf16.msra.mxu0 0
      %571 = vmatprep.subr.bf16.mxu0 0
      %572 = vmatpush1.bf16.msra.mxu0 0
      %573 = vmatprep.subr.bf16.mxu0 0
      %574 = vmatpush1.bf16.msra.mxu0 0
      %575 = vmatprep.subr.bf16.mxu0 0
      %576 = vmatpush1.bf16.msra.mxu0 0
      %577 = vmatprep.subr.bf16.mxu0 0
      %578 = vmatpush1.bf16.msra.mxu0 0
      %579 = vmatprep.mubr.bf16.mxu0 0
      %580 = vmatmul.mubr.bf16.gmra.mrb[0].mxu0 %v545
      %v581 = vpop.f32.mrb[0].mxu0
      %v582 = vadd.f32 %v529, %v581
      %v583 = vpop.f32.mrb[0].mxu0
      %v584 = vpop.f32.mrb[0].mxu0
      %v585 = vpop.f32.mrb[0].mxu0
      %586 = vdwg.mxu0
      %v587 = vld [vmem:[%s6] sm:$0xf]
      %v588 = vld [vmem:[%s6 + $0x4] sm:$0xf]
      %v589 = vld [vmem:[%s6 + $0x8] sm:$0xf]
      %v590 = vld [vmem:[%s6 + $0xc] sm:$0xf]
      %v591 = vld [vmem:[%s7] sm:$0x1]
      %v593 = vlaneseq
      %v594 = vshrl.u32 %v593, 7
      %v595 = vsub.s32 0, %v594
      %v596 = vrot.slane %v591, %v595
      %v602 = vunpack.c.l.b16 %v587
      %v603 = vunpack.c.l.b16 %v588
      %v604 = vunpack.c.l.b16 %v589
      %v605 = vunpack.c.l.b16 %v590
      %v606 = vpack.c.b16 %v603, %v602
      %v607 = vpack.c.b16 %v605, %v604
      %v611 = vsel %vm543, %v517, 0
      %613 = vmatprep.subr.bf16.mxu0 0
      %614 = vmatpush1.bf16.msra.mxu0 %v606
      %615 = vmatprep.subr.bf16.mxu0 0
      %616 = vmatpush1.bf16.msra.mxu0 %v607
      %617 = vmatprep.subr.bf16.mxu0 0
      %618 = vmatpush1.bf16.msra.mxu0 0
      %619 = vmatprep.subr.bf16.mxu0 0
      %620 = vmatpush1.bf16.msra.mxu0 0
      %621 = vmatprep.subr.bf16.mxu0 0
      %622 = vmatpush1.bf16.msra.mxu0 0
      %623 = vmatprep.subr.bf16.mxu0 0
      %624 = vmatpush1.bf16.msra.mxu0 0
      %625 = vmatprep.subr.bf16.mxu0 0
      %626 = vmatpush1.bf16.msra.mxu0 0
      %627 = vmatprep.subr.bf16.mxu0 0
      %628 = vmatpush1.bf16.msra.mxu0 0
      %629 = vmatprep.subr.bf16.mxu0 0
      %630 = vmatpush1.bf16.msra.mxu0 0
      %631 = vmatprep.subr.bf16.mxu0 0
      %632 = vmatpush1.bf16.msra.mxu0 0
      %633 = vmatprep.subr.bf16.mxu0 0
      %634 = vmatpush1.bf16.msra.mxu0 0
      %635 = vmatprep.subr.bf16.mxu0 0
      %636 = vmatpush1.bf16.msra.mxu0 0
      %637 = vmatprep.subr.bf16.mxu0 0
      %638 = vmatpush1.bf16.msra.mxu0 0
      %639 = vmatprep.subr.bf16.mxu0 0
      %640 = vmatpush1.bf16.msra.mxu0 0
      %641 = vmatprep.subr.bf16.mxu0 0
      %642 = vmatpush1.bf16.msra.mxu0 0
      %643 = vmatprep.subr.bf16.mxu0 0
      %644 = vmatpush1.bf16.msra.mxu0 0
      %645 = vmatprep.mubr.bf16.mxu0 0
      %646 = vmatmul.mubr.bf16.gmra.mrb[0].mxu0 %v611
      %v647 = vpop.f32.mrb[0].mxu0
      %v648 = vadd.f32 %v596, %v647
      %v649 = vpop.f32.mrb[0].mxu0
      %v650 = vpop.f32.mrb[0].mxu0
      %v651 = vpop.f32.mrb[0].mxu0
      %652 = vdwg.mxu0
      %v653 = vld [vmem:[%s8] sm:$0xf]
      %v654 = vld [vmem:[%s8 + $0x4] sm:$0xf]
      %v655 = vld [vmem:[%s8 + $0x8] sm:$0xf]
      %v656 = vld [vmem:[%s8 + $0xc] sm:$0xf]
      %v657 = vld [vmem:[%s9] sm:$0x1]
      %v659 = vlaneseq
      %v660 = vshrl.u32 %v659, 7
      %v661 = vsub.s32 0, %v660
      %v662 = vrot.slane %v657, %v661
      %v668 = vunpack.c.l.b16 %v653
      %v669 = vunpack.c.l.b16 %v654
      %v670 = vunpack.c.l.b16 %v655
      %v671 = vunpack.c.l.b16 %v656
      %v672 = vpack.c.b16 %v669, %v668
      %v673 = vpack.c.b16 %v671, %v670
      %v677 = vsel %vm543, %v519, 0
      %679 = vmatprep.subr.bf16.mxu0 0
      %680 = vmatpush1.bf16.msra.mxu0 %v672
      %681 = vmatprep.subr.bf16.mxu0 0
      %682 = vmatpush1.bf16.msra.mxu0 %v673
      %683 = vmatprep.subr.bf16.mxu0 0
      %684 = vmatpush1.bf16.msra.mxu0 0
      %685 = vmatprep.subr.bf16.mxu0 0
      %686 = vmatpush1.bf16.msra.mxu0 0
      %687 = vmatprep.subr.bf16.mxu0 0
      %688 = vmatpush1.bf16.msra.mxu0 0
      %689 = vmatprep.subr.bf16.mxu0 0
      %690 = vmatpush1.bf16.msra.mxu0 0
      %691 = vmatprep.subr.bf16.mxu0 0
      %692 = vmatpush1.bf16.msra.mxu0 0
      %693 = vmatprep.subr.bf16.mxu0 0
      %694 = vmatpush1.bf16.msra.mxu0 0
      %695 = vmatprep.subr.bf16.mxu0 0
      %696 = vmatpush1.bf16.msra.mxu0 0
      %697 = vmatprep.subr.bf16.mxu0 0
      %698 = vmatpush1.bf16.msra.mxu0 0
      %699 = vmatprep.subr.bf16.mxu0 0
      %700 = vmatpush1.bf16.msra.mxu0 0
      %701 = vmatprep.subr.bf16.mxu0 0
      %702 = vmatpush1.bf16.msra.mxu0 0
      %703 = vmatprep.subr.bf16.mxu0 0
      %704 = vmatpush1.bf16.msra.mxu0 0
      %705 = vmatprep.subr.bf16.mxu0 0
      %706 = vmatpush1.bf16.msra.mxu0 0
      %707 = vmatprep.subr.bf16.mxu0 0
      %708 = vmatpush1.bf16.msra.mxu0 0
      %709 = vmatprep.subr.bf16.mxu0 0
      %710 = vmatpush1.bf16.msra.mxu0 0
      %711 = vmatprep.mubr.bf16.mxu0 0
      %712 = vmatmul.mubr.bf16.gmra.mrb[0].mxu0 %v677
      %v713 = vpop.f32.mrb[0].mxu0
      %v714 = vadd.f32 %v662, %v713
      %v715 = vpop.f32.mrb[0].mxu0
      %v716 = vpop.f32.mrb[0].mxu0
      %v717 = vpop.f32.mrb[0].mxu0
      %718 = vdwg.mxu0
      %v719 = vld [vmem:[%s509] sm:$0x3]
      %v720 = vmul.f32 %v582, 0.17677669
      %722 = vrot.lane.b32.xlu0 %v720, 120
      %v723 = vpop.permute.xlu0 %722
      %725 = vrot.lane.b32.xlu0 %v720, 112
      %v726 = vpop.permute.xlu0 %725
      %728 = vrot.lane.b32.xlu0 %v720, 104
      %v729 = vpop.permute.xlu0 %728
      %v731 = vcombine.low %v720, %v726
      %v732 = vcombine.high %v720, %v726
      %v734 = vunpack.c.l.s4 1983009808
      %v735 = vunpack.c.0.s8 %v734
      %v736 = vlaneseq
      %v737 = vshrl.u32 %v736, 7
      %v738 = vsub.s32 %v735, %v737
      %v739 = vrot.slane %v731, %v738
      %v741 = vunpack.c.l.s4 1983009808
      %v742 = vunpack.c.0.s8 %v741
      %v743 = vlaneseq
      %v744 = vshrl.u32 %v743, 7
      %v745 = vsub.s32 %v742, %v744
      %v746 = vrot.slane %v732, %v745
      %v747 = vcombine.low %v723, %v729
      %v748 = vcombine.high %v723, %v729
      %v750 = vunpack.c.l.s4 1983009808
      %v751 = vunpack.c.0.s8 %v750
      %v752 = vlaneseq
      %v753 = vshrl.u32 %v752, 7
      %v754 = vsub.s32 %v751, %v753
      %v755 = vrot.slane %v747, %v754
      %v757 = vunpack.c.l.s4 1983009808
      %v758 = vunpack.c.0.s8 %v757
      %v759 = vlaneseq
      %v760 = vshrl.u32 %v759, 7
      %v761 = vsub.s32 %v758, %v760
      %v762 = vrot.slane %v748, %v761
      %v763 = vcombine.low %v739, %v755
      %v764 = vcombine.high %v739, %v755
      %v766 = vunpack.c.l.s4 1934713408
      %v767 = vunpack.c.0.s8 %v766
      %v768 = vlaneseq
      %v769 = vshrl.u32 %v768, 7
      %v770 = vsub.s32 %v767, %v769
      %v771 = vrot.slane %v763, %v770
      %v773 = vunpack.c.l.s4 1934713408
      %v774 = vunpack.c.0.s8 %v773
      %v775 = vlaneseq
      %v776 = vshrl.u32 %v775, 7
      %v777 = vsub.s32 %v774, %v776
      %v778 = vrot.slane %v764, %v777
      %v779 = vcombine.low %v746, %v762
      %v780 = vcombine.high %v746, %v762
      %v782 = vunpack.c.l.s4 1934713408
      %v783 = vunpack.c.0.s8 %v782
      %v784 = vlaneseq
      %v785 = vshrl.u32 %v784, 7
      %v786 = vsub.s32 %v783, %v785
      %v787 = vrot.slane %v779, %v786
      %v789 = vunpack.c.l.s4 1934713408
      %v790 = vunpack.c.0.s8 %v789
      %v791 = vlaneseq
      %v792 = vshrl.u32 %v791, 7
      %v793 = vsub.s32 %v790, %v792
      %v794 = vrot.slane %v780, %v793
      %v795 = vcombine.high %v771, 0.0
      %v796 = vcombine.high %v778, 0.0
      %v797 = vcombine.high %v787, 0.0
      %v798 = vcombine.high %v794, 0.0
      %v799 = vcombine.low %v771, %v778
      %v801 = vunpack.c.l.s4 1983009808
      %v802 = vunpack.c.0.s8 %v801
      %v803 = vlaneseq
      %v804 = vshrl.u32 %v803, 7
      %v805 = vsub.s32 %v802, %v804
      %v806 = vrot.slane %v799, %v805
      %v807 = vcombine.low %v795, %v796
      %v809 = vunpack.c.l.s4 1983009808
      %v810 = vunpack.c.0.s8 %v809
      %v811 = vlaneseq
      %v812 = vshrl.u32 %v811, 7
      %v813 = vsub.s32 %v810, %v812
      %v814 = vrot.slane %v807, %v813
      %v815 = vcombine.low %v787, %v794
      %v817 = vunpack.c.l.s4 1983009808
      %v818 = vunpack.c.0.s8 %v817
      %v819 = vlaneseq
      %v820 = vshrl.u32 %v819, 7
      %v821 = vsub.s32 %v818, %v820
      %v822 = vrot.slane %v815, %v821
      %v823 = vcombine.low %v797, %v798
      %v825 = vunpack.c.l.s4 1983009808
      %v826 = vunpack.c.0.s8 %v825
      %v827 = vlaneseq
      %v828 = vshrl.u32 %v827, 7
      %v829 = vsub.s32 %v826, %v828
      %v830 = vrot.slane %v823, %v829
      %v831 = vcombine.low %v806, %v814
      %v832 = vcombine.high %v806, %v814
      %v834 = vunpack.c.l.s4 1934713408
      %v835 = vunpack.c.0.s8 %v834
      %v836 = vlaneseq
      %v837 = vshrl.u32 %v836, 7
      %v838 = vsub.s32 %v835, %v837
      %v839 = vrot.slane %v831, %v838
      %v841 = vunpack.c.l.s4 1934713408
      %v842 = vunpack.c.0.s8 %v841
      %v843 = vlaneseq
      %v844 = vshrl.u32 %v843, 7
      %v845 = vsub.s32 %v842, %v844
      %v846 = vrot.slane %v832, %v845
      %v847 = vcombine.low %v822, %v830
      %v848 = vcombine.high %v822, %v830
      %v850 = vunpack.c.l.s4 1934713408
      %v851 = vunpack.c.0.s8 %v850
      %v852 = vlaneseq
      %v853 = vshrl.u32 %v852, 7
      %v854 = vsub.s32 %v851, %v853
      %v855 = vrot.slane %v847, %v854
      %v857 = vunpack.c.l.s4 1934713408
      %v858 = vunpack.c.0.s8 %v857
      %v859 = vlaneseq
      %v860 = vshrl.u32 %v859, 7
      %v861 = vsub.s32 %v858, %v860
      %v862 = vrot.slane %v848, %v861
      %v863 = vcombine.low %v839, %v855
      %v864 = vcombine.high %v839, %v855
      %v865 = vcombine.low %v846, %v862
      %v866 = vcombine.high %v846, %v862
      %v867 = vpack.c.bf16 %v863, %v863
      %v868 = vpack.c.bf16 %v864, %v864
      %v869 = vpack.c.bf16 %v865, %v865
      %v870 = vpack.c.bf16 %v866, %v866
      %872 = vrot.lane.b32.xlu0 %v648, 120
      %v873 = vpop.permute.xlu0 %872
      %875 = vrot.lane.b32.xlu0 %v648, 112
      %v876 = vpop.permute.xlu0 %875
      %878 = vrot.lane.b32.xlu0 %v648, 104
      %v879 = vpop.permute.xlu0 %878
      %v881 = vcombine.low %v648, %v876
      %v882 = vcombine.high %v648, %v876
      %v884 = vunpack.c.l.s4 1983009808
      %v885 = vunpack.c.0.s8 %v884
      %v886 = vlaneseq
      %v887 = vshrl.u32 %v886, 7
      %v888 = vsub.s32 %v885, %v887
      %v889 = vrot.slane %v881, %v888
      %v891 = vunpack.c.l.s4 1983009808
      %v892 = vunpack.c.0.s8 %v891
      %v893 = vlaneseq
      %v894 = vshrl.u32 %v893, 7
      %v895 = vsub.s32 %v892, %v894
      %v896 = vrot.slane %v882, %v895
      %v897 = vcombine.low %v873, %v879
      %v898 = vcombine.high %v873, %v879
      %v900 = vunpack.c.l.s4 1983009808
      %v901 = vunpack.c.0.s8 %v900
      %v902 = vlaneseq
      %v903 = vshrl.u32 %v902, 7
      %v904 = vsub.s32 %v901, %v903
      %v905 = vrot.slane %v897, %v904
      %v907 = vunpack.c.l.s4 1983009808
      %v908 = vunpack.c.0.s8 %v907
      %v909 = vlaneseq
      %v910 = vshrl.u32 %v909, 7
      %v911 = vsub.s32 %v908, %v910
      %v912 = vrot.slane %v898, %v911
      %v913 = vcombine.low %v889, %v905
      %v914 = vcombine.high %v889, %v905
      %v916 = vunpack.c.l.s4 1934713408
      %v917 = vunpack.c.0.s8 %v916
      %v918 = vlaneseq
      %v919 = vshrl.u32 %v918, 7
      %v920 = vsub.s32 %v917, %v919
      %v921 = vrot.slane %v913, %v920
      %v923 = vunpack.c.l.s4 1934713408
      %v924 = vunpack.c.0.s8 %v923
      %v925 = vlaneseq
      %v926 = vshrl.u32 %v925, 7
      %v927 = vsub.s32 %v924, %v926
      %v928 = vrot.slane %v914, %v927
      %v929 = vcombine.low %v896, %v912
      %v930 = vcombine.high %v896, %v912
      %v932 = vunpack.c.l.s4 1934713408
      %v933 = vunpack.c.0.s8 %v932
      %v934 = vlaneseq
      %v935 = vshrl.u32 %v934, 7
      %v936 = vsub.s32 %v933, %v935
      %v937 = vrot.slane %v929, %v936
      %v939 = vunpack.c.l.s4 1934713408
      %v940 = vunpack.c.0.s8 %v939
      %v941 = vlaneseq
      %v942 = vshrl.u32 %v941, 7
      %v943 = vsub.s32 %v940, %v942
      %v944 = vrot.slane %v930, %v943
      %v945 = vcombine.high %v921, 0.0
      %v946 = vcombine.high %v928, 0.0
      %v947 = vcombine.high %v937, 0.0
      %v948 = vcombine.high %v944, 0.0
      %v949 = vcombine.low %v921, %v928
      %v951 = vunpack.c.l.s4 1983009808
      %v952 = vunpack.c.0.s8 %v951
      %v953 = vlaneseq
      %v954 = vshrl.u32 %v953, 7
      %v955 = vsub.s32 %v952, %v954
      %v956 = vrot.slane %v949, %v955
      %v957 = vcombine.low %v945, %v946
      %v959 = vunpack.c.l.s4 1983009808
      %v960 = vunpack.c.0.s8 %v959
      %v961 = vlaneseq
      %v962 = vshrl.u32 %v961, 7
      %v963 = vsub.s32 %v960, %v962
      %v964 = vrot.slane %v957, %v963
      %v965 = vcombine.low %v937, %v944
      %v967 = vunpack.c.l.s4 1983009808
      %v968 = vunpack.c.0.s8 %v967
      %v969 = vlaneseq
      %v970 = vshrl.u32 %v969, 7
      %v971 = vsub.s32 %v968, %v970
      %v972 = vrot.slane %v965, %v971
      %v973 = vcombine.low %v947, %v948
      %v975 = vunpack.c.l.s4 1983009808
      %v976 = vunpack.c.0.s8 %v975
      %v977 = vlaneseq
      %v978 = vshrl.u32 %v977, 7
      %v979 = vsub.s32 %v976, %v978
      %v980 = vrot.slane %v973, %v979
      %v981 = vcombine.low %v956, %v964
      %v982 = vcombine.high %v956, %v964
      %v984 = vunpack.c.l.s4 1934713408
      %v985 = vunpack.c.0.s8 %v984
      %v986 = vlaneseq
      %v987 = vshrl.u32 %v986, 7
      %v988 = vsub.s32 %v985, %v987
      %v989 = vrot.slane %v981, %v988
      %v991 = vunpack.c.l.s4 1934713408
      %v992 = vunpack.c.0.s8 %v991
      %v993 = vlaneseq
      %v994 = vshrl.u32 %v993, 7
      %v995 = vsub.s32 %v992, %v994
      %v996 = vrot.slane %v982, %v995
      %v997 = vcombine.low %v972, %v980
      %v998 = vcombine.high %v972, %v980
      %v1000 = vunpack.c.l.s4 1934713408
      %v1001 = vunpack.c.0.s8 %v1000
      %v1002 = vlaneseq
      %v1003 = vshrl.u32 %v1002, 7
      %v1004 = vsub.s32 %v1001, %v1003
      %v1005 = vrot.slane %v997, %v1004
      %v1007 = vunpack.c.l.s4 1934713408
      %v1008 = vunpack.c.0.s8 %v1007
      %v1009 = vlaneseq
      %v1010 = vshrl.u32 %v1009, 7
      %v1011 = vsub.s32 %v1008, %v1010
      %v1012 = vrot.slane %v998, %v1011
      %v1013 = vcombine.low %v989, %v1005
      %v1014 = vcombine.high %v989, %v1005
      %v1015 = vcombine.low %v996, %v1012
      %v1016 = vcombine.high %v996, %v1012
      %v1017 = vpack.c.bf16 %v1013, %v1013
      %v1018 = vpack.c.bf16 %v1014, %v1014
      %v1019 = vpack.c.bf16 %v1015, %v1015
      %v1020 = vpack.c.bf16 %v1016, %v1016
      %1022 = vrot.lane.b32.xlu0 %v714, 120
      %v1023 = vpop.permute.xlu0 %1022
      %1025 = vrot.lane.b32.xlu0 %v714, 112
      %v1026 = vpop.permute.xlu0 %1025
      %1028 = vrot.lane.b32.xlu0 %v714, 104
      %v1029 = vpop.permute.xlu0 %1028
      %v1031 = vcombine.low %v714, %v1026
      %v1032 = vcombine.high %v714, %v1026
      %v1034 = vunpack.c.l.s4 1983009808
      %v1035 = vunpack.c.0.s8 %v1034
      %v1036 = vlaneseq
      %v1037 = vshrl.u32 %v1036, 7
      %v1038 = vsub.s32 %v1035, %v1037
      %v1039 = vrot.slane %v1031, %v1038
      %v1041 = vunpack.c.l.s4 1983009808
      %v1042 = vunpack.c.0.s8 %v1041
      %v1043 = vlaneseq
      %v1044 = vshrl.u32 %v1043, 7
      %v1045 = vsub.s32 %v1042, %v1044
      %v1046 = vrot.slane %v1032, %v1045
      %v1047 = vcombine.low %v1023, %v1029
      %v1048 = vcombine.high %v1023, %v1029
      %v1050 = vunpack.c.l.s4 1983009808
      %v1051 = vunpack.c.0.s8 %v1050
      %v1052 = vlaneseq
      %v1053 = vshrl.u32 %v1052, 7
      %v1054 = vsub.s32 %v1051, %v1053
      %v1055 = vrot.slane %v1047, %v1054
      %v1057 = vunpack.c.l.s4 1983009808
      %v1058 = vunpack.c.0.s8 %v1057
      %v1059 = vlaneseq
      %v1060 = vshrl.u32 %v1059, 7
      %v1061 = vsub.s32 %v1058, %v1060
      %v1062 = vrot.slane %v1048, %v1061
      %v1063 = vcombine.low %v1039, %v1055
      %v1064 = vcombine.high %v1039, %v1055
      %v1066 = vunpack.c.l.s4 1934713408
      %v1067 = vunpack.c.0.s8 %v1066
      %v1068 = vlaneseq
      %v1069 = vshrl.u32 %v1068, 7
      %v1070 = vsub.s32 %v1067, %v1069
      %v1071 = vrot.slane %v1063, %v1070
      %v1073 = vunpack.c.l.s4 1934713408
      %v1074 = vunpack.c.0.s8 %v1073
      %v1075 = vlaneseq
      %v1076 = vshrl.u32 %v1075, 7
      %v1077 = vsub.s32 %v1074, %v1076
      %v1078 = vrot.slane %v1064, %v1077
      %v1079 = vcombine.low %v1046, %v1062
      %v1080 = vcombine.high %v1046, %v1062
      %v1082 = vunpack.c.l.s4 1934713408
      %v1083 = vunpack.c.0.s8 %v1082
      %v1084 = vlaneseq
      %v1085 = vshrl.u32 %v1084, 7
      %v1086 = vsub.s32 %v1083, %v1085
      %v1087 = vrot.slane %v1079, %v1086
      %v1089 = vunpack.c.l.s4 1934713408
      %v1090 = vunpack.c.0.s8 %v1089
      %v1091 = vlaneseq
      %v1092 = vshrl.u32 %v1091, 7
      %v1093 = vsub.s32 %v1090, %v1092
      %v1094 = vrot.slane %v1080, %v1093
      %v1095 = vcombine.high %v1071, 0.0
      %v1096 = vcombine.high %v1078, 0.0
      %v1097 = vcombine.high %v1087, 0.0
      %v1098 = vcombine.high %v1094, 0.0
      %v1099 = vcombine.low %v1071, %v1078
      %v1101 = vunpack.c.l.s4 1983009808
      %v1102 = vunpack.c.0.s8 %v1101
      %v1103 = vlaneseq
      %v1104 = vshrl.u32 %v1103, 7
      %v1105 = vsub.s32 %v1102, %v1104
      %v1106 = vrot.slane %v1099, %v1105
      %v1107 = vcombine.low %v1095, %v1096
      %v1109 = vunpack.c.l.s4 1983009808
      %v1110 = vunpack.c.0.s8 %v1109
      %v1111 = vlaneseq
      %v1112 = vshrl.u32 %v1111, 7
      %v1113 = vsub.s32 %v1110, %v1112
      %v1114 = vrot.slane %v1107, %v1113
      %v1115 = vcombine.low %v1087, %v1094
      %v1117 = vunpack.c.l.s4 1983009808
      %v1118 = vunpack.c.0.s8 %v1117
      %v1119 = vlaneseq
      %v1120 = vshrl.u32 %v1119, 7
      %v1121 = vsub.s32 %v1118, %v1120
      %v1122 = vrot.slane %v1115, %v1121
      %v1123 = vcombine.low %v1097, %v1098
      %v1125 = vunpack.c.l.s4 1983009808
      %v1126 = vunpack.c.0.s8 %v1125
      %v1127 = vlaneseq
      %v1128 = vshrl.u32 %v1127, 7
      %v1129 = vsub.s32 %v1126, %v1128
      %v1130 = vrot.slane %v1123, %v1129
      %v1131 = vcombine.low %v1106, %v1114
      %v1132 = vcombine.high %v1106, %v1114
      %v1134 = vunpack.c.l.s4 1934713408
      %v1135 = vunpack.c.0.s8 %v1134
      %v1136 = vlaneseq
      %v1137 = vshrl.u32 %v1136, 7
      %v1138 = vsub.s32 %v1135, %v1137
      %v1139 = vrot.slane %v1131, %v1138
      %v1141 = vunpack.c.l.s4 1934713408
      %v1142 = vunpack.c.0.s8 %v1141
      %v1143 = vlaneseq
      %v1144 = vshrl.u32 %v1143, 7
      %v1145 = vsub.s32 %v1142, %v1144
      %v1146 = vrot.slane %v1132, %v1145
      %v1147 = vcombine.low %v1122, %v1130
      %v1148 = vcombine.high %v1122, %v1130
      %v1150 = vunpack.c.l.s4 1934713408
      %v1151 = vunpack.c.0.s8 %v1150
      %v1152 = vlaneseq
      %v1153 = vshrl.u32 %v1152, 7
      %v1154 = vsub.s32 %v1151, %v1153
      %v1155 = vrot.slane %v1147, %v1154
      %v1157 = vunpack.c.l.s4 1934713408
      %v1158 = vunpack.c.0.s8 %v1157
      %v1159 = vlaneseq
      %v1160 = vshrl.u32 %v1159, 7
      %v1161 = vsub.s32 %v1158, %v1160
      %v1162 = vrot.slane %v1148, %v1161
      %v1163 = vcombine.low %v1139, %v1155
      %v1164 = vcombine.high %v1139, %v1155
      %v1165 = vcombine.low %v1146, %v1162
      %v1166 = vcombine.high %v1146, %v1162
      %v1167 = vpack.c.bf16 %v1163, %v1163
      %v1168 = vpack.c.bf16 %v1164, %v1164
      %v1169 = vpack.c.bf16 %v1165, %v1165
      %v1170 = vpack.c.bf16 %v1166, %v1166
      %vm1171 = vcmask 64512
      %v1173 = vsel %vm1171, %v867, 0
      %v1176 = vsel %vm1171, %v1017, 0
      %1178 = vmatprep.subr.bf16.mxu0 0
      %1179 = vmatpush1.bf16.xpose.msra.mxu0 %v1176
      %1180 = vmatprep.subr.bf16.mxu0 0
      %1181 = vmatpush1.bf16.xpose.msra.mxu0 0
      %1182 = vmatprep.subr.bf16.mxu0 0
      %1183 = vmatpush1.bf16.xpose.msra.mxu0 0
      %1184 = vmatprep.subr.bf16.mxu0 0
      %1185 = vmatpush1.bf16.xpose.msra.mxu0 0
      %1186 = vmatprep.subr.bf16.mxu0 0
      %1187 = vmatpush1.bf16.xpose.msra.mxu0 0
      %1188 = vmatprep.subr.bf16.mxu0 0
      %1189 = vmatpush1.bf16.xpose.msra.mxu0 0
      %1190 = vmatprep.subr.bf16.mxu0 0
      %1191 = vmatpush1.bf16.xpose.msra.mxu0 0
      %1192 = vmatprep.subr.bf16.mxu0 0
      %1193 = vmatpush1.bf16.xpose.msra.mxu0 0
      %1194 = vmatprep.subr.bf16.mxu0 0
      %1195 = vmatpush1.bf16.xpose.msra.mxu0 0
      %1196 = vmatprep.subr.bf16.mxu0 0
      %1197 = vmatpush1.bf16.xpose.msra.mxu0 0
      %1198 = vmatprep.subr.bf16.mxu0 0
      %1199 = vmatpush1.bf16.xpose.msra.mxu0 0
      %1200 = vmatprep.subr.bf16.mxu0 0
      %1201 = vmatpush1.bf16.xpose.msra.mxu0 0
      %1202 = vmatprep.subr.bf16.mxu0 0
      %1203 = vmatpush1.bf16.xpose.msra.mxu0 0
      %1204 = vmatprep.subr.bf16.mxu0 0
      %1205 = vmatpush1.bf16.xpose.msra.mxu0 0
      %1206 = vmatprep.subr.bf16.mxu0 0
      %1207 = vmatpush1.bf16.xpose.msra.mxu0 0
      %1208 = vmatprep.subr.bf16.mxu0 0
      %1209 = vmatpush1.bf16.xpose.msra.mxu0 0
      %1210 = vmatprep.mubr.bf16.mxu0 0
      %1211 = vmatmul.mubr.bf16.gmra.mrb[0].mxu0 %v1173
      %v1212 = vpop.f32.mrb[0].mxu0
      %v1213 = vadd.f32 0.0, %v1212
      %v1214 = vpop.f32.mrb[0].mxu0
      %v1215 = vpop.f32.mrb[0].mxu0
      %v1216 = vpop.f32.mrb[0].mxu0
      %1217 = vdwg.mxu0
      %v1219 = vsel %vm1171, %v868, 0
      %v1222 = vsel %vm1171, %v1018, 0
      %1224 = vmatprep.subr.bf16.mxu0 0
      %1225 = vmatpush1.bf16.xpose.msra.mxu0 %v1222
      %1226 = vmatprep.subr.bf16.mxu0 0
      %1227 = vmatpush1.bf16.xpose.msra.mxu0 0
      %1228 = vmatprep.subr.bf16.mxu0 0
      %1229 = vmatpush1.bf16.xpose.msra.mxu0 0
      %1230 = vmatprep.subr.bf16.mxu0 0
      %1231 = vmatpush1.bf16.xpose.msra.mxu0 0
      %1232 = vmatprep.subr.bf16.mxu0 0
      %1233 = vmatpush1.bf16.xpose.msra.mxu0 0
      %1234 = vmatprep.subr.bf16.mxu0 0
      %1235 = vmatpush1.bf16.xpose.msra.mxu0 0
      %1236 = vmatprep.subr.bf16.mxu0 0
      %1237 = vmatpush1.bf16.xpose.msra.mxu0 0
      %1238 = vmatprep.subr.bf16.mxu0 0
      %1239 = vmatpush1.bf16.xpose.msra.mxu0 0
      %1240 = vmatprep.subr.bf16.mxu0 0
      %1241 = vmatpush1.bf16.xpose.msra.mxu0 0
      %1242 = vmatprep.subr.bf16.mxu0 0
      %1243 = vmatpush1.bf16.xpose.msra.mxu0 0
      %1244 = vmatprep.subr.bf16.mxu0 0
      %1245 = vmatpush1.bf16.xpose.msra.mxu0 0
      %1246 = vmatprep.subr.bf16.mxu0 0
      %1247 = vmatpush1.bf16.xpose.msra.mxu0 0
      %1248 = vmatprep.subr.bf16.mxu0 0
      %1249 = vmatpush1.bf16.xpose.msra.mxu0 0
      %1250 = vmatprep.subr.bf16.mxu0 0
      %1251 = vmatpush1.bf16.xpose.msra.mxu0 0
      %1252 = vmatprep.subr.bf16.mxu0 0
      %1253 = vmatpush1.bf16.xpose.msra.mxu0 0
      %1254 = vmatprep.subr.bf16.mxu0 0
      %1255 = vmatpush1.bf16.xpose.msra.mxu0 0
      %1256 = vmatprep.mubr.bf16.mxu0 0
      %1257 = vmatmul.mubr.bf16.gmra.mrb[0].mxu0 %v1219
      %v1258 = vpop.f32.mrb[0].mxu0
      %v1259 = vadd.f32 0.0, %v1258
      %v1260 = vpop.f32.mrb[0].mxu0
      %v1261 = vpop.f32.mrb[0].mxu0
      %v1262 = vpop.f32.mrb[0].mxu0
      %1263 = vdwg.mxu0
      %v1265 = vsel %vm1171, %v869, 0
      %v1268 = vsel %vm1171, %v1019, 0
      %1270 = vmatprep.subr.bf16.mxu0 0
      %1271 = vmatpush1.bf16.xpose.msra.mxu0 %v1268
      %1272 = vmatprep.subr.bf16.mxu0 0
      %1273 = vmatpush1.bf16.xpose.msra.mxu0 0
      %1274 = vmatprep.subr.bf16.mxu0 0
      %1275 = vmatpush1.bf16.xpose.msra.mxu0 0
      %1276 = vmatprep.subr.bf16.mxu0 0
      %1277 = vmatpush1.bf16.xpose.msra.mxu0 0
      %1278 = vmatprep.subr.bf16.mxu0 0
      %1279 = vmatpush1.bf16.xpose.msra.mxu0 0
      %1280 = vmatprep.subr.bf16.mxu0 0
      %1281 = vmatpush1.bf16.xpose.msra.mxu0 0
      %1282 = vmatprep.subr.bf16.mxu0 0
      %1283 = vmatpush1.bf16.xpose.msra.mxu0 0
      %1284 = vmatprep.subr.bf16.mxu0 0
      %1285 = vmatpush1.bf16.xpose.msra.mxu0 0
      %1286 = vmatprep.subr.bf16.mxu0 0
      %1287 = vmatpush1.bf16.xpose.msra.mxu0 0
      %1288 = vmatprep.subr.bf16.mxu0 0
      %1289 = vmatpush1.bf16.xpose.msra.mxu0 0
      %1290 = vmatprep.subr.bf16.mxu0 0
      %1291 = vmatpush1.bf16.xpose.msra.mxu0 0
      %1292 = vmatprep.subr.bf16.mxu0 0
      %1293 = vmatpush1.bf16.xpose.msra.mxu0 0
      %1294 = vmatprep.subr.bf16.mxu0 0
      %1295 = vmatpush1.bf16.xpose.msra.mxu0 0
      %1296 = vmatprep.subr.bf16.mxu0 0
      %1297 = vmatpush1.bf16.xpose.msra.mxu0 0
      %1298 = vmatprep.subr.bf16.mxu0 0
      %1299 = vmatpush1.bf16.xpose.msra.mxu0 0
      %1300 = vmatprep.subr.bf16.mxu0 0
      %1301 = vmatpush1.bf16.xpose.msra.mxu0 0
      %1302 = vmatprep.mubr.bf16.mxu0 0
      %1303 = vmatmul.mubr.bf16.gmra.mrb[0].mxu0 %v1265
      %v1304 = vpop.f32.mrb[0].mxu0
      %v1305 = vadd.f32 0.0, %v1304
      %v1306 = vpop.f32.mrb[0].mxu0
      %v1307 = vpop.f32.mrb[0].mxu0
      %v1308 = vpop.f32.mrb[0].mxu0
      %1309 = vdwg.mxu0
      %v1311 = vsel %vm1171, %v870, 0
      %v1314 = vsel %vm1171, %v1020, 0
      %1316 = vmatprep.subr.bf16.mxu0 0
      %1317 = vmatpush1.bf16.xpose.msra.mxu0 %v1314
      %1318 = vmatprep.subr.bf16.mxu0 0
      %1319 = vmatpush1.bf16.xpose.msra.mxu0 0
      %1320 = vmatprep.subr.bf16.mxu0 0
      %1321 = vmatpush1.bf16.xpose.msra.mxu0 0
      %1322 = vmatprep.subr.bf16.mxu0 0
      %1323 = vmatpush1.bf16.xpose.msra.mxu0 0
      %1324 = vmatprep.subr.bf16.mxu0 0
      %1325 = vmatpush1.bf16.xpose.msra.mxu0 0
      %1326 = vmatprep.subr.bf16.mxu0 0
      %1327 = vmatpush1.bf16.xpose.msra.mxu0 0
      %1328 = vmatprep.subr.bf16.mxu0 0
      %1329 = vmatpush1.bf16.xpose.msra.mxu0 0
      %1330 = vmatprep.subr.bf16.mxu0 0
      %1331 = vmatpush1.bf16.xpose.msra.mxu0 0
      %1332 = vmatprep.subr.bf16.mxu0 0
      %1333 = vmatpush1.bf16.xpose.msra.mxu0 0
      %1334 = vmatprep.subr.bf16.mxu0 0
      %1335 = vmatpush1.bf16.xpose.msra.mxu0 0
      %1336 = vmatprep.subr.bf16.mxu0 0
      %1337 = vmatpush1.bf16.xpose.msra.mxu0 0
      %1338 = vmatprep.subr.bf16.mxu0 0
      %1339 = vmatpush1.bf16.xpose.msra.mxu0 0
      %1340 = vmatprep.subr.bf16.mxu0 0
      %1341 = vmatpush1.bf16.xpose.msra.mxu0 0
      %1342 = vmatprep.subr.bf16.mxu0 0
      %1343 = vmatpush1.bf16.xpose.msra.mxu0 0
      %1344 = vmatprep.subr.bf16.mxu0 0
      %1345 = vmatpush1.bf16.xpose.msra.mxu0 0
      %1346 = vmatprep.subr.bf16.mxu0 0
      %1347 = vmatpush1.bf16.xpose.msra.mxu0 0
      %1348 = vmatprep.mubr.bf16.mxu0 0
      %1349 = vmatmul.mubr.bf16.gmra.mrb[0].mxu0 %v1311
      %v1350 = vpop.f32.mrb[0].mxu0
      %v1351 = vadd.f32 0.0, %v1350
      %v1352 = vpop.f32.mrb[0].mxu0
      %v1353 = vpop.f32.mrb[0].mxu0
      %v1354 = vpop.f32.mrb[0].mxu0
      %1355 = vdwg.mxu0
      %v1356 = vunpack.c.0.s8 %v719
      %v1357 = vcvt.s32.f32 %v1356
      %vm1358 = vcmp.eq.f32.partialorder %v1357, 0.0
      %v1359 = vsel %vm1358, 1, 0
      %vm1360 = vcmp.eq.s32.totalorder %v1359, 1
      %v1361 = vsel %vm1360, -1e+20, %v1213
      %v1362 = vsel %vm1360, -1e+20, %v1259
      %v1363 = vsel %vm1360, -1e+20, %v1305
      %v1364 = vsel %vm1360, -1e+20, %v1351
      %v1365 = vsel %vm1171, %v1361, -inf
      %1366 = vmax.xlane.f32.xlu0 %v1365
      %v1367 = vpop.xlane.xlu0 %1366
      %v1368 = vsel %vm1171, %v1362, -inf
      %1369 = vmax.xlane.f32.xlu0 %v1368
      %v1370 = vpop.xlane.xlu0 %1369
      %v1371 = vsel %vm1171, %v1363, -inf
      %1372 = vmax.xlane.f32.xlu0 %v1371
      %v1373 = vpop.xlane.xlu0 %1372
      %v1374 = vsel %vm1171, %v1364, -inf
      %1375 = vmax.xlane.f32.xlu0 %v1374
      %v1376 = vpop.xlane.xlu0 %1375
      %v1377 = vsub.f32 %v1361, %v1367
      %v1378 = vsub.f32 %v1362, %v1370
      %v1379 = vsub.f32 %v1363, %v1373
      %v1380 = vsub.f32 %v1364, %v1376
      %v1381 = vmul.f32 %v1377, 1.442695
      %v1382 = vpow.pop %v1381
      %v1383 = vmul.f32 %v1378, 1.442695
      %v1384 = vpow.pop %v1383
      %v1385 = vmul.f32 %v1379, 1.442695
      %v1386 = vpow.pop %v1385
      %v1387 = vmul.f32 %v1380, 1.442695
      %v1388 = vpow.pop %v1387
      %v1389 = vsel %vm1171, %v1382, 0.0
      %1390 = vadd.xlane.f32.xlu0 %v1389
      %v1391 = vpop.xlane.xlu0 %1390
      %v1392 = vsel %vm1171, %v1384, 0.0
      %1393 = vadd.xlane.f32.xlu0 %v1392
      %v1394 = vpop.xlane.xlu0 %1393
      %v1395 = vsel %vm1171, %v1386, 0.0
      %1396 = vadd.xlane.f32.xlu0 %v1395
      %v1397 = vpop.xlane.xlu0 %1396
      %v1398 = vsel %vm1171, %v1388, 0.0
      %1399 = vadd.xlane.f32.xlu0 %v1398
      %v1400 = vpop.xlane.xlu0 %1399
      %v1401 = vpack.c.bf16 %v1382, %v1382
      %v1402 = vpack.c.bf16 %v1384, %v1384
      %v1403 = vpack.c.bf16 %v1386, %v1386
      %v1404 = vpack.c.bf16 %v1388, %v1388
      %v1406 = vsel %vm1171, %v1401, 0
      %vm1408 = vcmask 1043456
      %v1410 = vsel %vm1408, %v1167, 0
      %1412 = vmatprep.subr.bf16.mxu0 0
      %1413 = vmatpush1.bf16.msra.mxu0 %v1410
      %1414 = vmatprep.subr.bf16.mxu0 0
      %1415 = vmatpush1.bf16.msra.mxu0 0
      %1416 = vmatprep.subr.bf16.mxu0 0
      %1417 = vmatpush1.bf16.msra.mxu0 0
      %1418 = vmatprep.subr.bf16.mxu0 0
      %1419 = vmatpush1.bf16.msra.mxu0 0
      %1420 = vmatprep.subr.bf16.mxu0 0
      %1421 = vmatpush1.bf16.msra.mxu0 0
      %1422 = vmatprep.subr.bf16.mxu0 0
      %1423 = vmatpush1.bf16.msra.mxu0 0
      %1424 = vmatprep.subr.bf16.mxu0 0
      %1425 = vmatpush1.bf16.msra.mxu0 0
      %1426 = vmatprep.subr.bf16.mxu0 0
      %1427 = vmatpush1.bf16.msra.mxu0 0
      %1428 = vmatprep.subr.bf16.mxu0 0
      %1429 = vmatpush1.bf16.msra.mxu0 0
      %1430 = vmatprep.subr.bf16.mxu0 0
      %1431 = vmatpush1.bf16.msra.mxu0 0
      %1432 = vmatprep.subr.bf16.mxu0 0
      %1433 = vmatpush1.bf16.msra.mxu0 0
      %1434 = vmatprep.subr.bf16.mxu0 0
      %1435 = vmatpush1.bf16.msra.mxu0 0
      %1436 = vmatprep.subr.bf16.mxu0 0
      %1437 = vmatpush1.bf16.msra.mxu0 0
      %1438 = vmatprep.subr.bf16.mxu0 0
      %1439 = vmatpush1.bf16.msra.mxu0 0
      %1440 = vmatprep.subr.bf16.mxu0 0
      %1441 = vmatpush1.bf16.msra.mxu0 0
      %1442 = vmatprep.subr.bf16.mxu0 0
      %1443 = vmatpush1.bf16.msra.mxu0 0
      %1444 = vmatprep.mubr.bf16.mxu0 0
      %1445 = vmatmul.mubr.bf16.gmra.mrb[0].mxu0 %v1406
      %v1446 = vpop.f32.mrb[0].mxu0
      %v1447 = vadd.f32 0.0, %v1446
      %v1448 = vpop.f32.mrb[0].mxu0
      %v1449 = vpop.f32.mrb[0].mxu0
      %v1450 = vpop.f32.mrb[0].mxu0
      %1451 = vdwg.mxu0
      %v1453 = vsel %vm1171, %v1402, 0
      %v1456 = vsel %vm1408, %v1168, 0
      %1458 = vmatprep.subr.bf16.mxu0 0
      %1459 = vmatpush1.bf16.msra.mxu0 %v1456
      %1460 = vmatprep.subr.bf16.mxu0 0
      %1461 = vmatpush1.bf16.msra.mxu0 0
      %1462 = vmatprep.subr.bf16.mxu0 0
      %1463 = vmatpush1.bf16.msra.mxu0 0
      %1464 = vmatprep.subr.bf16.mxu0 0
      %1465 = vmatpush1.bf16.msra.mxu0 0
      %1466 = vmatprep.subr.bf16.mxu0 0
      %1467 = vmatpush1.bf16.msra.mxu0 0
      %1468 = vmatprep.subr.bf16.mxu0 0
      %1469 = vmatpush1.bf16.msra.mxu0 0
      %1470 = vmatprep.subr.bf16.mxu0 0
      %1471 = vmatpush1.bf16.msra.mxu0 0
      %1472 = vmatprep.subr.bf16.mxu0 0
      %1473 = vmatpush1.bf16.msra.mxu0 0
      %1474 = vmatprep.subr.bf16.mxu0 0
      %1475 = vmatpush1.bf16.msra.mxu0 0
      %1476 = vmatprep.subr.bf16.mxu0 0
      %1477 = vmatpush1.bf16.msra.mxu0 0
      %1478 = vmatprep.subr.bf16.mxu0 0
      %1479 = vmatpush1.bf16.msra.mxu0 0
      %1480 = vmatprep.subr.bf16.mxu0 0
      %1481 = vmatpush1.bf16.msra.mxu0 0
      %1482 = vmatprep.subr.bf16.mxu0 0
      %1483 = vmatpush1.bf16.msra.mxu0 0
      %1484 = vmatprep.subr.bf16.mxu0 0
      %1485 = vmatpush1.bf16.msra.mxu0 0
      %1486 = vmatprep.subr.bf16.mxu0 0
      %1487 = vmatpush1.bf16.msra.mxu0 0
      %1488 = vmatprep.subr.bf16.mxu0 0
      %1489 = vmatpush1.bf16.msra.mxu0 0
      %1490 = vmatprep.mubr.bf16.mxu0 0
      %1491 = vmatmul.mubr.bf16.gmra.mrb[0].mxu0 %v1453
      %v1492 = vpop.f32.mrb[0].mxu0
      %v1493 = vadd.f32 0.0, %v1492
      %v1494 = vpop.f32.mrb[0].mxu0
      %v1495 = vpop.f32.mrb[0].mxu0
      %v1496 = vpop.f32.mrb[0].mxu0
      %1497 = vdwg.mxu0
      %v1499 = vsel %vm1171, %v1403, 0
      %v1502 = vsel %vm1408, %v1169, 0
      %1504 = vmatprep.subr.bf16.mxu0 0
      %1505 = vmatpush1.bf16.msra.mxu0 %v1502
      %1506 = vmatprep.subr.bf16.mxu0 0
      %1507 = vmatpush1.bf16.msra.mxu0 0
      %1508 = vmatprep.subr.bf16.mxu0 0
      %1509 = vmatpush1.bf16.msra.mxu0 0
      %1510 = vmatprep.subr.bf16.mxu0 0
      %1511 = vmatpush1.bf16.msra.mxu0 0
      %1512 = vmatprep.subr.bf16.mxu0 0
      %1513 = vmatpush1.bf16.msra.mxu0 0
      %1514 = vmatprep.subr.bf16.mxu0 0
      %1515 = vmatpush1.bf16.msra.mxu0 0
      %1516 = vmatprep.subr.bf16.mxu0 0
      %1517 = vmatpush1.bf16.msra.mxu0 0
      %1518 = vmatprep.subr.bf16.mxu0 0
      %1519 = vmatpush1.bf16.msra.mxu0 0
      %1520 = vmatprep.subr.bf16.mxu0 0
      %1521 = vmatpush1.bf16.msra.mxu0 0
      %1522 = vmatprep.subr.bf16.mxu0 0
      %1523 = vmatpush1.bf16.msra.mxu0 0
      %1524 = vmatprep.subr.bf16.mxu0 0
      %1525 = vmatpush1.bf16.msra.mxu0 0
      %1526 = vmatprep.subr.bf16.mxu0 0
      %1527 = vmatpush1.bf16.msra.mxu0 0
      %1528 = vmatprep.subr.bf16.mxu0 0
      %1529 = vmatpush1.bf16.msra.mxu0 0
      %1530 = vmatprep.subr.bf16.mxu0 0
      %1531 = vmatpush1.bf16.msra.mxu0 0
      %1532 = vmatprep.subr.bf16.mxu0 0
      %1533 = vmatpush1.bf16.msra.mxu0 0
      %1534 = vmatprep.subr.bf16.mxu0 0
      %1535 = vmatpush1.bf16.msra.mxu0 0
      %1536 = vmatprep.mubr.bf16.mxu0 0
      %1537 = vmatmul.mubr.bf16.gmra.mrb[0].mxu0 %v1499
      %v1538 = vpop.f32.mrb[0].mxu0
      %v1539 = vadd.f32 0.0, %v1538
      %v1540 = vpop.f32.mrb[0].mxu0
      %v1541 = vpop.f32.mrb[0].mxu0
      %v1542 = vpop.f32.mrb[0].mxu0
      %1543 = vdwg.mxu0
      %v1545 = vsel %vm1171, %v1404, 0
      %v1548 = vsel %vm1408, %v1170, 0
      %1550 = vmatprep.subr.bf16.mxu0 0
      %1551 = vmatpush1.bf16.msra.mxu0 %v1548
      %1552 = vmatprep.subr.bf16.mxu0 0
      %1553 = vmatpush1.bf16.msra.mxu0 0
      %1554 = vmatprep.subr.bf16.mxu0 0
      %1555 = vmatpush1.bf16.msra.mxu0 0
      %1556 = vmatprep.subr.bf16.mxu0 0
      %1557 = vmatpush1.bf16.msra.mxu0 0
      %1558 = vmatprep.subr.bf16.mxu0 0
      %1559 = vmatpush1.bf16.msra.mxu0 0
      %1560 = vmatprep.subr.bf16.mxu0 0
      %1561 = vmatpush1.bf16.msra.mxu0 0
      %1562 = vmatprep.subr.bf16.mxu0 0
      %1563 = vmatpush1.bf16.msra.mxu0 0
      %1564 = vmatprep.subr.bf16.mxu0 0
      %1565 = vmatpush1.bf16.msra.mxu0 0
      %1566 = vmatprep.subr.bf16.mxu0 0
      %1567 = vmatpush1.bf16.msra.mxu0 0
      %1568 = vmatprep.subr.bf16.mxu0 0
      %1569 = vmatpush1.bf16.msra.mxu0 0
      %1570 = vmatprep.subr.bf16.mxu0 0
      %1571 = vmatpush1.bf16.msra.mxu0 0
      %1572 = vmatprep.subr.bf16.mxu0 0
      %1573 = vmatpush1.bf16.msra.mxu0 0
      %1574 = vmatprep.subr.bf16.mxu0 0
      %1575 = vmatpush1.bf16.msra.mxu0 0
      %1576 = vmatprep.subr.bf16.mxu0 0
      %1577 = vmatpush1.bf16.msra.mxu0 0
      %1578 = vmatprep.subr.bf16.mxu0 0
      %1579 = vmatpush1.bf16.msra.mxu0 0
      %1580 = vmatprep.subr.bf16.mxu0 0
      %1581 = vmatpush1.bf16.msra.mxu0 0
      %1582 = vmatprep.mubr.bf16.mxu0 0
      %1583 = vmatmul.mubr.bf16.gmra.mrb[0].mxu0 %v1545
      %v1584 = vpop.f32.mrb[0].mxu0
      %v1585 = vadd.f32 0.0, %v1584
      %v1586 = vpop.f32.mrb[0].mxu0
      %v1587 = vpop.f32.mrb[0].mxu0
      %v1588 = vpop.f32.mrb[0].mxu0
      %1589 = vdwg.mxu0
      %v1590 = vrcp.pop %v1391
      %v1591 = vrcp.pop %v1394
      %v1592 = vrcp.pop %v1397
      %v1593 = vrcp.pop %v1400
      %v1594 = vmul.f32 %v1447, %v1590
      %v1595 = vmul.f32 %v1493, %v1591
      %v1596 = vmul.f32 %v1539, %v1592
      %v1597 = vmul.f32 %v1585, %v1593
      %v1598 = vcombine.low %v1594, %v1596
      %v1599 = vcombine.high %v1594, %v1596
      %v1601 = vunpack.c.l.s4 1983009808
      %v1602 = vunpack.c.0.s8 %v1601
      %v1603 = vlaneseq
      %v1604 = vshrl.u32 %v1603, 7
      %v1605 = vsub.s32 %v1602, %v1604
      %v1606 = vrot.slane %v1598, %v1605
      %v1608 = vunpack.c.l.s4 1983009808
      %v1609 = vunpack.c.0.s8 %v1608
      %v1610 = vlaneseq
      %v1611 = vshrl.u32 %v1610, 7
      %v1612 = vsub.s32 %v1609, %v1611
      %v1613 = vrot.slane %v1599, %v1612
      %v1614 = vcombine.low %v1595, %v1597
      %v1615 = vcombine.high %v1595, %v1597
      %v1617 = vunpack.c.l.s4 1983009808
      %v1618 = vunpack.c.0.s8 %v1617
      %v1619 = vlaneseq
      %v1620 = vshrl.u32 %v1619, 7
      %v1621 = vsub.s32 %v1618, %v1620
      %v1622 = vrot.slane %v1614, %v1621
      %v1624 = vunpack.c.l.s4 1983009808
      %v1625 = vunpack.c.0.s8 %v1624
      %v1626 = vlaneseq
      %v1627 = vshrl.u32 %v1626, 7
      %v1628 = vsub.s32 %v1625, %v1627
      %v1629 = vrot.slane %v1615, %v1628
      %v1630 = vcombine.low %v1606, %v1622
      %v1631 = vcombine.high %v1606, %v1622
      %v1633 = vunpack.c.l.s4 1934713408
      %v1634 = vunpack.c.0.s8 %v1633
      %v1635 = vlaneseq
      %v1636 = vshrl.u32 %v1635, 7
      %v1637 = vsub.s32 %v1634, %v1636
      %v1638 = vrot.slane %v1630, %v1637
      %v1640 = vunpack.c.l.s4 1934713408
      %v1641 = vunpack.c.0.s8 %v1640
      %v1642 = vlaneseq
      %v1643 = vshrl.u32 %v1642, 7
      %v1644 = vsub.s32 %v1641, %v1643
      %v1645 = vrot.slane %v1631, %v1644
      %v1646 = vcombine.low %v1613, %v1629
      %v1647 = vcombine.high %v1613, %v1629
      %v1649 = vunpack.c.l.s4 1934713408
      %v1650 = vunpack.c.0.s8 %v1649
      %v1651 = vlaneseq
      %v1652 = vshrl.u32 %v1651, 7
      %v1653 = vsub.s32 %v1650, %v1652
      %v1654 = vrot.slane %v1646, %v1653
      %v1656 = vunpack.c.l.s4 1934713408
      %v1657 = vunpack.c.0.s8 %v1656
      %v1658 = vlaneseq
      %v1659 = vshrl.u32 %v1658, 7
      %v1660 = vsub.s32 %v1657, %v1659
      %v1661 = vrot.slane %v1647, %v1660
      %v1662 = vcombine.high %v1638, 0.0
      %v1663 = vcombine.high %v1645, 0.0
      %v1664 = vcombine.high %v1654, 0.0
      %v1665 = vcombine.high %v1661, 0.0
      %v1666 = vcombine.low %v1638, %v1645
      %v1668 = vunpack.c.l.s4 1983009808
      %v1669 = vunpack.c.0.s8 %v1668
      %v1670 = vlaneseq
      %v1671 = vshrl.u32 %v1670, 7
      %v1672 = vsub.s32 %v1669, %v1671
      %v1673 = vrot.slane %v1666, %v1672
      %v1674 = vcombine.low %v1662, %v1663
      %v1676 = vunpack.c.l.s4 1983009808
      %v1677 = vunpack.c.0.s8 %v1676
      %v1678 = vlaneseq
      %v1679 = vshrl.u32 %v1678, 7
      %v1680 = vsub.s32 %v1677, %v1679
      %v1681 = vrot.slane %v1674, %v1680
      %v1682 = vcombine.low %v1654, %v1661
      %v1684 = vunpack.c.l.s4 1983009808
      %v1685 = vunpack.c.0.s8 %v1684
      %v1686 = vlaneseq
      %v1687 = vshrl.u32 %v1686, 7
      %v1688 = vsub.s32 %v1685, %v1687
      %v1689 = vrot.slane %v1682, %v1688
      %v1690 = vcombine.low %v1664, %v1665
      %v1692 = vunpack.c.l.s4 1983009808
      %v1693 = vunpack.c.0.s8 %v1692
      %v1694 = vlaneseq
      %v1695 = vshrl.u32 %v1694, 7
      %v1696 = vsub.s32 %v1693, %v1695
      %v1697 = vrot.slane %v1690, %v1696
      %v1698 = vcombine.low %v1673, %v1681
      %v1699 = vcombine.high %v1673, %v1681
      %v1701 = vunpack.c.l.s4 1934713408
      %v1702 = vunpack.c.0.s8 %v1701
      %v1703 = vlaneseq
      %v1704 = vshrl.u32 %v1703, 7
      %v1705 = vsub.s32 %v1702, %v1704
      %v1706 = vrot.slane %v1698, %v1705
      %v1708 = vunpack.c.l.s4 1934713408
      %v1709 = vunpack.c.0.s8 %v1708
      %v1710 = vlaneseq
      %v1711 = vshrl.u32 %v1710, 7
      %v1712 = vsub.s32 %v1709, %v1711
      %v1713 = vrot.slane %v1699, %v1712
      %v1714 = vcombine.low %v1689, %v1697
      %v1715 = vcombine.high %v1689, %v1697
      %v1717 = vunpack.c.l.s4 1934713408
      %v1718 = vunpack.c.0.s8 %v1717
      %v1719 = vlaneseq
      %v1720 = vshrl.u32 %v1719, 7
      %v1721 = vsub.s32 %v1718, %v1720
      %v1722 = vrot.slane %v1714, %v1721
      %v1724 = vunpack.c.l.s4 1934713408
      %v1725 = vunpack.c.0.s8 %v1724
      %v1726 = vlaneseq
      %v1727 = vshrl.u32 %v1726, 7
      %v1728 = vsub.s32 %v1725, %v1727
      %v1729 = vrot.slane %v1715, %v1728
      %v1730 = vcombine.low %v1706, %v1722
      %v1731 = vcombine.high %v1706, %v1722
      %v1732 = vcombine.low %v1713, %v1729
      %v1733 = vcombine.high %v1713, %v1729
      %1735 = vrot.lane.b32.xlu0 %v1731, 8
      %v1736 = vpop.permute.xlu0 %1735
      %1739 = vrot.lane.b32.xlu0 %v1732, 16
      %v1740 = vpop.permute.xlu0 %1739
      %1743 = vrot.lane.b32.xlu0 %v1733, 24
      %v1744 = vpop.permute.xlu0 %1743
      %v1746 = vsel %vm1171, %v1730, %v1736
      %vm1747 = vcmask 130048
      %v1748 = vsel %vm1747, %v1746, %v1740
      %vm1749 = vcmask 195584
      %v1750 = vsel %vm1749, %v1748, %v1744
      %v1751 = vpack.c.bf16 %v1750, %v1750
      %v1752 = vld [vmem:[%s10] sm:$0xf]
      %v1753 = vld [vmem:[%s10 + $0x4] sm:$0xf]
      %v1754 = vld [vmem:[%s10 + $0x8] sm:$0xf]
      %v1755 = vld [vmem:[%s10 + $0xc] sm:$0xf]
      %v1756 = vld [vmem:[%s11] sm:$0x1]
      %v1758 = vlaneseq
      %v1759 = vshrl.u32 %v1758, 7
      %v1760 = vsub.s32 0, %v1759
      %v1761 = vrot.slane %v1756, %v1760
      %v1767 = vunpack.c.l.b16 %v1752
      %v1768 = vunpack.c.l.b16 %v1753
      %v1769 = vunpack.c.l.b16 %v1754
      %v1770 = vunpack.c.l.b16 %v1755
      %v1771 = vpack.c.b16 %v1768, %v1767
      %v1772 = vpack.c.b16 %v1770, %v1769
      %v1776 = vsel %vm543, %v1751, 0
      %1778 = vmatprep.subr.bf16.mxu0 0
      %1779 = vmatpush1.bf16.msra.mxu0 %v1771
      %1780 = vmatprep.subr.bf16.mxu0 0
      %1781 = vmatpush1.bf16.msra.mxu0 %v1772
      %1782 = vmatprep.subr.bf16.mxu0 0
      %1783 = vmatpush1.bf16.msra.mxu0 0
      %1784 = vmatprep.subr.bf16.mxu0 0
      %1785 = vmatpush1.bf16.msra.mxu0 0
      %1786 = vmatprep.subr.bf16.mxu0 0
      %1787 = vmatpush1.bf16.msra.mxu0 0
      %1788 = vmatprep.subr.bf16.mxu0 0
      %1789 = vmatpush1.bf16.msra.mxu0 0
      %1790 = vmatprep.subr.bf16.mxu0 0
      %1791 = vmatpush1.bf16.msra.mxu0 0
      %1792 = vmatprep.subr.bf16.mxu0 0
      %1793 = vmatpush1.bf16.msra.mxu0 0
      %1794 = vmatprep.subr.bf16.mxu0 0
      %1795 = vmatpush1.bf16.msra.mxu0 0
      %1796 = vmatprep.subr.bf16.mxu0 0
      %1797 = vmatpush1.bf16.msra.mxu0 0
      %1798 = vmatprep.subr.bf16.mxu0 0
      %1799 = vmatpush1.bf16.msra.mxu0 0
      %1800 = vmatprep.subr.bf16.mxu0 0
      %1801 = vmatpush1.bf16.msra.mxu0 0
      %1802 = vmatprep.subr.bf16.mxu0 0
      %1803 = vmatpush1.bf16.msra.mxu0 0
      %1804 = vmatprep.subr.bf16.mxu0 0
      %1805 = vmatpush1.bf16.msra.mxu0 0
      %1806 = vmatprep.subr.bf16.mxu0 0
      %1807 = vmatpush1.bf16.msra.mxu0 0
      %1808 = vmatprep.subr.bf16.mxu0 0
      %1809 = vmatpush1.bf16.msra.mxu0 0
      %1810 = vmatprep.mubr.bf16.mxu0 0
      %1811 = vmatmul.mubr.bf16.gmra.mrb[0].mxu0 %v1776
      %v1812 = vpop.f32.mrb[0].mxu0
      %v1813 = vadd.f32 %v1761, %v1812
      %v1814 = vpop.f32.mrb[0].mxu0
      %v1815 = vpop.f32.mrb[0].mxu0
      %v1816 = vpop.f32.mrb[0].mxu0
      %1817 = vdwg.mxu0
      %v1818 = vunpack.c.l.bf16 %v515
      %v1819 = vadd.f32 %v1813, %v1818
      %v1820 = vld [vmem:[%s12] sm:$0x1]
      %v1821 = vld [vmem:[%s13] sm:$0x1]
      %v1822 = vsel %vm543, %v1819, 0.0
      %1823 = vadd.xlane.f32.xlu0 %v1822
      %v1824 = vpop.xlane.xlu0 %1823
      %v1825 = vrcp.pop 32.0
      %v1826 = vmul.f32 %v1824, %v1825
      %v1827 = vsub.f32 %v1819, %v1826
      %v1828 = vmul.f32 %v1827, %v1827
      %v1829 = vsel %vm543, %v1828, 0.0
      %1830 = vadd.xlane.f32.xlu0 %v1829
      %v1831 = vpop.xlane.xlu0 %1830
      %v1832 = vmul.f32 %v1831, %v1825
      %v1833 = vadd.f32 %v1832, 1e-05
      %v1834 = vrsqrt.pop %v1833
      %v1835 = vmul.f32 %v1827, %v1834
      %v1837 = vlaneseq
      %v1838 = vshrl.u32 %v1837, 7
      %v1839 = vsub.s32 0, %v1838
      %v1840 = vrot.slane %v1820, %v1839
      %v1842 = vmul.f32 %v1835, %v1840
      %v1844 = vlaneseq
      %v1845 = vshrl.u32 %v1844, 7
      %v1846 = vsub.s32 0, %v1845
      %v1847 = vrot.slane %v1821, %v1846
      %v1849 = vadd.f32 %v1842, %v1847
      %v1850 = vpack.c.bf16 %v1849, %v1849
      %vm1851 = vcmask 257024
      %1852 = vst.msk [vmem:[%s513] sm:$0xf] %vm1851, %v1850
      %p1853 = scmp.lt.s32.totalorder %s25, 1
      %s1854 = scalar_select %p1853, %s25, 1
      %s1855 = smul.addr %s1854, 4
      %s1856 = scalar_lea.vmem %s14, %s1855
      // Predicated region
      $region77: #{pallas_decoder_block.4} parent=75 // pred_check
        %p1857 = pneg %p357
      $region78: #{pallas_decoder_block.4} parent=75 // pred_check_branch
        %1859 = sbr.rel (%p1857) target = $region80
      $region79: #{pallas_decoder_block.4} parent=75 // pred_region
        _
      $region80: #{pallas_decoder_block.4} parent=75 // pred_fallthru
        _
    $region76: #{pallas_decoder_block.4} parent=5 // pred_fallthru
      _
    %p1860 = scmp.le.s32.totalorder 2, %s20
    // Predicated region
    $region81: #{pallas_decoder_block.4} parent=5 // pred_check
      %p1861 = pneg %p1860
    $region82: #{pallas_decoder_block.4} parent=5 // pred_check_branch
      %1863 = sbr.rel (%p1861) target = $region84
    $region83: #{pallas_decoder_block.4} parent=5 // pred_region
      %s1864 = ssub.s32 %s20, 2
      // Predicated region
      $region85: #{pallas_decoder_block.4} parent=83 // pred_check
        %p1865 = pneg %p363
      $region86: #{pallas_decoder_block.4} parent=83 // pred_check_branch
        %1867 = sbr.rel (%p1865) target = $region88
      $region87: #{pallas_decoder_block.4} parent=83 // pred_region
        %p1868 = scmp.lt.s32.totalorder %s26, 1
        %s1869 = scalar_select %p1868, %s26, 1
        %s1870 = smul.addr %s1869, 4
        %s1871 = scalar_lea.vmem %s14, %s1870
      $region88: #{pallas_decoder_block.4} parent=83 // pred_fallthru
        _
    $region84: #{pallas_decoder_block.4} parent=5 // pred_fallthru
      _
  $region6: #{pallas_decoder_block.4} parent=0 // loop_footer
    %s24 = sadd.s32 1, %s20
  $region7: #{pallas_decoder_block.4} parent=0 // loop_footer_branch
    %19 = sbr.rel target = $region3
  $region8: #{pallas_decoder_block.4} parent=0 // loop_exit
    _

</llo_original>
